<compile_context>
chip_gen: v6e
topology: v6e:2x2x1
jax: 0.10.0
libtpu: 0.0.40
codegen_flags: <defaults>
</compile_context>

<pallas_src>
import functools

import jax
import jax.numpy as jnp
from jax import lax
from jax.experimental import pallas as pl
from jax.experimental.pallas import tpu as pltpu
import numpy as np


# ----------------------------------------------------------------------------
# Kernel: one grid step = block_batch batch elements folded into the lane axis.
# ----------------------------------------------------------------------------
def inception_kernel(x_ref,              # (Cin, Bblk*L)
                     w_ref,              # (2*Ctot, 6*Cin) fused conv + residual weight
                     b_ref,              # (2*Ctot, 1)     fused conv + residual bias
                     wf1_ref, bf1_ref,   # SE fc1: (H, Ctot), (H, 1)
                     wf2_ref, bf2_ref,   # SE fc2: (Ctot, H), (Ctot, 1)
                     pool_ref,           # (Bblk*L, Bblk)  per-element mean matrix (1/L)
                     exp_ref,            # (Bblk, Bblk*L)  per-element broadcast matrix
                     o_ref,              # (Ctot, Bblk*L)
                     *, seq_len):
    L = seq_len
    cin, BL = x_ref.shape
    ctot = o_ref.shape[0]
    f32 = jnp.float32

    x = x_ref[...]
    zero = jnp.zeros((), x.dtype)
    neg = jnp.full((), -1e30, x.dtype)          # maxpool boundary fill
    l = lax.broadcasted_iota(jnp.int32, (cin, BL), 1) % L   # within-element pos

    # +-1 / +-2 sequence shifts via XLU lane rotates; masks on (col % L) kill
    # both the zero-padding columns and any cross-batch wrap-around.
    r_m1 = pltpu.roll(x, 1, axis=1)             # x[l-1] (wrapped)
    r_p1 = pltpu.roll(x, BL - 1, axis=1)        # x[l+1] (wrapped)
    r_m2 = pltpu.roll(x, 2, axis=1)             # x[l-2] (wrapped)
    r_p2 = pltpu.roll(x, BL - 2, axis=1)        # x[l+2] (wrapped)

    xm1 = jnp.where(l >= 1, r_m1, zero)
    xp1 = jnp.where(l <= L - 2, r_p1, zero)
    xm2 = jnp.where(l >= 2, r_m2, zero)
    xp2 = jnp.where(l <= L - 3, r_p2, zero)

    # MaxPool1d(k=3, s=1, p=1) for branch4 — reuses the +-1 rotates.
    mp = jnp.maximum(x, jnp.where(l >= 1, r_m1, neg))
    mp = jnp.maximum(mp, jnp.where(l <= L - 2, r_p1, neg))

    # ONE K=6*Cin MXU dot covers all four branches AND the residual 1x1.
    stacked = jnp.concatenate([x, xm1, xp1, xm2, xp2, mp], axis=0)   # (6*Cin, BL)
    full = jnp.dot(w_ref[...], stacked, preferred_element_type=f32) + b_ref[...]
    main = jnp.maximum(full[:ctot, :], 0.0)     # concatenated branch outputs (BN+ReLU)
    res = full[ctot:, :]                        # residual path (no BN / ReLU)

    # SE block, batched over the block's batch elements.
    avg = jnp.dot(main, pool_ref[...], preferred_element_type=f32)   # (Ctot, Bblk)
    h = jnp.maximum(
        jnp.dot(wf1_ref[...], avg, preferred_element_type=f32) + bf1_ref[...], 0.0)
    s = jax.nn.sigmoid(
        jnp.dot(wf2_ref[...], h, preferred_element_type=f32) + bf2_ref[...])
    s_full = jnp.dot(s, exp_ref[...], preferred_element_type=f32)    # (Ctot, BL)

    o_ref[...] = (main * s_full + res).astype(o_ref.dtype)


# ----------------------------------------------------------------------------
# Wrapper: NCL in, NCL out. Batch is padded to a multiple of block_batch and
# folded into the lane axis for the kernel.
# ----------------------------------------------------------------------------
def improved_inception_block(x_ncl, params, *, block_batch=8,
                             compute_dtype=jnp.float32):
    """x_ncl: (N, Cin, L) float32 (PyTorch layout). Returns (N, Ctot, L) float32."""
    N, cin, L = x_ncl.shape
    wbig = params["w"]
    ctot = wbig.shape[0] // 2

    bb = max(1, int(block_batch))
    n_pad = ((N + bb - 1) // bb) * bb
    if n_pad != N:
        x_ncl = jnp.pad(x_ncl, ((0, n_pad - N), (0, 0), (0, 0)))
    grid = (n_pad // bb,)
    BL = bb * L

    cd = compute_dtype
    xt = jnp.transpose(x_ncl, (1, 0, 2)).reshape(cin, n_pad * L).astype(cd)
    w = wbig.astype(cd)

    # Tiny tiling-dependent helper matrices (pooling = per-element mean,
    # expand = per-element broadcast of the SE scale).
    eye = jnp.eye(bb, dtype=jnp.float32)
    pool = jnp.repeat(eye, L, axis=0) * (1.0 / L)   # (Bblk*L, Bblk)
    expand = jnp.repeat(eye, L, axis=1)             # (Bblk, Bblk*L)

    def full_spec(arr):
        return pl.BlockSpec(arr.shape, lambda n: (0, 0))

    operands = (w, params["b"], params["wf1"], params["bf1"],
                params["wf2"], params["bf2"], pool, expand)

    out = pl.pallas_call(
        functools.partial(inception_kernel, seq_len=L),
        out_shape=jax.ShapeDtypeStruct((ctot, n_pad * L), jnp.float32),
        grid=grid,
        in_specs=[pl.BlockSpec((cin, BL), lambda n: (0, n))]
                 + [full_spec(a) for a in operands],
        out_specs=pl.BlockSpec((ctot, BL), lambda n: (0, n)),
        compiler_params=pltpu.CompilerParams(
            dimension_semantics=("parallel",)),
    )(xt, *operands)

    out = out.reshape(ctot, n_pad, L).transpose(1, 0, 2)
    return out[:N]


# ----------------------------------------------------------------------------
# Deterministic parameter construction. BN (eval mode) folded into conv
# weight/bias; all conv taps pre-concatenated into one (2*Ctot, 6*Cin) matrix.
# Column groups: [x | x[l-1] | x[l+1] | x[l-2] | x[l+2] | maxpool(x)].
# ----------------------------------------------------------------------------
def make_params(key, in_channels, out_1x1, out_3x3, out_dilated, out_1x1pool,
                reduction=16):
    cin = in_channels
    o1, o2, o3, o4 = out_1x1, out_3x3, out_dilated, out_1x1pool
    ctot = o1 + o2 + o3 + o4
    hid = ctot // reduction
    eps = 1e-5
    ks = list(jax.random.split(key, 32))
    nk = lambda: ks.pop(0)

    def conv_bn(cout, k):
        w = 0.2 * jax.random.normal(nk(), (cout, cin, k), jnp.float32)   # (O,I,K)
        b = 0.1 * jax.random.normal(nk(), (cout,), jnp.float32)
        gamma = 1.0 + 0.1 * jax.random.normal(nk(), (cout,), jnp.float32)
        beta = 0.1 * jax.random.normal(nk(), (cout,), jnp.float32)
        mean = 0.05 * jax.random.normal(nk(), (cout,), jnp.float32)
        var = 1.0 + 0.1 * jnp.abs(jax.random.normal(nk(), (cout,), jnp.float32))
        scale = gamma / jnp.sqrt(var + eps)
        return w * scale[:, None, None], (b - mean) * scale + beta

    w1, b1 = conv_bn(o1, 1)
    w2, b2 = conv_bn(o2, 3)
    w3, b3 = conv_bn(o3, 3)
    w4, b4 = conv_bn(o4, 1)
    wr = 0.2 * jax.random.normal(nk(), (ctot, cin, 1), jnp.float32)
    br = 0.1 * jax.random.normal(nk(), (ctot,), jnp.float32)
    wf1 = 0.3 * jax.random.normal(nk(), (hid, ctot), jnp.float32)   # torch fc1.weight
    bf1 = 0.1 * jax.random.normal(nk(), (hid,), jnp.float32)
    wf2 = 0.3 * jax.random.normal(nk(), (ctot, hid), jnp.float32)   # torch fc2.weight
    bf2 = 0.1 * jax.random.normal(nk(), (ctot,), jnp.float32)

    torch_p = dict(w1=w1, b1=b1, w2=w2, b2=b2, w3=w3, b3=b3, w4=w4, b4=b4,
                   wr=wr, br=br, wf1=wf1, bf1=bf1, wf2=wf2, bf2=bf2)

    def place(block, row0):
        rows = block.shape[0]
        return jnp.concatenate(
            [jnp.zeros((row0, cin), jnp.float32), block,
             jnp.zeros((2 * ctot - row0 - rows, cin), jnp.float32)], axis=0)

    # Column group fed by the un-shifted input: branch1, centre taps of
    # branch2/3, and the residual 1x1 (rows ctot..2*ctot-1).
    g_x = (place(w1[:, :, 0], 0) + place(w2[:, :, 1], o1)
           + place(w3[:, :, 1], o1 + o2) + place(wr[:, :, 0], ctot))
    g_m1 = place(w2[:, :, 0], o1)                  # x[l-1]
    g_p1 = place(w2[:, :, 2], o1)                  # x[l+1]
    g_m2 = place(w3[:, :, 0], o1 + o2)             # x[l-2]
    g_p2 = place(w3[:, :, 2], o1 + o2)             # x[l+2]
    g_mp = place(w4[:, :, 0], o1 + o2 + o3)        # maxpool branch
    wbig = jnp.concatenate([g_x, g_m1, g_p1, g_m2, g_p2, g_mp], axis=1)  # (2Ctot,6Cin)

    kern_p = dict(
        w=wbig,
        b=jnp.concatenate([b1, b2, b3, b4, br])[:, None],   # (2*Ctot, 1)
        wf1=wf1, bf1=bf1[:, None], wf2=wf2, bf2=bf2[:, None],
    )
    return torch_p, kern_p


# ----------------------------------------------------------------------------
# Pure-JAX reference (mirrors the PyTorch forward with eval-mode BN folded)
# ----------------------------------------------------------------------------
def reference(x, p):
    dn = ("NCH", "OIH", "NCH")
    prec = lax.Precision.HIGHEST

    def conv1d(x, w, b, padding=0, dilation=1):
        y = lax.conv_general_dilated(x, w, window_strides=(1,),
                                     padding=[(padding, padding)],
                                     rhs_dilation=(dilation,),
                                     dimension_numbers=dn, precision=prec)
        return y + b[None, :, None]

    relu = lambda t: jnp.maximum(t, 0.0)
    y1 = relu(conv1d(x, p["w1"], p["b1"]))
    y2 = relu(conv1d(x, p["w2"], p["b2"], padding=1))
    y3 = relu(conv1d(x, p["w3"], p["b3"], padding=2, dilation=2))
    mp = lax.reduce_window(x, -jnp.inf, lax.max, (1, 1, 3), (1, 1, 1),
                           ((0, 0), (0, 0), (1, 1)))
    y4 = relu(conv1d(mp, p["w4"], p["b4"]))
    res = conv1d(x, p["wr"], p["br"])
    out = jnp.concatenate([y1, y2, y3, y4], axis=1)                   # (N, Ctot, L)

    avg = jnp.mean(out, axis=2)                                       # (N, Ctot)
    h = relu(jnp.dot(avg, p["wf1"].T, precision=prec) + p["bf1"])
    s = jax.nn.sigmoid(jnp.dot(h, p["wf2"].T, precision=prec) + p["bf2"])
    return out * s[:, :, None] + res


if __name__ == "__main__":
    key = jax.random.PRNGKey(0)
    kx, kp, kx2 = jax.random.split(key, 3)

    # inception1 configuration from InceptionWithSE: 32 input channels,
    # 16 channels per branch (Ctot = 64, SE hidden = 4). L = 128 (lane-sized).
    N, Cin, L = 2, 32, 128
    branch = 16
    torch_p, kern_p = make_params(kp, Cin, branch, branch, branch, branch)

    # f32 parity check, default block_batch (N=2 padded up to one block).
    x = jax.random.normal(kx, (N, Cin, L), jnp.float32)
    y = jax.block_until_ready(improved_inception_block(x, kern_p))
    y_ref = jax.block_until_ready(reference(x, torch_p))
    np.testing.assert_allclose(np.asarray(y), np.asarray(y_ref),
                               rtol=1e-3, atol=1e-3)

    # Non-divisible batch: exercises wrapper padding + multiple parallel
    # grid steps (N=5, block_batch=2 -> padded to 6 -> 3 steps).
    x5 = jax.random.normal(kx2, (5, Cin, L), jnp.float32)
    y5 = jax.block_until_ready(
        improved_inception_block(x5, kern_p, block_batch=2))
    y5_ref = jax.block_until_ready(reference(x5, torch_p))
    np.testing.assert_allclose(np.asarray(y5), np.asarray(y5_ref),
                               rtol=1e-3, atol=1e-3)

    # bf16 activations/conv-weight with f32 MXU accumulation (coarse sanity
    # check only — bf16 rounding makes a tight f32 tolerance inapplicable).
    y_bf16 = jax.block_until_ready(
        improved_inception_block(x, kern_p, compute_dtype=jnp.bfloat16))
    assert float(jnp.max(jnp.abs(y_bf16 - y_ref))) < 0.25

    print("KERNEL_OK")
</pallas_src>

<mosaic_0001>
module attributes {stable_mosaic.version = 11 : i64} {
  func.func @inception_kernel(%arg0: i32, %arg1: memref<32x1024xf32, #tpu.memory_space<vmem>>, %arg2: memref<128x192xf32, #tpu.memory_space<vmem>>, %arg3: memref<128x1xf32, #tpu.memory_space<vmem>>, %arg4: memref<4x64xf32, #tpu.memory_space<vmem>>, %arg5: memref<4x1xf32, #tpu.memory_space<vmem>>, %arg6: memref<64x4xf32, #tpu.memory_space<vmem>>, %arg7: memref<64x1xf32, #tpu.memory_space<vmem>>, %arg8: memref<1024x8xf32, #tpu.memory_space<vmem>>, %arg9: memref<8x1024xf32, #tpu.memory_space<vmem>>, %arg10: memref<64x1024xf32, #tpu.memory_space<vmem>>) attributes {dimension_semantics = [#tpu.dimension_semantics<parallel>], iteration_bounds = array<i64: 1>, scalar_prefetch = 0 : i64, scratch_operands = 0 : i64, tpu.core_type = #tpu.core_type<tc>, window_params = [{transform_indices = @transform_0, window_bounds = array<i64: 32, 1024>}, {pipeline_mode = #tpu.pipeline_mode<synchronous>, transform_indices = @transform_1, window_bounds = array<i64: 128, 192>}, {pipeline_mode = #tpu.pipeline_mode<synchronous>, transform_indices = @transform_2, window_bounds = array<i64: 128, 1>}, {pipeline_mode = #tpu.pipeline_mode<synchronous>, transform_indices = @transform_3, window_bounds = array<i64: 4, 64>}, {pipeline_mode = #tpu.pipeline_mode<synchronous>, transform_indices = @transform_4, window_bounds = array<i64: 4, 1>}, {pipeline_mode = #tpu.pipeline_mode<synchronous>, transform_indices = @transform_5, window_bounds = array<i64: 64, 4>}, {pipeline_mode = #tpu.pipeline_mode<synchronous>, transform_indices = @transform_6, window_bounds = array<i64: 64, 1>}, {pipeline_mode = #tpu.pipeline_mode<synchronous>, transform_indices = @transform_7, window_bounds = array<i64: 1024, 8>}, {pipeline_mode = #tpu.pipeline_mode<synchronous>, transform_indices = @transform_8, window_bounds = array<i64: 8, 1024>}, {transform_indices = @transform_9, window_bounds = array<i64: 64, 1024>}]} {
    %c0 = arith.constant 0 : index
    %c0_0 = arith.constant 0 : index
    %0 = vector.load %arg1[%c0, %c0_0] : memref<32x1024xf32, #tpu.memory_space<vmem>>, vector<32x1024xf32>
    %1 = tpu.iota {dimensions = array<i32: 1>} : vector<32x1024xi32>
    %c128_i32 = arith.constant 128 : i32
    %c0_i32 = arith.constant 0 : i32
    %2 = arith.cmpi eq, %c128_i32, %c0_i32 : i32
    %c1_i32 = arith.constant 1 : i32
    %3 = arith.select %2, %c1_i32, %c128_i32 : i32
    %4 = vector.broadcast %3 : i32 to vector<32x1024xi32>
    %5 = arith.remsi %1, %4 : vector<32x1024xi32>
    %c0_i32_1 = arith.constant 0 : i32
    %6 = vector.broadcast %c0_i32_1 : i32 to vector<32x1024xi32>
    %7 = arith.cmpi ne, %5, %6 : vector<32x1024xi32>
    %c0_i32_2 = arith.constant 0 : i32
    %8 = vector.broadcast %c0_i32_2 : i32 to vector<32x1024xi32>
    %9 = arith.cmpi slt, %5, %8 : vector<32x1024xi32>
    %c0_i32_3 = arith.constant 0 : i32
    %10 = arith.cmpi slt, %3, %c0_i32_3 : i32
    %11 = vector.broadcast %10 : i1 to vector<32x1024xi1>
    %12 = vector.broadcast %11 : vector<32x1024xi1> to vector<32x1024xi1>
    %13 = arith.xori %9, %12 : vector<32x1024xi1>
    %14 = arith.andi %13, %7 : vector<32x1024xi1>
    %15 = vector.broadcast %3 : i32 to vector<32x1024xi32>
    %16 = arith.addi %5, %15 : vector<32x1024xi32>
    %17 = arith.select %14, %16, %5 : vector<32x1024xi1>, vector<32x1024xi32>
    %c1_i32_4 = arith.constant 1 : i32
    %18 = tpu.dynamic_rotate %0 by %c1_i32_4 dim 1 : vector<32x1024xf32>, i32 -> vector<32x1024xf32>
    %c1023_i32 = arith.constant 1023 : i32
    %19 = tpu.dynamic_rotate %0 by %c1023_i32 dim 1 : vector<32x1024xf32>, i32 -> vector<32x1024xf32>
    %c2_i32 = arith.constant 2 : i32
    %20 = tpu.dynamic_rotate %0 by %c2_i32 dim 1 : vector<32x1024xf32>, i32 -> vector<32x1024xf32>
    %c1022_i32 = arith.constant 1022 : i32
    %21 = tpu.dynamic_rotate %0 by %c1022_i32 dim 1 : vector<32x1024xf32>, i32 -> vector<32x1024xf32>
    %c1_i32_5 = arith.constant 1 : i32
    %22 = vector.broadcast %c1_i32_5 : i32 to vector<32x1024xi32>
    %23 = arith.cmpi sge, %17, %22 : vector<32x1024xi32>
    %cst = arith.constant 0.000000e+00 : f32
    %24 = vector.broadcast %cst : f32 to vector<32x1024xf32>
    %25 = arith.select %23, %18, %24 : vector<32x1024xi1>, vector<32x1024xf32>
    %c126_i32 = arith.constant 126 : i32
    %26 = vector.broadcast %c126_i32 : i32 to vector<32x1024xi32>
    %27 = arith.cmpi sle, %17, %26 : vector<32x1024xi32>
    %cst_6 = arith.constant 0.000000e+00 : f32
    %28 = vector.broadcast %cst_6 : f32 to vector<32x1024xf32>
    %29 = arith.select %27, %19, %28 : vector<32x1024xi1>, vector<32x1024xf32>
    %c2_i32_7 = arith.constant 2 : i32
    %30 = vector.broadcast %c2_i32_7 : i32 to vector<32x1024xi32>
    %31 = arith.cmpi sge, %17, %30 : vector<32x1024xi32>
    %cst_8 = arith.constant 0.000000e+00 : f32
    %32 = vector.broadcast %cst_8 : f32 to vector<32x1024xf32>
    %33 = arith.select %31, %20, %32 : vector<32x1024xi1>, vector<32x1024xf32>
    %c125_i32 = arith.constant 125 : i32
    %34 = vector.broadcast %c125_i32 : i32 to vector<32x1024xi32>
    %35 = arith.cmpi sle, %17, %34 : vector<32x1024xi32>
    %cst_9 = arith.constant 0.000000e+00 : f32
    %36 = vector.broadcast %cst_9 : f32 to vector<32x1024xf32>
    %37 = arith.select %35, %21, %36 : vector<32x1024xi1>, vector<32x1024xf32>
    %c1_i32_10 = arith.constant 1 : i32
    %38 = vector.broadcast %c1_i32_10 : i32 to vector<32x1024xi32>
    %39 = arith.cmpi sge, %17, %38 : vector<32x1024xi32>
    %cst_11 = arith.constant -1.000000e+30 : f32
    %40 = vector.broadcast %cst_11 : f32 to vector<32x1024xf32>
    %41 = arith.select %39, %18, %40 : vector<32x1024xi1>, vector<32x1024xf32>
    %42 = arith.maximumf %0, %41 : vector<32x1024xf32>
    %c126_i32_12 = arith.constant 126 : i32
    %43 = vector.broadcast %c126_i32_12 : i32 to vector<32x1024xi32>
    %44 = arith.cmpi sle, %17, %43 : vector<32x1024xi32>
    %cst_13 = arith.constant -1.000000e+30 : f32
    %45 = vector.broadcast %cst_13 : f32 to vector<32x1024xf32>
    %46 = arith.select %44, %19, %45 : vector<32x1024xi1>, vector<32x1024xf32>
    %47 = arith.maximumf %42, %46 : vector<32x1024xf32>
    %48 = tpu.concatenate %0, %25, %29, %33, %37, %47 in 0 : vector<32x1024xf32>, vector<32x1024xf32>, vector<32x1024xf32>, vector<32x1024xf32>, vector<32x1024xf32>, vector<32x1024xf32> -> vector<192x1024xf32>
    %c0_14 = arith.constant 0 : index
    %c0_15 = arith.constant 0 : index
    %49 = vector.load %arg2[%c0_14, %c0_15] : memref<128x192xf32, #tpu.memory_space<vmem>>, vector<128x192xf32>
    %cst_16 = arith.constant dense<0.000000e+00> : vector<128x1024xf32>
    %50 = tpu.matmul %49, %48, %cst_16 {dimension_numbers = #tpu.dot_dimension_numbers<[1], [0], [0], [1], [0, 0, 1, 1], [], []>} : vector<128x192xf32>, vector<192x1024xf32>, vector<128x1024xf32> -> vector<128x1024xf32>
    %c0_17 = arith.constant 0 : index
    %c0_18 = arith.constant 0 : index
    %51 = vector.load %arg3[%c0_17, %c0_18] : memref<128x1xf32, #tpu.memory_space<vmem>>, vector<128x1xf32>
    %52 = vector.broadcast %51 : vector<128x1xf32> to vector<128x1024xf32>
    %53 = arith.addf %50, %52 : vector<128x1024xf32>
    %54 = vector.extract_strided_slice %53 {offsets = [0, 0], sizes = [64, 1024], strides = [1, 1]} : vector<128x1024xf32> to vector<64x1024xf32>
    %cst_19 = arith.constant 0.000000e+00 : f32
    %55 = vector.broadcast %cst_19 : f32 to vector<64x1024xf32>
    %56 = arith.maximumf %54, %55 : vector<64x1024xf32>
    %57 = vector.extract_strided_slice %53 {offsets = [64, 0], sizes = [64, 1024], strides = [1, 1]} : vector<128x1024xf32> to vector<64x1024xf32>
    %c0_20 = arith.constant 0 : index
    %c0_21 = arith.constant 0 : index
    %58 = vector.load %arg8[%c0_20, %c0_21] : memref<1024x8xf32, #tpu.memory_space<vmem>>, vector<1024x8xf32>
    %cst_22 = arith.constant dense<0.000000e+00> : vector<64x8xf32>
    %59 = tpu.matmul %56, %58, %cst_22 {dimension_numbers = #tpu.dot_dimension_numbers<[1], [0], [0], [1], [0, 0, 1, 1], [], []>} : vector<64x1024xf32>, vector<1024x8xf32>, vector<64x8xf32> -> vector<64x8xf32>
    %c0_23 = arith.constant 0 : index
    %c0_24 = arith.constant 0 : index
    %60 = vector.load %arg4[%c0_23, %c0_24] : memref<4x64xf32, #tpu.memory_space<vmem>>, vector<4x64xf32>
    %cst_25 = arith.constant dense<0.000000e+00> : vector<4x8xf32>
    %61 = tpu.matmul %60, %59, %cst_25 {dimension_numbers = #tpu.dot_dimension_numbers<[1], [0], [0], [1], [0, 0, 1, 1], [], []>} : vector<4x64xf32>, vector<64x8xf32>, vector<4x8xf32> -> vector<4x8xf32>
    %c0_26 = arith.constant 0 : index
    %c0_27 = arith.constant 0 : index
    %62 = vector.load %arg5[%c0_26, %c0_27] : memref<4x1xf32, #tpu.memory_space<vmem>>, vector<4x1xf32>
    %63 = vector.broadcast %62 : vector<4x1xf32> to vector<4x8xf32>
    %64 = arith.addf %61, %63 : vector<4x8xf32>
    %cst_28 = arith.constant 0.000000e+00 : f32
    %65 = vector.broadcast %cst_28 : f32 to vector<4x8xf32>
    %66 = arith.maximumf %64, %65 : vector<4x8xf32>
    %c0_29 = arith.constant 0 : index
    %c0_30 = arith.constant 0 : index
    %67 = vector.load %arg6[%c0_29, %c0_30] : memref<64x4xf32, #tpu.memory_space<vmem>>, vector<64x4xf32>
    %cst_31 = arith.constant dense<0.000000e+00> : vector<64x8xf32>
    %68 = tpu.matmul %67, %66, %cst_31 {dimension_numbers = #tpu.dot_dimension_numbers<[1], [0], [0], [1], [0, 0, 1, 1], [], []>} : vector<64x4xf32>, vector<4x8xf32>, vector<64x8xf32> -> vector<64x8xf32>
    %c0_32 = arith.constant 0 : index
    %c0_33 = arith.constant 0 : index
    %69 = vector.load %arg7[%c0_32, %c0_33] : memref<64x1xf32, #tpu.memory_space<vmem>>, vector<64x1xf32>
    %70 = vector.broadcast %69 : vector<64x1xf32> to vector<64x8xf32>
    %71 = arith.addf %68, %70 : vector<64x8xf32>
    %72 = arith.negf %71 : vector<64x8xf32>
    %73 = math.exp %72 : vector<64x8xf32>
    %cst_34 = arith.constant 1.000000e+00 : f32
    %74 = vector.broadcast %cst_34 : f32 to vector<64x8xf32>
    %75 = arith.addf %74, %73 : vector<64x8xf32>
    %76 = arith.divf %74, %75 : vector<64x8xf32>
    %c0_35 = arith.constant 0 : index
    %c0_36 = arith.constant 0 : index
    %77 = vector.load %arg9[%c0_35, %c0_36] : memref<8x1024xf32, #tpu.memory_space<vmem>>, vector<8x1024xf32>
    %cst_37 = arith.constant dense<0.000000e+00> : vector<64x1024xf32>
    %78 = tpu.matmul %76, %77, %cst_37 {dimension_numbers = #tpu.dot_dimension_numbers<[1], [0], [0], [1], [0, 0, 1, 1], [], []>} : vector<64x8xf32>, vector<8x1024xf32>, vector<64x1024xf32> -> vector<64x1024xf32>
    %79 = arith.mulf %56, %78 : vector<64x1024xf32>
    %80 = arith.addf %79, %57 : vector<64x1024xf32>
    %c0_38 = arith.constant 0 : index
    %c0_39 = arith.constant 0 : index
    %81 = vector.load %arg10[%c0_38, %c0_39] : memref<64x1024xf32, #tpu.memory_space<vmem>>, vector<64x1024xf32>
    tpu.vector_store %arg10[%c0_38, %c0_39], %80 {strides = array<i32>} : memref<64x1024xf32, #tpu.memory_space<vmem>>, vector<64x1024xf32>,
    return
  }
  func.func @transform_0(%arg0: i32) -> (i32, i32) {
    %c0_i32 = arith.constant 0 : i32
    %c0_i32_0 = arith.constant 0 : i32
    return %c0_i32, %arg0 : i32, i32
  }
  func.func @transform_1(%arg0: i32) -> (i32, i32) {
    %c0_i32 = arith.constant 0 : i32
    %c0_i32_0 = arith.constant 0 : i32
    %c0_i32_1 = arith.constant 0 : i32
    return %c0_i32, %c0_i32_0 : i32, i32
  }
  func.func @transform_2(%arg0: i32) -> (i32, i32) {
    %c0_i32 = arith.constant 0 : i32
    %c0_i32_0 = arith.constant 0 : i32
    %c0_i32_1 = arith.constant 0 : i32
    return %c0_i32, %c0_i32_0 : i32, i32
  }
  func.func @transform_3(%arg0: i32) -> (i32, i32) {
    %c0_i32 = arith.constant 0 : i32
    %c0_i32_0 = arith.constant 0 : i32
    %c0_i32_1 = arith.constant 0 : i32
    return %c0_i32, %c0_i32_0 : i32, i32
  }
  func.func @transform_4(%arg0: i32) -> (i32, i32) {
    %c0_i32 = arith.constant 0 : i32
    %c0_i32_0 = arith.constant 0 : i32
    %c0_i32_1 = arith.constant 0 : i32
    return %c0_i32, %c0_i32_0 : i32, i32
  }
  func.func @transform_5(%arg0: i32) -> (i32, i32) {
    %c0_i32 = arith.constant 0 : i32
    %c0_i32_0 = arith.constant 0 : i32
    %c0_i32_1 = arith.constant 0 : i32
    return %c0_i32, %c0_i32_0 : i32, i32
  }
  func.func @transform_6(%arg0: i32) -> (i32, i32) {
    %c0_i32 = arith.constant 0 : i32
    %c0_i32_0 = arith.constant 0 : i32
    %c0_i32_1 = arith.constant 0 : i32
    return %c0_i32, %c0_i32_0 : i32, i32
  }
  func.func @transform_7(%arg0: i32) -> (i32, i32) {
    %c0_i32 = arith.constant 0 : i32
    %c0_i32_0 = arith.constant 0 : i32
    %c0_i32_1 = arith.constant 0 : i32
    return %c0_i32, %c0_i32_0 : i32, i32
  }
  func.func @transform_8(%arg0: i32) -> (i32, i32) {
    %c0_i32 = arith.constant 0 : i32
    %c0_i32_0 = arith.constant 0 : i32
    %c0_i32_1 = arith.constant 0 : i32
    return %c0_i32, %c0_i32_0 : i32, i32
  }
  func.func @transform_9(%arg0: i32) -> (i32, i32) {
    %c0_i32 = arith.constant 0 : i32
    %c0_i32_0 = arith.constant 0 : i32
    return %c0_i32, %arg0 : i32, i32
  }
}

</mosaic_0001>

<llo_original>
// kernel: tpu_custom_call.1
$region0: #{tpu_custom_call.1}
  #allocation0 [shape = 'u32[]', space=smem, size = 0x4, offset = 0x4, fixed_abs, tag = 'smem constant byte address 0x4 - core index']
  #allocation1 [shape = 'u32[144,128]{1,0:T(1,128)}', space=vmem, size = 0x12000, scoped, tag = 'internal scratch']
  %s0 = inlined_call_operand.vmem [shape: f32[32,1024], index: 0, kind: input, shape index: {}]
  %s1 = inlined_call_operand.vmem [shape: f32[128,192], index: 1, kind: input, shape index: {}]
  %s2 = inlined_call_operand.vmem [shape: f32[128,1], index: 2, kind: input, shape index: {}]
  %s3 = inlined_call_operand.vmem [shape: f32[4,64], index: 3, kind: input, shape index: {}]
  %s4 = inlined_call_operand.vmem [shape: f32[4,1], index: 4, kind: input, shape index: {}]
  %s5 = inlined_call_operand.vmem [shape: f32[64,4], index: 5, kind: input, shape index: {}]
  %s6 = inlined_call_operand.vmem [shape: f32[64,1], index: 6, kind: input, shape index: {}]
  %s7 = inlined_call_operand.vmem [shape: f32[1024,8], index: 7, kind: input, shape index: {}]
  %s8 = inlined_call_operand.vmem [shape: f32[8,1024], index: 8, kind: input, shape index: {}]
  %s9 = inlined_call_operand.hbm [shape: f32[64,1024], index: 9, kind: output, shape index: {}]
  %s10 = sld [smem:[#allocation0]]
  $region46: #{tpu_custom_call.1} parent=0
    _
  %s12 = ssub.s32 1, %s10
  %s13 = scalar_select 0, %s12, %s10
  $region1: #{tpu_custom_call.1} parent=0
    #allocation2 [shape = 'u8[262144]{0}', space=vmem, size = 0x40000, scoped, tag = 'output window, operand 0, single buffered']
    #allocation3 [shape = 's32[1]{0}', space=sflag, size = 0x4, scoped, tag = 'scoped memory for tpu_custom_call.1']
    %14 = vsyncpa [#allocation3], 0
    // Predicated region
    $region2: #{tpu_custom_call.1} parent=1 // pred_check
      _
    $region3: #{tpu_custom_call.1} parent=1 // pred_check_branch
      %16 = sbr.rel (0) target = $region5
    $region4: #{tpu_custom_call.1} parent=1 // pred_region
      _
    $region5: #{tpu_custom_call.1} parent=1 // pred_fallthru
      _
    // Predicated region
    $region6: #{tpu_custom_call.1} parent=1 // pred_check
      _
    $region7: #{tpu_custom_call.1} parent=1 // pred_check_branch
      %18 = sbr.rel (0) target = $region9
    $region8: #{tpu_custom_call.1} parent=1 // pred_region
      _
    $region9: #{tpu_custom_call.1} parent=1 // pred_fallthru
      _
    // Predicated region
    $region10: #{tpu_custom_call.1} parent=1 // pred_check
      _
    $region11: #{tpu_custom_call.1} parent=1 // pred_check_branch
      %20 = sbr.rel (0) target = $region13
    $region12: #{tpu_custom_call.1} parent=1 // pred_region
      _
    $region13: #{tpu_custom_call.1} parent=1 // pred_fallthru
      _
    // Predicated region
    $region14: #{tpu_custom_call.1} parent=1 // pred_check
      _
    $region15: #{tpu_custom_call.1} parent=1 // pred_check_branch
      %22 = sbr.rel (0) target = $region17
    $region16: #{tpu_custom_call.1} parent=1 // pred_region
      _
    $region17: #{tpu_custom_call.1} parent=1 // pred_fallthru
      _
    // Predicated region
    $region18: #{tpu_custom_call.1} parent=1 // pred_check
      _
    $region19: #{tpu_custom_call.1} parent=1 // pred_check_branch
      %24 = sbr.rel (0) target = $region21
    $region20: #{tpu_custom_call.1} parent=1 // pred_region
      _
    $region21: #{tpu_custom_call.1} parent=1 // pred_fallthru
      _
    // Predicated region
    $region22: #{tpu_custom_call.1} parent=1 // pred_check
      _
    $region23: #{tpu_custom_call.1} parent=1 // pred_check_branch
      %26 = sbr.rel (0) target = $region25
    $region24: #{tpu_custom_call.1} parent=1 // pred_region
      _
    $region25: #{tpu_custom_call.1} parent=1 // pred_fallthru
      _
    // Predicated region
    $region26: #{tpu_custom_call.1} parent=1 // pred_check
      _
    $region27: #{tpu_custom_call.1} parent=1 // pred_check_branch
      %28 = sbr.rel (0) target = $region29
    $region28: #{tpu_custom_call.1} parent=1 // pred_region
      _
    $region29: #{tpu_custom_call.1} parent=1 // pred_fallthru
      _
    // Predicated region
    $region30: #{tpu_custom_call.1} parent=1 // pred_check
      _
    $region31: #{tpu_custom_call.1} parent=1 // pred_check_branch
      %30 = sbr.rel (0) target = $region33
    $region32: #{tpu_custom_call.1} parent=1 // pred_region
      _
    $region33: #{tpu_custom_call.1} parent=1 // pred_fallthru
      _
    // Predicated region
    $region34: #{tpu_custom_call.1} parent=1 // pred_check
      _
    $region35: #{tpu_custom_call.1} parent=1 // pred_check_branch
      %32 = sbr.rel (0) target = $region37
    $region36: #{tpu_custom_call.1} parent=1 // pred_region
      _
    $region37: #{tpu_custom_call.1} parent=1 // pred_fallthru
      _
    %v33 = vld [vmem:[%s0] sm:$0xff]
    %v34 = vld [vmem:[%s0 + $0x8] sm:$0xff]
    %v35 = vld [vmem:[%s0 + $0x10] sm:$0xff]
    %v36 = vld [vmem:[%s0 + $0x18] sm:$0xff]
    %v37 = vld [vmem:[%s0 + $0x20] sm:$0xff]
    %v38 = vld [vmem:[%s0 + $0x28] sm:$0xff]
    %v39 = vld [vmem:[%s0 + $0x30] sm:$0xff]
    %v40 = vld [vmem:[%s0 + $0x38] sm:$0xff]
    %v41 = vld [vmem:[%s0 + $0x40] sm:$0xff]
    %v42 = vld [vmem:[%s0 + $0x48] sm:$0xff]
    %v43 = vld [vmem:[%s0 + $0x50] sm:$0xff]
    %v44 = vld [vmem:[%s0 + $0x58] sm:$0xff]
    %v45 = vld [vmem:[%s0 + $0x60] sm:$0xff]
    %v46 = vld [vmem:[%s0 + $0x68] sm:$0xff]
    %v47 = vld [vmem:[%s0 + $0x70] sm:$0xff]
    %v48 = vld [vmem:[%s0 + $0x78] sm:$0xff]
    %v49 = vld [vmem:[%s0 + $0x80] sm:$0xff]
    %v50 = vld [vmem:[%s0 + $0x88] sm:$0xff]
    %v51 = vld [vmem:[%s0 + $0x90] sm:$0xff]
    %v52 = vld [vmem:[%s0 + $0x98] sm:$0xff]
    %v53 = vld [vmem:[%s0 + $0xa0] sm:$0xff]
    %v54 = vld [vmem:[%s0 + $0xa8] sm:$0xff]
    %v55 = vld [vmem:[%s0 + $0xb0] sm:$0xff]
    %v56 = vld [vmem:[%s0 + $0xb8] sm:$0xff]
    %v57 = vld [vmem:[%s0 + $0xc0] sm:$0xff]
    %v58 = vld [vmem:[%s0 + $0xc8] sm:$0xff]
    %v59 = vld [vmem:[%s0 + $0xd0] sm:$0xff]
    %v60 = vld [vmem:[%s0 + $0xd8] sm:$0xff]
    %v61 = vld [vmem:[%s0 + $0xe0] sm:$0xff]
    %v62 = vld [vmem:[%s0 + $0xe8] sm:$0xff]
    %v63 = vld [vmem:[%s0 + $0xf0] sm:$0xff]
    %v64 = vld [vmem:[%s0 + $0xf8] sm:$0xff]
    %v65 = vlaneseq
    %v66 = vand.u32 %v65, 127
    %v67 = vadd.s32 %v66, 128
    %v68 = vadd.s32 %v66, 256
    %v69 = vadd.s32 %v66, 384
    %v70 = vadd.s32 %v66, 512
    %v71 = vadd.s32 %v66, 640
    %v72 = vadd.s32 %v66, 768
    %v73 = vadd.s32 %v66, 896
    %vm74 = vcmp.lt.s32.totalorder %v66, 0
    %v75 = vsub.s32 0, %v66
    %v76 = vsel %vm74, %v75, %v66
    %v77 = vshrl.u32 %v76, 7
    %v78 = vand.u32 %v76, 127
    %v79 = vsub.s32 0, %v78
    %v80 = vsel %vm74, %v79, %v78
    %vm81 = vcmp.lt.s32.totalorder %v67, 0
    %v82 = vsub.s32 0, %v67
    %v83 = vsel %vm81, %v82, %v67
    %v84 = vshrl.u32 %v83, 7
    %v85 = vand.u32 %v83, 127
    %v86 = vsub.s32 0, %v85
    %v87 = vsel %vm81, %v86, %v85
    %vm88 = vcmp.lt.s32.totalorder %v68, 0
    %v89 = vsub.s32 0, %v68
    %v90 = vsel %vm88, %v89, %v68
    %v91 = vshrl.u32 %v90, 7
    %v92 = vand.u32 %v90, 127
    %v93 = vsub.s32 0, %v92
    %v94 = vsel %vm88, %v93, %v92
    %vm95 = vcmp.lt.s32.totalorder %v69, 0
    %v96 = vsub.s32 0, %v69
    %v97 = vsel %vm95, %v96, %v69
    %v98 = vshrl.u32 %v97, 7
    %v99 = vand.u32 %v97, 127
    %v100 = vsub.s32 0, %v99
    %v101 = vsel %vm95, %v100, %v99
    %vm102 = vcmp.lt.s32.totalorder %v70, 0
    %v103 = vsub.s32 0, %v70
    %v104 = vsel %vm102, %v103, %v70
    %v105 = vshrl.u32 %v104, 7
    %v106 = vand.u32 %v104, 127
    %v107 = vsub.s32 0, %v106
    %v108 = vsel %vm102, %v107, %v106
    %vm109 = vcmp.lt.s32.totalorder %v71, 0
    %v110 = vsub.s32 0, %v71
    %v111 = vsel %vm109, %v110, %v71
    %v112 = vshrl.u32 %v111, 7
    %v113 = vand.u32 %v111, 127
    %v114 = vsub.s32 0, %v113
    %v115 = vsel %vm109, %v114, %v113
    %vm116 = vcmp.lt.s32.totalorder %v72, 0
    %v117 = vsub.s32 0, %v72
    %v118 = vsel %vm116, %v117, %v72
    %v119 = vshrl.u32 %v118, 7
    %v120 = vand.u32 %v118, 127
    %v121 = vsub.s32 0, %v120
    %v122 = vsel %vm116, %v121, %v120
    %vm123 = vcmp.lt.s32.totalorder %v73, 0
    %v124 = vsub.s32 0, %v73
    %v125 = vsel %vm123, %v124, %v73
    %v126 = vshrl.u32 %v125, 7
    %v127 = vand.u32 %v125, 127
    %v128 = vsub.s32 0, %v127
    %v129 = vsel %vm123, %v128, %v127
    %vm130 = vcmp.ne.s32.totalorder %v80, 0
    %vm131 = vcmp.ne.s32.totalorder %v87, 0
    %vm132 = vcmp.ne.s32.totalorder %v94, 0
    %vm133 = vcmp.ne.s32.totalorder %v101, 0
    %vm134 = vcmp.ne.s32.totalorder %v108, 0
    %vm135 = vcmp.ne.s32.totalorder %v115, 0
    %vm136 = vcmp.ne.s32.totalorder %v122, 0
    %vm137 = vcmp.ne.s32.totalorder %v129, 0
    %vm138 = vcmp.lt.s32.totalorder %v80, 0
    %vm139 = vcmp.lt.s32.totalorder %v87, 0
    %vm140 = vcmp.lt.s32.totalorder %v94, 0
    %vm141 = vcmp.lt.s32.totalorder %v101, 0
    %vm142 = vcmp.lt.s32.totalorder %v108, 0
    %vm143 = vcmp.lt.s32.totalorder %v115, 0
    %vm144 = vcmp.lt.s32.totalorder %v122, 0
    %vm145 = vcmp.lt.s32.totalorder %v129, 0
    %vm146 = vmand %vm138, %vm130
    %vm147 = vmand %vm139, %vm131
    %vm148 = vmand %vm140, %vm132
    %vm149 = vmand %vm141, %vm133
    %vm150 = vmand %vm142, %vm134
    %vm151 = vmand %vm143, %vm135
    %vm152 = vmand %vm144, %vm136
    %vm153 = vmand %vm145, %vm137
    %v154 = vadd.s32 %v80, 128
    %v155 = vadd.s32 %v87, 128
    %v156 = vadd.s32 %v94, 128
    %v157 = vadd.s32 %v101, 128
    %v158 = vadd.s32 %v108, 128
    %v159 = vadd.s32 %v115, 128
    %v160 = vadd.s32 %v122, 128
    %v161 = vadd.s32 %v129, 128
    %v162 = vsel %vm146, %v154, %v80
    %v163 = vsel %vm147, %v155, %v87
    %v164 = vsel %vm148, %v156, %v94
    %v165 = vsel %vm149, %v157, %v101
    %v166 = vsel %vm150, %v158, %v108
    %v167 = vsel %vm151, %v159, %v115
    %v168 = vsel %vm152, %v160, %v122
    %v169 = vsel %vm153, %v161, %v129
    %170 = vrot.lane.b32.xlu0 %v33, 1
    %v171 = vpop.permute.xlu0 %170
    %172 = vrot.lane.b32.xlu0 %v41, 1
    %v173 = vpop.permute.xlu0 %172
    %174 = vrot.lane.b32.xlu0 %v49, 1
    %v175 = vpop.permute.xlu0 %174
    %176 = vrot.lane.b32.xlu0 %v57, 1
    %v177 = vpop.permute.xlu0 %176
    %178 = vrot.lane.b32.xlu0 %v34, 1
    %v179 = vpop.permute.xlu0 %178
    %180 = vrot.lane.b32.xlu0 %v42, 1
    %v181 = vpop.permute.xlu0 %180
    %182 = vrot.lane.b32.xlu0 %v50, 1
    %v183 = vpop.permute.xlu0 %182
    %184 = vrot.lane.b32.xlu0 %v58, 1
    %v185 = vpop.permute.xlu0 %184
    %186 = vrot.lane.b32.xlu0 %v35, 1
    %v187 = vpop.permute.xlu0 %186
    %188 = vrot.lane.b32.xlu0 %v43, 1
    %v189 = vpop.permute.xlu0 %188
    %190 = vrot.lane.b32.xlu0 %v51, 1
    %v191 = vpop.permute.xlu0 %190
    %192 = vrot.lane.b32.xlu0 %v59, 1
    %v193 = vpop.permute.xlu0 %192
    %194 = vrot.lane.b32.xlu0 %v36, 1
    %v195 = vpop.permute.xlu0 %194
    %196 = vrot.lane.b32.xlu0 %v44, 1
    %v197 = vpop.permute.xlu0 %196
    %198 = vrot.lane.b32.xlu0 %v52, 1
    %v199 = vpop.permute.xlu0 %198
    %200 = vrot.lane.b32.xlu0 %v60, 1
    %v201 = vpop.permute.xlu0 %200
    %202 = vrot.lane.b32.xlu0 %v37, 1
    %v203 = vpop.permute.xlu0 %202
    %204 = vrot.lane.b32.xlu0 %v45, 1
    %v205 = vpop.permute.xlu0 %204
    %206 = vrot.lane.b32.xlu0 %v53, 1
    %v207 = vpop.permute.xlu0 %206
    %208 = vrot.lane.b32.xlu0 %v61, 1
    %v209 = vpop.permute.xlu0 %208
    %210 = vrot.lane.b32.xlu0 %v38, 1
    %v211 = vpop.permute.xlu0 %210
    %212 = vrot.lane.b32.xlu0 %v46, 1
    %v213 = vpop.permute.xlu0 %212
    %214 = vrot.lane.b32.xlu0 %v54, 1
    %v215 = vpop.permute.xlu0 %214
    %216 = vrot.lane.b32.xlu0 %v62, 1
    %v217 = vpop.permute.xlu0 %216
    %218 = vrot.lane.b32.xlu0 %v39, 1
    %v219 = vpop.permute.xlu0 %218
    %220 = vrot.lane.b32.xlu0 %v47, 1
    %v221 = vpop.permute.xlu0 %220
    %222 = vrot.lane.b32.xlu0 %v55, 1
    %v223 = vpop.permute.xlu0 %222
    %224 = vrot.lane.b32.xlu0 %v63, 1
    %v225 = vpop.permute.xlu0 %224
    %226 = vrot.lane.b32.xlu0 %v40, 1
    %v227 = vpop.permute.xlu0 %226
    %228 = vrot.lane.b32.xlu0 %v48, 1
    %v229 = vpop.permute.xlu0 %228
    %230 = vrot.lane.b32.xlu0 %v56, 1
    %v231 = vpop.permute.xlu0 %230
    %232 = vrot.lane.b32.xlu0 %v64, 1
    %v233 = vpop.permute.xlu0 %232
    %vm234 = vcmp.lt.s32.totalorder %v66, 1
    %v235 = vsel %vm234, %v219, %v227
    %v236 = vsel %vm234, %v221, %v229
    %v237 = vsel %vm234, %v223, %v231
    %v238 = vsel %vm234, %v225, %v233
    %v239 = vsel %vm234, %v211, %v219
    %v240 = vsel %vm234, %v213, %v221
    %v241 = vsel %vm234, %v215, %v223
    %v242 = vsel %vm234, %v217, %v225
    %v243 = vsel %vm234, %v203, %v211
    %v244 = vsel %vm234, %v205, %v213
    %v245 = vsel %vm234, %v207, %v215
    %v246 = vsel %vm234, %v209, %v217
    %v247 = vsel %vm234, %v195, %v203
    %v248 = vsel %vm234, %v197, %v205
    %v249 = vsel %vm234, %v199, %v207
    %v250 = vsel %vm234, %v201, %v209
    %v251 = vsel %vm234, %v187, %v195
    %v252 = vsel %vm234, %v189, %v197
    %v253 = vsel %vm234, %v191, %v199
    %v254 = vsel %vm234, %v193, %v201
    %v255 = vsel %vm234, %v179, %v187
    %v256 = vsel %vm234, %v181, %v189
    %v257 = vsel %vm234, %v183, %v191
    %v258 = vsel %vm234, %v185, %v193
    %v259 = vsel %vm234, %v171, %v179
    %v260 = vsel %vm234, %v173, %v181
    %v261 = vsel %vm234, %v175, %v183
    %v262 = vsel %vm234, %v177, %v185
    %v263 = vsel %vm234, %v227, %v171
    %v264 = vsel %vm234, %v229, %v173
    %v265 = vsel %vm234, %v231, %v175
    %v266 = vsel %vm234, %v233, %v177
    %267 = vrot.lane.b32.xlu0 %v33, 127
    %v268 = vpop.permute.xlu0 %267
    %269 = vrot.lane.b32.xlu0 %v41, 127
    %v270 = vpop.permute.xlu0 %269
    %271 = vrot.lane.b32.xlu0 %v49, 127
    %v272 = vpop.permute.xlu0 %271
    %273 = vrot.lane.b32.xlu0 %v57, 127
    %v274 = vpop.permute.xlu0 %273
    %275 = vrot.lane.b32.xlu0 %v34, 127
    %v276 = vpop.permute.xlu0 %275
    %277 = vrot.lane.b32.xlu0 %v42, 127
    %v278 = vpop.permute.xlu0 %277
    %279 = vrot.lane.b32.xlu0 %v50, 127
    %v280 = vpop.permute.xlu0 %279
    %281 = vrot.lane.b32.xlu0 %v58, 127
    %v282 = vpop.permute.xlu0 %281
    %283 = vrot.lane.b32.xlu0 %v35, 127
    %v284 = vpop.permute.xlu0 %283
    %285 = vrot.lane.b32.xlu0 %v43, 127
    %v286 = vpop.permute.xlu0 %285
    %287 = vrot.lane.b32.xlu0 %v51, 127
    %v288 = vpop.permute.xlu0 %287
    %289 = vrot.lane.b32.xlu0 %v59, 127
    %v290 = vpop.permute.xlu0 %289
    %291 = vrot.lane.b32.xlu0 %v36, 127
    %v292 = vpop.permute.xlu0 %291
    %293 = vrot.lane.b32.xlu0 %v44, 127
    %v294 = vpop.permute.xlu0 %293
    %295 = vrot.lane.b32.xlu0 %v52, 127
    %v296 = vpop.permute.xlu0 %295
    %297 = vrot.lane.b32.xlu0 %v60, 127
    %v298 = vpop.permute.xlu0 %297
    %299 = vrot.lane.b32.xlu0 %v37, 127
    %v300 = vpop.permute.xlu0 %299
    %301 = vrot.lane.b32.xlu0 %v45, 127
    %v302 = vpop.permute.xlu0 %301
    %303 = vrot.lane.b32.xlu0 %v53, 127
    %v304 = vpop.permute.xlu0 %303
    %305 = vrot.lane.b32.xlu0 %v61, 127
    %v306 = vpop.permute.xlu0 %305
    %307 = vrot.lane.b32.xlu0 %v38, 127
    %v308 = vpop.permute.xlu0 %307
    %309 = vrot.lane.b32.xlu0 %v46, 127
    %v310 = vpop.permute.xlu0 %309
    %311 = vrot.lane.b32.xlu0 %v54, 127
    %v312 = vpop.permute.xlu0 %311
    %313 = vrot.lane.b32.xlu0 %v62, 127
    %v314 = vpop.permute.xlu0 %313
    %315 = vrot.lane.b32.xlu0 %v39, 127
    %v316 = vpop.permute.xlu0 %315
    %317 = vrot.lane.b32.xlu0 %v47, 127
    %v318 = vpop.permute.xlu0 %317
    %319 = vrot.lane.b32.xlu0 %v55, 127
    %v320 = vpop.permute.xlu0 %319
    %321 = vrot.lane.b32.xlu0 %v63, 127
    %v322 = vpop.permute.xlu0 %321
    %323 = vrot.lane.b32.xlu0 %v40, 127
    %v324 = vpop.permute.xlu0 %323
    %325 = vrot.lane.b32.xlu0 %v48, 127
    %v326 = vpop.permute.xlu0 %325
    %327 = vrot.lane.b32.xlu0 %v56, 127
    %v328 = vpop.permute.xlu0 %327
    %329 = vrot.lane.b32.xlu0 %v64, 127
    %v330 = vpop.permute.xlu0 %329
    %vm331 = vcmp.lt.s32.totalorder %v66, 127
    %v332 = vsel %vm331, %v316, %v324
    %v333 = vsel %vm331, %v318, %v326
    %v334 = vsel %vm331, %v320, %v328
    %v335 = vsel %vm331, %v322, %v330
    %v336 = vsel %vm331, %v308, %v316
    %v337 = vsel %vm331, %v310, %v318
    %v338 = vsel %vm331, %v312, %v320
    %v339 = vsel %vm331, %v314, %v322
    %v340 = vsel %vm331, %v300, %v308
    %v341 = vsel %vm331, %v302, %v310
    %v342 = vsel %vm331, %v304, %v312
    %v343 = vsel %vm331, %v306, %v314
    %v344 = vsel %vm331, %v292, %v300
    %v345 = vsel %vm331, %v294, %v302
    %v346 = vsel %vm331, %v296, %v304
    %v347 = vsel %vm331, %v298, %v306
    %v348 = vsel %vm331, %v284, %v292
    %v349 = vsel %vm331, %v286, %v294
    %v350 = vsel %vm331, %v288, %v296
    %v351 = vsel %vm331, %v290, %v298
    %v352 = vsel %vm331, %v276, %v284
    %v353 = vsel %vm331, %v278, %v286
    %v354 = vsel %vm331, %v280, %v288
    %v355 = vsel %vm331, %v282, %v290
    %v356 = vsel %vm331, %v268, %v276
    %v357 = vsel %vm331, %v270, %v278
    %v358 = vsel %vm331, %v272, %v280
    %v359 = vsel %vm331, %v274, %v282
    %v360 = vsel %vm331, %v324, %v268
    %v361 = vsel %vm331, %v326, %v270
    %v362 = vsel %vm331, %v328, %v272
    %v363 = vsel %vm331, %v330, %v274
    %364 = vrot.lane.b32.xlu0 %v33, 2
    %v365 = vpop.permute.xlu0 %364
    %366 = vrot.lane.b32.xlu0 %v41, 2
    %v367 = vpop.permute.xlu0 %366
    %368 = vrot.lane.b32.xlu0 %v49, 2
    %v369 = vpop.permute.xlu0 %368
    %370 = vrot.lane.b32.xlu0 %v57, 2
    %v371 = vpop.permute.xlu0 %370
    %372 = vrot.lane.b32.xlu0 %v34, 2
    %v373 = vpop.permute.xlu0 %372
    %374 = vrot.lane.b32.xlu0 %v42, 2
    %v375 = vpop.permute.xlu0 %374
    %376 = vrot.lane.b32.xlu0 %v50, 2
    %v377 = vpop.permute.xlu0 %376
    %378 = vrot.lane.b32.xlu0 %v58, 2
    %v379 = vpop.permute.xlu0 %378
    %380 = vrot.lane.b32.xlu0 %v35, 2
    %v381 = vpop.permute.xlu0 %380
    %382 = vrot.lane.b32.xlu0 %v43, 2
    %v383 = vpop.permute.xlu0 %382
    %384 = vrot.lane.b32.xlu0 %v51, 2
    %v385 = vpop.permute.xlu0 %384
    %386 = vrot.lane.b32.xlu0 %v59, 2
    %v387 = vpop.permute.xlu0 %386
    %388 = vrot.lane.b32.xlu0 %v36, 2
    %v389 = vpop.permute.xlu0 %388
    %390 = vrot.lane.b32.xlu0 %v44, 2
    %v391 = vpop.permute.xlu0 %390
    %392 = vrot.lane.b32.xlu0 %v52, 2
    %v393 = vpop.permute.xlu0 %392
    %394 = vrot.lane.b32.xlu0 %v60, 2
    %v395 = vpop.permute.xlu0 %394
    %396 = vrot.lane.b32.xlu0 %v37, 2
    %v397 = vpop.permute.xlu0 %396
    %398 = vrot.lane.b32.xlu0 %v45, 2
    %v399 = vpop.permute.xlu0 %398
    %400 = vrot.lane.b32.xlu0 %v53, 2
    %v401 = vpop.permute.xlu0 %400
    %402 = vrot.lane.b32.xlu0 %v61, 2
    %v403 = vpop.permute.xlu0 %402
    %404 = vrot.lane.b32.xlu0 %v38, 2
    %v405 = vpop.permute.xlu0 %404
    %406 = vrot.lane.b32.xlu0 %v46, 2
    %v407 = vpop.permute.xlu0 %406
    %408 = vrot.lane.b32.xlu0 %v54, 2
    %v409 = vpop.permute.xlu0 %408
    %410 = vrot.lane.b32.xlu0 %v62, 2
    %v411 = vpop.permute.xlu0 %410
    %412 = vrot.lane.b32.xlu0 %v39, 2
    %v413 = vpop.permute.xlu0 %412
    %414 = vrot.lane.b32.xlu0 %v47, 2
    %v415 = vpop.permute.xlu0 %414
    %416 = vrot.lane.b32.xlu0 %v55, 2
    %v417 = vpop.permute.xlu0 %416
    %418 = vrot.lane.b32.xlu0 %v63, 2
    %v419 = vpop.permute.xlu0 %418
    %420 = vrot.lane.b32.xlu0 %v40, 2
    %v421 = vpop.permute.xlu0 %420
    %422 = vrot.lane.b32.xlu0 %v48, 2
    %v423 = vpop.permute.xlu0 %422
    %424 = vrot.lane.b32.xlu0 %v56, 2
    %v425 = vpop.permute.xlu0 %424
    %426 = vrot.lane.b32.xlu0 %v64, 2
    %v427 = vpop.permute.xlu0 %426
    %vm428 = vcmp.lt.s32.totalorder %v66, 2
    %v429 = vsel %vm428, %v413, %v421
    %v430 = vsel %vm428, %v415, %v423
    %v431 = vsel %vm428, %v417, %v425
    %v432 = vsel %vm428, %v419, %v427
    %v433 = vsel %vm428, %v405, %v413
    %v434 = vsel %vm428, %v407, %v415
    %v435 = vsel %vm428, %v409, %v417
    %v436 = vsel %vm428, %v411, %v419
    %v437 = vsel %vm428, %v397, %v405
    %v438 = vsel %vm428, %v399, %v407
    %v439 = vsel %vm428, %v401, %v409
    %v440 = vsel %vm428, %v403, %v411
    %v441 = vsel %vm428, %v389, %v397
    %v442 = vsel %vm428, %v391, %v399
    %v443 = vsel %vm428, %v393, %v401
    %v444 = vsel %vm428, %v395, %v403
    %v445 = vsel %vm428, %v381, %v389
    %v446 = vsel %vm428, %v383, %v391
    %v447 = vsel %vm428, %v385, %v393
    %v448 = vsel %vm428, %v387, %v395
    %v449 = vsel %vm428, %v373, %v381
    %v450 = vsel %vm428, %v375, %v383
    %v451 = vsel %vm428, %v377, %v385
    %v452 = vsel %vm428, %v379, %v387
    %v453 = vsel %vm428, %v365, %v373
    %v454 = vsel %vm428, %v367, %v375
    %v455 = vsel %vm428, %v369, %v377
    %v456 = vsel %vm428, %v371, %v379
    %v457 = vsel %vm428, %v421, %v365
    %v458 = vsel %vm428, %v423, %v367
    %v459 = vsel %vm428, %v425, %v369
    %v460 = vsel %vm428, %v427, %v371
    %461 = vrot.lane.b32.xlu0 %v33, 126
    %v462 = vpop.permute.xlu0 %461
    %463 = vrot.lane.b32.xlu0 %v41, 126
    %v464 = vpop.permute.xlu0 %463
    %465 = vrot.lane.b32.xlu0 %v49, 126
    %v466 = vpop.permute.xlu0 %465
    %467 = vrot.lane.b32.xlu0 %v57, 126
    %v468 = vpop.permute.xlu0 %467
    %469 = vrot.lane.b32.xlu0 %v34, 126
    %v470 = vpop.permute.xlu0 %469
    %471 = vrot.lane.b32.xlu0 %v42, 126
    %v472 = vpop.permute.xlu0 %471
    %473 = vrot.lane.b32.xlu0 %v50, 126
    %v474 = vpop.permute.xlu0 %473
    %475 = vrot.lane.b32.xlu0 %v58, 126
    %v476 = vpop.permute.xlu0 %475
    %477 = vrot.lane.b32.xlu0 %v35, 126
    %v478 = vpop.permute.xlu0 %477
    %479 = vrot.lane.b32.xlu0 %v43, 126
    %v480 = vpop.permute.xlu0 %479
    %481 = vrot.lane.b32.xlu0 %v51, 126
    %v482 = vpop.permute.xlu0 %481
    %483 = vrot.lane.b32.xlu0 %v59, 126
    %v484 = vpop.permute.xlu0 %483
    %485 = vrot.lane.b32.xlu0 %v36, 126
    %v486 = vpop.permute.xlu0 %485
    %487 = vrot.lane.b32.xlu0 %v44, 126
    %v488 = vpop.permute.xlu0 %487
    %489 = vrot.lane.b32.xlu0 %v52, 126
    %v490 = vpop.permute.xlu0 %489
    %491 = vrot.lane.b32.xlu0 %v60, 126
    %v492 = vpop.permute.xlu0 %491
    %493 = vrot.lane.b32.xlu0 %v37, 126
    %v494 = vpop.permute.xlu0 %493
    %495 = vrot.lane.b32.xlu0 %v45, 126
    %v496 = vpop.permute.xlu0 %495
    %497 = vrot.lane.b32.xlu0 %v53, 126
    %v498 = vpop.permute.xlu0 %497
    %499 = vrot.lane.b32.xlu0 %v61, 126
    %v500 = vpop.permute.xlu0 %499
    %501 = vrot.lane.b32.xlu0 %v38, 126
    %v502 = vpop.permute.xlu0 %501
    %503 = vrot.lane.b32.xlu0 %v46, 126
    %v504 = vpop.permute.xlu0 %503
    %505 = vrot.lane.b32.xlu0 %v54, 126
    %v506 = vpop.permute.xlu0 %505
    %507 = vrot.lane.b32.xlu0 %v62, 126
    %v508 = vpop.permute.xlu0 %507
    %509 = vrot.lane.b32.xlu0 %v39, 126
    %v510 = vpop.permute.xlu0 %509
    %511 = vrot.lane.b32.xlu0 %v47, 126
    %v512 = vpop.permute.xlu0 %511
    %513 = vrot.lane.b32.xlu0 %v55, 126
    %v514 = vpop.permute.xlu0 %513
    %515 = vrot.lane.b32.xlu0 %v63, 126
    %v516 = vpop.permute.xlu0 %515
    %517 = vrot.lane.b32.xlu0 %v40, 126
    %v518 = vpop.permute.xlu0 %517
    %519 = vrot.lane.b32.xlu0 %v48, 126
    %v520 = vpop.permute.xlu0 %519
    %521 = vrot.lane.b32.xlu0 %v56, 126
    %v522 = vpop.permute.xlu0 %521
    %523 = vrot.lane.b32.xlu0 %v64, 126
    %v524 = vpop.permute.xlu0 %523
    %vm525 = vcmp.lt.s32.totalorder %v66, 126
    %v526 = vsel %vm525, %v510, %v518
    %v527 = vsel %vm525, %v512, %v520
    %v528 = vsel %vm525, %v514, %v522
    %v529 = vsel %vm525, %v516, %v524
    %v530 = vsel %vm525, %v502, %v510
    %v531 = vsel %vm525, %v504, %v512
    %v532 = vsel %vm525, %v506, %v514
    %v533 = vsel %vm525, %v508, %v516
    %v534 = vsel %vm525, %v494, %v502
    %v535 = vsel %vm525, %v496, %v504
    %v536 = vsel %vm525, %v498, %v506
    %v537 = vsel %vm525, %v500, %v508
    %v538 = vsel %vm525, %v486, %v494
    %v539 = vsel %vm525, %v488, %v496
    %v540 = vsel %vm525, %v490, %v498
    %v541 = vsel %vm525, %v492, %v500
    %v542 = vsel %vm525, %v478, %v486
    %v543 = vsel %vm525, %v480, %v488
    %v544 = vsel %vm525, %v482, %v490
    %v545 = vsel %vm525, %v484, %v492
    %v546 = vsel %vm525, %v470, %v478
    %v547 = vsel %vm525, %v472, %v480
    %v548 = vsel %vm525, %v474, %v482
    %v549 = vsel %vm525, %v476, %v484
    %v550 = vsel %vm525, %v462, %v470
    %v551 = vsel %vm525, %v464, %v472
    %v552 = vsel %vm525, %v466, %v474
    %v553 = vsel %vm525, %v468, %v476
    %v554 = vsel %vm525, %v518, %v462
    %v555 = vsel %vm525, %v520, %v464
    %v556 = vsel %vm525, %v522, %v466
    %v557 = vsel %vm525, %v524, %v468
    %vm558 = vcmp.ge.s32.totalorder %v162, 1
    %vm559 = vcmp.ge.s32.totalorder %v163, 1
    %vm560 = vcmp.ge.s32.totalorder %v164, 1
    %vm561 = vcmp.ge.s32.totalorder %v165, 1
    %vm562 = vcmp.ge.s32.totalorder %v166, 1
    %vm563 = vcmp.ge.s32.totalorder %v167, 1
    %vm564 = vcmp.ge.s32.totalorder %v168, 1
    %vm565 = vcmp.ge.s32.totalorder %v169, 1
    %v566 = vsel %vm558, %v263, 0.0
    %v567 = vsel %vm559, %v259, 0.0
    %v568 = vsel %vm560, %v255, 0.0
    %v569 = vsel %vm561, %v251, 0.0
    %v570 = vsel %vm562, %v247, 0.0
    %v571 = vsel %vm563, %v243, 0.0
    %v572 = vsel %vm564, %v239, 0.0
    %v573 = vsel %vm565, %v235, 0.0
    %v574 = vsel %vm558, %v264, 0.0
    %v575 = vsel %vm559, %v260, 0.0
    %v576 = vsel %vm560, %v256, 0.0
    %v577 = vsel %vm561, %v252, 0.0
    %v578 = vsel %vm562, %v248, 0.0
    %v579 = vsel %vm563, %v244, 0.0
    %v580 = vsel %vm564, %v240, 0.0
    %v581 = vsel %vm565, %v236, 0.0
    %v582 = vsel %vm558, %v265, 0.0
    %v583 = vsel %vm559, %v261, 0.0
    %v584 = vsel %vm560, %v257, 0.0
    %v585 = vsel %vm561, %v253, 0.0
    %v586 = vsel %vm562, %v249, 0.0
    %v587 = vsel %vm563, %v245, 0.0
    %v588 = vsel %vm564, %v241, 0.0
    %v589 = vsel %vm565, %v237, 0.0
    %v590 = vsel %vm558, %v266, 0.0
    %v591 = vsel %vm559, %v262, 0.0
    %v592 = vsel %vm560, %v258, 0.0
    %v593 = vsel %vm561, %v254, 0.0
    %v594 = vsel %vm562, %v250, 0.0
    %v595 = vsel %vm563, %v246, 0.0
    %v596 = vsel %vm564, %v242, 0.0
    %v597 = vsel %vm565, %v238, 0.0
    %vm598 = vcmp.le.s32.totalorder %v162, 126
    %vm599 = vcmp.le.s32.totalorder %v163, 126
    %vm600 = vcmp.le.s32.totalorder %v164, 126
    %vm601 = vcmp.le.s32.totalorder %v165, 126
    %vm602 = vcmp.le.s32.totalorder %v166, 126
    %vm603 = vcmp.le.s32.totalorder %v167, 126
    %vm604 = vcmp.le.s32.totalorder %v168, 126
    %vm605 = vcmp.le.s32.totalorder %v169, 126
    %v606 = vsel %vm598, %v356, 0.0
    %v607 = vsel %vm599, %v352, 0.0
    %v608 = vsel %vm600, %v348, 0.0
    %v609 = vsel %vm601, %v344, 0.0
    %v610 = vsel %vm602, %v340, 0.0
    %v611 = vsel %vm603, %v336, 0.0
    %v612 = vsel %vm604, %v332, 0.0
    %v613 = vsel %vm605, %v360, 0.0
    %v614 = vsel %vm598, %v357, 0.0
    %v615 = vsel %vm599, %v353, 0.0
    %v616 = vsel %vm600, %v349, 0.0
    %v617 = vsel %vm601, %v345, 0.0
    %v618 = vsel %vm602, %v341, 0.0
    %v619 = vsel %vm603, %v337, 0.0
    %v620 = vsel %vm604, %v333, 0.0
    %v621 = vsel %vm605, %v361, 0.0
    %v622 = vsel %vm598, %v358, 0.0
    %v623 = vsel %vm599, %v354, 0.0
    %v624 = vsel %vm600, %v350, 0.0
    %v625 = vsel %vm601, %v346, 0.0
    %v626 = vsel %vm602, %v342, 0.0
    %v627 = vsel %vm603, %v338, 0.0
    %v628 = vsel %vm604, %v334, 0.0
    %v629 = vsel %vm605, %v362, 0.0
    %v630 = vsel %vm598, %v359, 0.0
    %v631 = vsel %vm599, %v355, 0.0
    %v632 = vsel %vm600, %v351, 0.0
    %v633 = vsel %vm601, %v347, 0.0
    %v634 = vsel %vm602, %v343, 0.0
    %v635 = vsel %vm603, %v339, 0.0
    %v636 = vsel %vm604, %v335, 0.0
    %v637 = vsel %vm605, %v363, 0.0
    %vm638 = vcmp.ge.s32.totalorder %v162, 2
    %vm639 = vcmp.ge.s32.totalorder %v163, 2
    %vm640 = vcmp.ge.s32.totalorder %v164, 2
    %vm641 = vcmp.ge.s32.totalorder %v165, 2
    %vm642 = vcmp.ge.s32.totalorder %v166, 2
    %vm643 = vcmp.ge.s32.totalorder %v167, 2
    %vm644 = vcmp.ge.s32.totalorder %v168, 2
    %vm645 = vcmp.ge.s32.totalorder %v169, 2
    %v646 = vsel %vm638, %v457, 0.0
    %v647 = vsel %vm639, %v453, 0.0
    %v648 = vsel %vm640, %v449, 0.0
    %v649 = vsel %vm641, %v445, 0.0
    %v650 = vsel %vm642, %v441, 0.0
    %v651 = vsel %vm643, %v437, 0.0
    %v652 = vsel %vm644, %v433, 0.0
    %v653 = vsel %vm645, %v429, 0.0
    %v654 = vsel %vm638, %v458, 0.0
    %v655 = vsel %vm639, %v454, 0.0
    %v656 = vsel %vm640, %v450, 0.0
    %v657 = vsel %vm641, %v446, 0.0
    %v658 = vsel %vm642, %v442, 0.0
    %v659 = vsel %vm643, %v438, 0.0
    %v660 = vsel %vm644, %v434, 0.0
    %v661 = vsel %vm645, %v430, 0.0
    %v662 = vsel %vm638, %v459, 0.0
    %v663 = vsel %vm639, %v455, 0.0
    %v664 = vsel %vm640, %v451, 0.0
    %v665 = vsel %vm641, %v447, 0.0
    %v666 = vsel %vm642, %v443, 0.0
    %v667 = vsel %vm643, %v439, 0.0
    %v668 = vsel %vm644, %v435, 0.0
    %v669 = vsel %vm645, %v431, 0.0
    %v670 = vsel %vm638, %v460, 0.0
    %v671 = vsel %vm639, %v456, 0.0
    %v672 = vsel %vm640, %v452, 0.0
    %v673 = vsel %vm641, %v448, 0.0
    %v674 = vsel %vm642, %v444, 0.0
    %v675 = vsel %vm643, %v440, 0.0
    %v676 = vsel %vm644, %v436, 0.0
    %v677 = vsel %vm645, %v432, 0.0
    %vm678 = vcmp.le.s32.totalorder %v162, 125
    %vm679 = vcmp.le.s32.totalorder %v163, 125
    %vm680 = vcmp.le.s32.totalorder %v164, 125
    %vm681 = vcmp.le.s32.totalorder %v165, 125
    %vm682 = vcmp.le.s32.totalorder %v166, 125
    %vm683 = vcmp.le.s32.totalorder %v167, 125
    %vm684 = vcmp.le.s32.totalorder %v168, 125
    %vm685 = vcmp.le.s32.totalorder %v169, 125
    %v686 = vsel %vm678, %v550, 0.0
    %v687 = vsel %vm679, %v546, 0.0
    %v688 = vsel %vm680, %v542, 0.0
    %v689 = vsel %vm681, %v538, 0.0
    %v690 = vsel %vm682, %v534, 0.0
    %v691 = vsel %vm683, %v530, 0.0
    %v692 = vsel %vm684, %v526, 0.0
    %v693 = vsel %vm685, %v554, 0.0
    %v694 = vsel %vm678, %v551, 0.0
    %v695 = vsel %vm679, %v547, 0.0
    %v696 = vsel %vm680, %v543, 0.0
    %v697 = vsel %vm681, %v539, 0.0
    %v698 = vsel %vm682, %v535, 0.0
    %v699 = vsel %vm683, %v531, 0.0
    %v700 = vsel %vm684, %v527, 0.0
    %v701 = vsel %vm685, %v555, 0.0
    %v702 = vsel %vm678, %v552, 0.0
    %v703 = vsel %vm679, %v548, 0.0
    %v704 = vsel %vm680, %v544, 0.0
    %v705 = vsel %vm681, %v540, 0.0
    %v706 = vsel %vm682, %v536, 0.0
    %v707 = vsel %vm683, %v532, 0.0
    %v708 = vsel %vm684, %v528, 0.0
    %v709 = vsel %vm685, %v556, 0.0
    %v710 = vsel %vm678, %v553, 0.0
    %v711 = vsel %vm679, %v549, 0.0
    %v712 = vsel %vm680, %v545, 0.0
    %v713 = vsel %vm681, %v541, 0.0
    %v714 = vsel %vm682, %v537, 0.0
    %v715 = vsel %vm683, %v533, 0.0
    %v716 = vsel %vm684, %v529, 0.0
    %v717 = vsel %vm685, %v557, 0.0
    %v718 = vsel %vm558, %v263, -1e+30
    %v719 = vsel %vm559, %v259, -1e+30
    %v720 = vsel %vm560, %v255, -1e+30
    %v721 = vsel %vm561, %v251, -1e+30
    %v722 = vsel %vm562, %v247, -1e+30
    %v723 = vsel %vm563, %v243, -1e+30
    %v724 = vsel %vm564, %v239, -1e+30
    %v725 = vsel %vm565, %v235, -1e+30
    %v726 = vsel %vm558, %v264, -1e+30
    %v727 = vsel %vm559, %v260, -1e+30
    %v728 = vsel %vm560, %v256, -1e+30
    %v729 = vsel %vm561, %v252, -1e+30
    %v730 = vsel %vm562, %v248, -1e+30
    %v731 = vsel %vm563, %v244, -1e+30
    %v732 = vsel %vm564, %v240, -1e+30
    %v733 = vsel %vm565, %v236, -1e+30
    %v734 = vsel %vm558, %v265, -1e+30
    %v735 = vsel %vm559, %v261, -1e+30
    %v736 = vsel %vm560, %v257, -1e+30
    %v737 = vsel %vm561, %v253, -1e+30
    %v738 = vsel %vm562, %v249, -1e+30
    %v739 = vsel %vm563, %v245, -1e+30
    %v740 = vsel %vm564, %v241, -1e+30
    %v741 = vsel %vm565, %v237, -1e+30
    %v742 = vsel %vm558, %v266, -1e+30
    %v743 = vsel %vm559, %v262, -1e+30
    %v744 = vsel %vm560, %v258, -1e+30
    %v745 = vsel %vm561, %v254, -1e+30
    %v746 = vsel %vm562, %v250, -1e+30
    %v747 = vsel %vm563, %v246, -1e+30
    %v748 = vsel %vm564, %v242, -1e+30
    %v749 = vsel %vm565, %v238, -1e+30
    %v750 = vmax.f32 %v33, %v718
    %v751 = vmax.f32 %v34, %v719
    %v752 = vmax.f32 %v35, %v720
    %v753 = vmax.f32 %v36, %v721
    %v754 = vmax.f32 %v37, %v722
    %v755 = vmax.f32 %v38, %v723
    %v756 = vmax.f32 %v39, %v724
    %v757 = vmax.f32 %v40, %v725
    %v758 = vmax.f32 %v41, %v726
    %v759 = vmax.f32 %v42, %v727
    %v760 = vmax.f32 %v43, %v728
    %v761 = vmax.f32 %v44, %v729
    %v762 = vmax.f32 %v45, %v730
    %v763 = vmax.f32 %v46, %v731
    %v764 = vmax.f32 %v47, %v732
    %v765 = vmax.f32 %v48, %v733
    %v766 = vmax.f32 %v49, %v734
    %v767 = vmax.f32 %v50, %v735
    %v768 = vmax.f32 %v51, %v736
    %v769 = vmax.f32 %v52, %v737
    %v770 = vmax.f32 %v53, %v738
    %v771 = vmax.f32 %v54, %v739
    %v772 = vmax.f32 %v55, %v740
    %v773 = vmax.f32 %v56, %v741
    %v774 = vmax.f32 %v57, %v742
    %v775 = vmax.f32 %v58, %v743
    %v776 = vmax.f32 %v59, %v744
    %v777 = vmax.f32 %v60, %v745
    %v778 = vmax.f32 %v61, %v746
    %v779 = vmax.f32 %v62, %v747
    %v780 = vmax.f32 %v63, %v748
    %v781 = vmax.f32 %v64, %v749
    %v782 = vsel %vm598, %v356, -1e+30
    %v783 = vsel %vm599, %v352, -1e+30
    %v784 = vsel %vm600, %v348, -1e+30
    %v785 = vsel %vm601, %v344, -1e+30
    %v786 = vsel %vm602, %v340, -1e+30
    %v787 = vsel %vm603, %v336, -1e+30
    %v788 = vsel %vm604, %v332, -1e+30
    %v789 = vsel %vm605, %v360, -1e+30
    %v790 = vsel %vm598, %v357, -1e+30
    %v791 = vsel %vm599, %v353, -1e+30
    %v792 = vsel %vm600, %v349, -1e+30
    %v793 = vsel %vm601, %v345, -1e+30
    %v794 = vsel %vm602, %v341, -1e+30
    %v795 = vsel %vm603, %v337, -1e+30
    %v796 = vsel %vm604, %v333, -1e+30
    %v797 = vsel %vm605, %v361, -1e+30
    %v798 = vsel %vm598, %v358, -1e+30
    %v799 = vsel %vm599, %v354, -1e+30
    %v800 = vsel %vm600, %v350, -1e+30
    %v801 = vsel %vm601, %v346, -1e+30
    %v802 = vsel %vm602, %v342, -1e+30
    %v803 = vsel %vm603, %v338, -1e+30
    %v804 = vsel %vm604, %v334, -1e+30
    %v805 = vsel %vm605, %v362, -1e+30
    %v806 = vsel %vm598, %v359, -1e+30
    %v807 = vsel %vm599, %v355, -1e+30
    %v808 = vsel %vm600, %v351, -1e+30
    %v809 = vsel %vm601, %v347, -1e+30
    %v810 = vsel %vm602, %v343, -1e+30
    %v811 = vsel %vm603, %v339, -1e+30
    %v812 = vsel %vm604, %v335, -1e+30
    %v813 = vsel %vm605, %v363, -1e+30
    %v814 = vmax.f32 %v750, %v782
    %v815 = vmax.f32 %v751, %v783
    %v816 = vmax.f32 %v752, %v784
    %v817 = vmax.f32 %v753, %v785
    %v818 = vmax.f32 %v754, %v786
    %v819 = vmax.f32 %v755, %v787
    %v820 = vmax.f32 %v756, %v788
    %v821 = vmax.f32 %v757, %v789
    %v822 = vmax.f32 %v758, %v790
    %v823 = vmax.f32 %v759, %v791
    %v824 = vmax.f32 %v760, %v792
    %v825 = vmax.f32 %v761, %v793
    %v826 = vmax.f32 %v762, %v794
    %v827 = vmax.f32 %v763, %v795
    %v828 = vmax.f32 %v764, %v796
    %v829 = vmax.f32 %v765, %v797
    %v830 = vmax.f32 %v766, %v798
    %v831 = vmax.f32 %v767, %v799
    %v832 = vmax.f32 %v768, %v800
    %v833 = vmax.f32 %v769, %v801
    %v834 = vmax.f32 %v770, %v802
    %v835 = vmax.f32 %v771, %v803
    %v836 = vmax.f32 %v772, %v804
    %v837 = vmax.f32 %v773, %v805
    %v838 = vmax.f32 %v774, %v806
    %v839 = vmax.f32 %v775, %v807
    %v840 = vmax.f32 %v776, %v808
    %v841 = vmax.f32 %v777, %v809
    %v842 = vmax.f32 %v778, %v810
    %v843 = vmax.f32 %v779, %v811
    %v844 = vmax.f32 %v780, %v812
    %v845 = vmax.f32 %v781, %v813
    %v846 = vld [vmem:[%s1] sm:$0xff]
    %v847 = vld [vmem:[%s1 + $0x8] sm:$0xff]
    %v848 = vld [vmem:[%s1 + $0x10] sm:$0xff]
    %v849 = vld [vmem:[%s1 + $0x18] sm:$0xff]
    %v850 = vld [vmem:[%s1 + $0x20] sm:$0xff]
    %v851 = vld [vmem:[%s1 + $0x28] sm:$0xff]
    %v852 = vld [vmem:[%s1 + $0x30] sm:$0xff]
    %v853 = vld [vmem:[%s1 + $0x38] sm:$0xff]
    %v854 = vld [vmem:[%s1 + $0x40] sm:$0xff]
    %v855 = vld [vmem:[%s1 + $0x48] sm:$0xff]
    %v856 = vld [vmem:[%s1 + $0x50] sm:$0xff]
    %v857 = vld [vmem:[%s1 + $0x58] sm:$0xff]
    %v858 = vld [vmem:[%s1 + $0x60] sm:$0xff]
    %v859 = vld [vmem:[%s1 + $0x68] sm:$0xff]
    %v860 = vld [vmem:[%s1 + $0x70] sm:$0xff]
    %v861 = vld [vmem:[%s1 + $0x78] sm:$0xff]
    %v862 = vld [vmem:[%s1 + $0x80] sm:$0xff]
    %v863 = vld [vmem:[%s1 + $0x88] sm:$0xff]
    %v864 = vld [vmem:[%s1 + $0x90] sm:$0xff]
    %v865 = vld [vmem:[%s1 + $0x98] sm:$0xff]
    %v866 = vld [vmem:[%s1 + $0xa0] sm:$0xff]
    %v867 = vld [vmem:[%s1 + $0xa8] sm:$0xff]
    %v868 = vld [vmem:[%s1 + $0xb0] sm:$0xff]
    %v869 = vld [vmem:[%s1 + $0xb8] sm:$0xff]
    %v870 = vld [vmem:[%s1 + $0xc0] sm:$0xff]
    %v871 = vld [vmem:[%s1 + $0xc8] sm:$0xff]
    %v872 = vld [vmem:[%s1 + $0xd0] sm:$0xff]
    %v873 = vld [vmem:[%s1 + $0xd8] sm:$0xff]
    %v874 = vld [vmem:[%s1 + $0xe0] sm:$0xff]
    %v875 = vld [vmem:[%s1 + $0xe8] sm:$0xff]
    %v876 = vld [vmem:[%s1 + $0xf0] sm:$0xff]
    %v877 = vld [vmem:[%s1 + $0xf8] sm:$0xff]
    %v878 = vld [vmem:[%s2] sm:$0xff]
    %v879 = vld [vmem:[%s2 + $0x8] sm:$0xff]
    %v880 = vld [vmem:[%s2 + $0x10] sm:$0xff]
    %v881 = vld [vmem:[%s2 + $0x18] sm:$0xff]
    %v882 = vld [vmem:[%s2 + $0x20] sm:$0xff]
    %v883 = vld [vmem:[%s2 + $0x28] sm:$0xff]
    %v884 = vld [vmem:[%s2 + $0x30] sm:$0xff]
    %v885 = vld [vmem:[%s2 + $0x38] sm:$0xff]
    %v886 = vld [vmem:[%s2 + $0x40] sm:$0xff]
    %v887 = vld [vmem:[%s2 + $0x48] sm:$0xff]
    %v888 = vld [vmem:[%s2 + $0x50] sm:$0xff]
    %v889 = vld [vmem:[%s2 + $0x58] sm:$0xff]
    %v890 = vld [vmem:[%s2 + $0x60] sm:$0xff]
    %v891 = vld [vmem:[%s2 + $0x68] sm:$0xff]
    %v892 = vld [vmem:[%s2 + $0x70] sm:$0xff]
    %v893 = vld [vmem:[%s2 + $0x78] sm:$0xff]
    %895 = vset.pattern.permute.xlu0 0
    %896 = vperm.xlu0 %895, %v878
    %v897 = vpop.permute.xlu0 %896
    %900 = vset.pattern.permute.xlu0 0
    %901 = vperm.xlu0 %900, %v879
    %v902 = vpop.permute.xlu0 %901
    %905 = vset.pattern.permute.xlu0 0
    %906 = vperm.xlu0 %905, %v880
    %v907 = vpop.permute.xlu0 %906
    %910 = vset.pattern.permute.xlu0 0
    %911 = vperm.xlu0 %910, %v881
    %v912 = vpop.permute.xlu0 %911
    %915 = vset.pattern.permute.xlu0 0
    %916 = vperm.xlu0 %915, %v882
    %v917 = vpop.permute.xlu0 %916
    %920 = vset.pattern.permute.xlu0 0
    %921 = vperm.xlu0 %920, %v883
    %v922 = vpop.permute.xlu0 %921
    %925 = vset.pattern.permute.xlu0 0
    %926 = vperm.xlu0 %925, %v884
    %v927 = vpop.permute.xlu0 %926
    %930 = vset.pattern.permute.xlu0 0
    %931 = vperm.xlu0 %930, %v885
    %v932 = vpop.permute.xlu0 %931
    %935 = vset.pattern.permute.xlu0 0
    %936 = vperm.xlu0 %935, %v886
    %v937 = vpop.permute.xlu0 %936
    %940 = vset.pattern.permute.xlu0 0
    %941 = vperm.xlu0 %940, %v887
    %v942 = vpop.permute.xlu0 %941
    %945 = vset.pattern.permute.xlu0 0
    %946 = vperm.xlu0 %945, %v888
    %v947 = vpop.permute.xlu0 %946
    %950 = vset.pattern.permute.xlu0 0
    %951 = vperm.xlu0 %950, %v889
    %v952 = vpop.permute.xlu0 %951
    %955 = vset.pattern.permute.xlu0 0
    %956 = vperm.xlu0 %955, %v890
    %v957 = vpop.permute.xlu0 %956
    %960 = vset.pattern.permute.xlu0 0
    %961 = vperm.xlu0 %960, %v891
    %v962 = vpop.permute.xlu0 %961
    %965 = vset.pattern.permute.xlu0 0
    %966 = vperm.xlu0 %965, %v892
    %v967 = vpop.permute.xlu0 %966
    %970 = vset.pattern.permute.xlu0 0
    %971 = vperm.xlu0 %970, %v893
    %v972 = vpop.permute.xlu0 %971
    %vm974 = vcmask 523264
    %v976 = vsel %vm974, %v847, 0
    %v979 = vsel %vm974, %v849, 0
    %v982 = vsel %vm974, %v851, 0
    %v985 = vsel %vm974, %v853, 0
    %v988 = vsel %vm974, %v855, 0
    %v991 = vsel %vm974, %v857, 0
    %v994 = vsel %vm974, %v859, 0
    %v997 = vsel %vm974, %v861, 0
    %v1000 = vsel %vm974, %v863, 0
    %v1003 = vsel %vm974, %v865, 0
    %v1006 = vsel %vm974, %v867, 0
    %v1009 = vsel %vm974, %v869, 0
    %v1012 = vsel %vm974, %v871, 0
    %v1015 = vsel %vm974, %v873, 0
    %v1018 = vsel %vm974, %v875, 0
    %v1021 = vsel %vm974, %v877, 0
    %1023 = vmatprep.subr.mxu0 %v671
    %1024 = vmatpush1.msra.mxu0 %v670
    %1025 = vmatprep.subr.mxu0 %v663
    %1026 = vmatpush1.msra.mxu0 %v662
    %1027 = vmatprep.subr.mxu0 %v655
    %1028 = vmatpush1.msra.mxu0 %v654
    %1029 = vmatprep.subr.mxu0 %v647
    %1030 = vmatpush1.msra.mxu0 %v646
    %1031 = vmatprep.subr.mxu0 %v631
    %1032 = vmatpush1.msra.mxu0 %v630
    %1033 = vmatprep.subr.mxu0 %v623
    %1034 = vmatpush1.msra.mxu0 %v622
    %1035 = vmatprep.subr.mxu0 %v615
    %1036 = vmatpush1.msra.mxu0 %v614
    %1037 = vmatprep.subr.mxu0 %v607
    %1038 = vmatpush1.msra.mxu0 %v606
    %1039 = vmatprep.subr.mxu0 %v591
    %1040 = vmatpush1.msra.mxu0 %v590
    %1041 = vmatprep.subr.mxu0 %v583
    %1042 = vmatpush1.msra.mxu0 %v582
    %1043 = vmatprep.subr.mxu0 %v575
    %1044 = vmatpush1.msra.mxu0 %v574
    %1045 = vmatprep.subr.mxu0 %v567
    %1046 = vmatpush1.msra.mxu0 %v566
    %1047 = vmatprep.subr.mxu0 %v58
    %1048 = vmatpush1.msra.mxu0 %v57
    %1049 = vmatprep.subr.mxu0 %v50
    %1050 = vmatpush1.msra.mxu0 %v49
    %1051 = vmatprep.subr.mxu0 %v42
    %1052 = vmatpush1.msra.mxu0 %v41
    %1053 = vmatprep.subr.mxu0 %v34
    %1054 = vmatpush1.msra.mxu0 %v33
    %1055 = vmatprep.subr.mxu0 0.0
    %1056 = vmatpush2.msra.mxu0 0.0
    %1057 = vmatprep.subr.mxu0 0.0
    %1058 = vmatpush2.msra.mxu0 0.0
    %1059 = vmatprep.subr.mxu0 0.0
    %1060 = vmatpush2.msra.mxu0 0.0
    %1061 = vmatprep.subr.mxu0 0.0
    %1062 = vmatpush2.msra.mxu0 0.0
    %1063 = vmatprep.subr.mxu0 0.0
    %1064 = vmatpush2.msra.mxu0 0.0
    %1065 = vmatprep.subr.mxu0 0.0
    %1066 = vmatpush2.msra.mxu0 0.0
    %1067 = vmatprep.subr.mxu0 0.0
    %1068 = vmatpush2.msra.mxu0 0.0
    %1069 = vmatprep.subr.mxu0 0.0
    %1070 = vmatpush2.msra.mxu0 0.0
    %1071 = vmatprep.subr.mxu0 %v839
    %1072 = vmatpush2.msra.mxu0 %v838
    %1073 = vmatprep.subr.mxu0 %v831
    %1074 = vmatpush2.msra.mxu0 %v830
    %1075 = vmatprep.subr.mxu0 %v823
    %1076 = vmatpush2.msra.mxu0 %v822
    %1077 = vmatprep.subr.mxu0 %v815
    %1078 = vmatpush2.msra.mxu0 %v814
    %1079 = vmatprep.subr.mxu0 %v711
    %1080 = vmatpush2.msra.mxu0 %v710
    %1081 = vmatprep.subr.mxu0 %v703
    %1082 = vmatpush2.msra.mxu0 %v702
    %1083 = vmatprep.subr.mxu0 %v695
    %1084 = vmatpush2.msra.mxu0 %v694
    %1085 = vmatprep.subr.mxu0 %v687
    %1086 = vmatpush2.msra.mxu0 %v686
    %1087 = vmatprep.mubr.f32.mxu0 %v976
    %1088 = vmatmul.mubr.f32.gmra.mxu0 %v846
    %v1089 = vpop.f32.mrf.mxu0
    %v1090 = vadd.f32 %v897, %v1089
    %v1091 = vpop.f32.mrf.mxu0
    %v1092 = vadd.f32 %v897, %v1091
    %1093 = vmatprep.mubr.f32.mxu0 %v979
    %1094 = vmatmul.mubr.f32.gmra.mxu0 %v848
    %v1095 = vpop.f32.mrf.mxu0
    %v1096 = vadd.f32 %v902, %v1095
    %v1097 = vpop.f32.mrf.mxu0
    %v1098 = vadd.f32 %v902, %v1097
    %1099 = vmatprep.mubr.f32.mxu0 %v982
    %1100 = vmatmul.mubr.f32.gmra.mxu0 %v850
    %v1101 = vpop.f32.mrf.mxu0
    %v1102 = vadd.f32 %v907, %v1101
    %v1103 = vpop.f32.mrf.mxu0
    %v1104 = vadd.f32 %v907, %v1103
    %1105 = vmatprep.mubr.f32.mxu0 %v985
    %1106 = vmatmul.mubr.f32.gmra.mxu0 %v852
    %v1107 = vpop.f32.mrf.mxu0
    %v1108 = vadd.f32 %v912, %v1107
    %v1109 = vpop.f32.mrf.mxu0
    %v1110 = vadd.f32 %v912, %v1109
    %1111 = vmatprep.mubr.f32.mxu0 %v988
    %1112 = vmatmul.mubr.f32.gmra.mxu0 %v854
    %v1113 = vpop.f32.mrf.mxu0
    %v1114 = vadd.f32 %v917, %v1113
    %v1115 = vpop.f32.mrf.mxu0
    %v1116 = vadd.f32 %v917, %v1115
    %1117 = vmatprep.mubr.f32.mxu0 %v991
    %1118 = vmatmul.mubr.f32.gmra.mxu0 %v856
    %v1119 = vpop.f32.mrf.mxu0
    %v1120 = vadd.f32 %v922, %v1119
    %v1121 = vpop.f32.mrf.mxu0
    %v1122 = vadd.f32 %v922, %v1121
    %1123 = vmatprep.mubr.f32.mxu0 %v994
    %1124 = vmatmul.mubr.f32.gmra.mxu0 %v858
    %v1125 = vpop.f32.mrf.mxu0
    %v1126 = vadd.f32 %v927, %v1125
    %v1127 = vpop.f32.mrf.mxu0
    %v1128 = vadd.f32 %v927, %v1127
    %1129 = vmatprep.mubr.f32.mxu0 %v997
    %1130 = vmatmul.mubr.f32.gmra.mxu0 %v860
    %v1131 = vpop.f32.mrf.mxu0
    %v1132 = vadd.f32 %v932, %v1131
    %v1133 = vpop.f32.mrf.mxu0
    %v1134 = vadd.f32 %v932, %v1133
    %1135 = vmatprep.mubr.f32.mxu0 %v1000
    %1136 = vmatmul.mubr.f32.gmra.mxu0 %v862
    %v1137 = vpop.f32.mrf.mxu0
    %v1138 = vadd.f32 %v937, %v1137
    %v1139 = vpop.f32.mrf.mxu0
    %v1140 = vadd.f32 %v937, %v1139
    %1141 = vmatprep.mubr.f32.mxu0 %v1003
    %1142 = vmatmul.mubr.f32.gmra.mxu0 %v864
    %v1143 = vpop.f32.mrf.mxu0
    %v1144 = vadd.f32 %v942, %v1143
    %v1145 = vpop.f32.mrf.mxu0
    %v1146 = vadd.f32 %v942, %v1145
    %1147 = vmatprep.mubr.f32.mxu0 %v1006
    %1148 = vmatmul.mubr.f32.gmra.mxu0 %v866
    %v1149 = vpop.f32.mrf.mxu0
    %v1150 = vadd.f32 %v947, %v1149
    %v1151 = vpop.f32.mrf.mxu0
    %v1152 = vadd.f32 %v947, %v1151
    %1153 = vmatprep.mubr.f32.mxu0 %v1009
    %1154 = vmatmul.mubr.f32.gmra.mxu0 %v868
    %v1155 = vpop.f32.mrf.mxu0
    %v1156 = vadd.f32 %v952, %v1155
    %v1157 = vpop.f32.mrf.mxu0
    %v1158 = vadd.f32 %v952, %v1157
    %1159 = vmatprep.mubr.f32.mxu0 %v1012
    %1160 = vmatmul.mubr.f32.gmra.mxu0 %v870
    %v1161 = vpop.f32.mrf.mxu0
    %v1162 = vadd.f32 %v957, %v1161
    %v1163 = vpop.f32.mrf.mxu0
    %v1164 = vadd.f32 %v957, %v1163
    %1165 = vmatprep.mubr.f32.mxu0 %v1015
    %1166 = vmatmul.mubr.f32.gmra.mxu0 %v872
    %v1167 = vpop.f32.mrf.mxu0
    %v1168 = vadd.f32 %v962, %v1167
    %v1169 = vpop.f32.mrf.mxu0
    %v1170 = vadd.f32 %v962, %v1169
    %1171 = vmatprep.mubr.f32.mxu0 %v1018
    %1172 = vmatmul.mubr.f32.gmra.mxu0 %v874
    %v1173 = vpop.f32.mrf.mxu0
    %v1174 = vadd.f32 %v967, %v1173
    %v1175 = vpop.f32.mrf.mxu0
    %v1176 = vadd.f32 %v967, %v1175
    %1177 = vmatprep.mubr.f32.mxu0 %v1021
    %1178 = vmatmul.mubr.f32.gmra.mxu0 %v876
    %v1179 = vpop.f32.mrf.mxu0
    %v1180 = vadd.f32 %v972, %v1179
    %v1181 = vpop.f32.mrf.mxu0
    %v1182 = vadd.f32 %v972, %v1181
    %1183 = vdwg.mxu0
    %1184 = vmatprep.subr.mxu0 %v673
    %1185 = vmatpush1.msra.mxu0 %v672
    %1186 = vmatprep.subr.mxu0 %v665
    %1187 = vmatpush1.msra.mxu0 %v664
    %1188 = vmatprep.subr.mxu0 %v657
    %1189 = vmatpush1.msra.mxu0 %v656
    %1190 = vmatprep.subr.mxu0 %v649
    %1191 = vmatpush1.msra.mxu0 %v648
    %1192 = vmatprep.subr.mxu0 %v633
    %1193 = vmatpush1.msra.mxu0 %v632
    %1194 = vmatprep.subr.mxu0 %v625
    %1195 = vmatpush1.msra.mxu0 %v624
    %1196 = vmatprep.subr.mxu0 %v617
    %1197 = vmatpush1.msra.mxu0 %v616
    %1198 = vmatprep.subr.mxu0 %v609
    %1199 = vmatpush1.msra.mxu0 %v608
    %1200 = vmatprep.subr.mxu0 %v593
    %1201 = vmatpush1.msra.mxu0 %v592
    %1202 = vmatprep.subr.mxu0 %v585
    %1203 = vmatpush1.msra.mxu0 %v584
    %1204 = vmatprep.subr.mxu0 %v577
    %1205 = vmatpush1.msra.mxu0 %v576
    %1206 = vmatprep.subr.mxu0 %v569
    %1207 = vmatpush1.msra.mxu0 %v568
    %1208 = vmatprep.subr.mxu0 %v60
    %1209 = vmatpush1.msra.mxu0 %v59
    %1210 = vmatprep.subr.mxu0 %v52
    %1211 = vmatpush1.msra.mxu0 %v51
    %1212 = vmatprep.subr.mxu0 %v44
    %1213 = vmatpush1.msra.mxu0 %v43
    %1214 = vmatprep.subr.mxu0 %v36
    %1215 = vmatpush1.msra.mxu0 %v35
    %1216 = vmatprep.subr.mxu0 0.0
    %1217 = vmatpush2.msra.mxu0 0.0
    %1218 = vmatprep.subr.mxu0 0.0
    %1219 = vmatpush2.msra.mxu0 0.0
    %1220 = vmatprep.subr.mxu0 0.0
    %1221 = vmatpush2.msra.mxu0 0.0
    %1222 = vmatprep.subr.mxu0 0.0
    %1223 = vmatpush2.msra.mxu0 0.0
    %1224 = vmatprep.subr.mxu0 0.0
    %1225 = vmatpush2.msra.mxu0 0.0
    %1226 = vmatprep.subr.mxu0 0.0
    %1227 = vmatpush2.msra.mxu0 0.0
    %1228 = vmatprep.subr.mxu0 0.0
    %1229 = vmatpush2.msra.mxu0 0.0
    %1230 = vmatprep.subr.mxu0 0.0
    %1231 = vmatpush2.msra.mxu0 0.0
    %1232 = vmatprep.subr.mxu0 %v841
    %1233 = vmatpush2.msra.mxu0 %v840
    %1234 = vmatprep.subr.mxu0 %v833
    %1235 = vmatpush2.msra.mxu0 %v832
    %1236 = vmatprep.subr.mxu0 %v825
    %1237 = vmatpush2.msra.mxu0 %v824
    %1238 = vmatprep.subr.mxu0 %v817
    %1239 = vmatpush2.msra.mxu0 %v816
    %1240 = vmatprep.subr.mxu0 %v713
    %1241 = vmatpush2.msra.mxu0 %v712
    %1242 = vmatprep.subr.mxu0 %v705
    %1243 = vmatpush2.msra.mxu0 %v704
    %1244 = vmatprep.subr.mxu0 %v697
    %1245 = vmatpush2.msra.mxu0 %v696
    %1246 = vmatprep.subr.mxu0 %v689
    %1247 = vmatpush2.msra.mxu0 %v688
    %1248 = vmatprep.mubr.f32.mxu0 %v976
    %1249 = vmatmul.mubr.f32.gmra.mxu0 %v846
    %v1250 = vpop.f32.mrf.mxu0
    %v1251 = vadd.f32 %v897, %v1250
    %v1252 = vpop.f32.mrf.mxu0
    %v1253 = vadd.f32 %v897, %v1252
    %1254 = vmatprep.mubr.f32.mxu0 %v979
    %1255 = vmatmul.mubr.f32.gmra.mxu0 %v848
    %v1256 = vpop.f32.mrf.mxu0
    %v1257 = vadd.f32 %v902, %v1256
    %v1258 = vpop.f32.mrf.mxu0
    %v1259 = vadd.f32 %v902, %v1258
    %1260 = vmatprep.mubr.f32.mxu0 %v982
    %1261 = vmatmul.mubr.f32.gmra.mxu0 %v850
    %v1262 = vpop.f32.mrf.mxu0
    %v1263 = vadd.f32 %v907, %v1262
    %v1264 = vpop.f32.mrf.mxu0
    %v1265 = vadd.f32 %v907, %v1264
    %1266 = vmatprep.mubr.f32.mxu0 %v985
    %1267 = vmatmul.mubr.f32.gmra.mxu0 %v852
    %v1268 = vpop.f32.mrf.mxu0
    %v1269 = vadd.f32 %v912, %v1268
    %v1270 = vpop.f32.mrf.mxu0
    %v1271 = vadd.f32 %v912, %v1270
    %1272 = vmatprep.mubr.f32.mxu0 %v988
    %1273 = vmatmul.mubr.f32.gmra.mxu0 %v854
    %v1274 = vpop.f32.mrf.mxu0
    %v1275 = vadd.f32 %v917, %v1274
    %v1276 = vpop.f32.mrf.mxu0
    %v1277 = vadd.f32 %v917, %v1276
    %1278 = vmatprep.mubr.f32.mxu0 %v991
    %1279 = vmatmul.mubr.f32.gmra.mxu0 %v856
    %v1280 = vpop.f32.mrf.mxu0
    %v1281 = vadd.f32 %v922, %v1280
    %v1282 = vpop.f32.mrf.mxu0
    %v1283 = vadd.f32 %v922, %v1282
    %1284 = vmatprep.mubr.f32.mxu0 %v994
    %1285 = vmatmul.mubr.f32.gmra.mxu0 %v858
    %v1286 = vpop.f32.mrf.mxu0
    %v1287 = vadd.f32 %v927, %v1286
    %v1288 = vpop.f32.mrf.mxu0
    %v1289 = vadd.f32 %v927, %v1288
    %1290 = vmatprep.mubr.f32.mxu0 %v997
    %1291 = vmatmul.mubr.f32.gmra.mxu0 %v860
    %v1292 = vpop.f32.mrf.mxu0
    %v1293 = vadd.f32 %v932, %v1292
    %v1294 = vpop.f32.mrf.mxu0
    %v1295 = vadd.f32 %v932, %v1294
    %1296 = vmatprep.mubr.f32.mxu0 %v1000
    %1297 = vmatmul.mubr.f32.gmra.mxu0 %v862
    %v1298 = vpop.f32.mrf.mxu0
    %v1299 = vadd.f32 %v937, %v1298
    %v1300 = vpop.f32.mrf.mxu0
    %v1301 = vadd.f32 %v937, %v1300
    %1302 = vmatprep.mubr.f32.mxu0 %v1003
    %1303 = vmatmul.mubr.f32.gmra.mxu0 %v864
    %v1304 = vpop.f32.mrf.mxu0
    %v1305 = vadd.f32 %v942, %v1304
    %v1306 = vpop.f32.mrf.mxu0
    %v1307 = vadd.f32 %v942, %v1306
    %1308 = vmatprep.mubr.f32.mxu0 %v1006
    %1309 = vmatmul.mubr.f32.gmra.mxu0 %v866
    %v1310 = vpop.f32.mrf.mxu0
    %v1311 = vadd.f32 %v947, %v1310
    %v1312 = vpop.f32.mrf.mxu0
    %v1313 = vadd.f32 %v947, %v1312
    %1314 = vmatprep.mubr.f32.mxu0 %v1009
    %1315 = vmatmul.mubr.f32.gmra.mxu0 %v868
    %v1316 = vpop.f32.mrf.mxu0
    %v1317 = vadd.f32 %v952, %v1316
    %v1318 = vpop.f32.mrf.mxu0
    %v1319 = vadd.f32 %v952, %v1318
    %1320 = vmatprep.mubr.f32.mxu0 %v1012
    %1321 = vmatmul.mubr.f32.gmra.mxu0 %v870
    %v1322 = vpop.f32.mrf.mxu0
    %v1323 = vadd.f32 %v957, %v1322
    %v1324 = vpop.f32.mrf.mxu0
    %v1325 = vadd.f32 %v957, %v1324
    %1326 = vmatprep.mubr.f32.mxu0 %v1015
    %1327 = vmatmul.mubr.f32.gmra.mxu0 %v872
    %v1328 = vpop.f32.mrf.mxu0
    %v1329 = vadd.f32 %v962, %v1328
    %v1330 = vpop.f32.mrf.mxu0
    %v1331 = vadd.f32 %v962, %v1330
    %1332 = vmatprep.mubr.f32.mxu0 %v1018
    %1333 = vmatmul.mubr.f32.gmra.mxu0 %v874
    %v1334 = vpop.f32.mrf.mxu0
    %v1335 = vadd.f32 %v967, %v1334
    %v1336 = vpop.f32.mrf.mxu0
    %v1337 = vadd.f32 %v967, %v1336
    %1338 = vmatprep.mubr.f32.mxu0 %v1021
    %1339 = vmatmul.mubr.f32.gmra.mxu0 %v876
    %v1340 = vpop.f32.mrf.mxu0
    %v1341 = vadd.f32 %v972, %v1340
    %v1342 = vpop.f32.mrf.mxu0
    %v1343 = vadd.f32 %v972, %v1342
    %1344 = vdwg.mxu0
    %1345 = vmatprep.subr.mxu0 %v675
    %1346 = vmatpush1.msra.mxu0 %v674
    %1347 = vmatprep.subr.mxu0 %v667
    %1348 = vmatpush1.msra.mxu0 %v666
    %1349 = vmatprep.subr.mxu0 %v659
    %1350 = vmatpush1.msra.mxu0 %v658
    %1351 = vmatprep.subr.mxu0 %v651
    %1352 = vmatpush1.msra.mxu0 %v650
    %1353 = vmatprep.subr.mxu0 %v635
    %1354 = vmatpush1.msra.mxu0 %v634
    %1355 = vmatprep.subr.mxu0 %v627
    %1356 = vmatpush1.msra.mxu0 %v626
    %1357 = vmatprep.subr.mxu0 %v619
    %1358 = vmatpush1.msra.mxu0 %v618
    %1359 = vmatprep.subr.mxu0 %v611
    %1360 = vmatpush1.msra.mxu0 %v610
    %1361 = vmatprep.subr.mxu0 %v595
    %1362 = vmatpush1.msra.mxu0 %v594
    %1363 = vmatprep.subr.mxu0 %v587
    %1364 = vmatpush1.msra.mxu0 %v586
    %1365 = vmatprep.subr.mxu0 %v579
    %1366 = vmatpush1.msra.mxu0 %v578
    %1367 = vmatprep.subr.mxu0 %v571
    %1368 = vmatpush1.msra.mxu0 %v570
    %1369 = vmatprep.subr.mxu0 %v62
    %1370 = vmatpush1.msra.mxu0 %v61
    %1371 = vmatprep.subr.mxu0 %v54
    %1372 = vmatpush1.msra.mxu0 %v53
    %1373 = vmatprep.subr.mxu0 %v46
    %1374 = vmatpush1.msra.mxu0 %v45
    %1375 = vmatprep.subr.mxu0 %v38
    %1376 = vmatpush1.msra.mxu0 %v37
    %1377 = vmatprep.subr.mxu0 0.0
    %1378 = vmatpush2.msra.mxu0 0.0
    %1379 = vmatprep.subr.mxu0 0.0
    %1380 = vmatpush2.msra.mxu0 0.0
    %1381 = vmatprep.subr.mxu0 0.0
    %1382 = vmatpush2.msra.mxu0 0.0
    %1383 = vmatprep.subr.mxu0 0.0
    %1384 = vmatpush2.msra.mxu0 0.0
    %1385 = vmatprep.subr.mxu0 0.0
    %1386 = vmatpush2.msra.mxu0 0.0
    %1387 = vmatprep.subr.mxu0 0.0
    %1388 = vmatpush2.msra.mxu0 0.0
    %1389 = vmatprep.subr.mxu0 0.0
    %1390 = vmatpush2.msra.mxu0 0.0
    %1391 = vmatprep.subr.mxu0 0.0
    %1392 = vmatpush2.msra.mxu0 0.0
    %1393 = vmatprep.subr.mxu0 %v843
    %1394 = vmatpush2.msra.mxu0 %v842
    %1395 = vmatprep.subr.mxu0 %v835
    %1396 = vmatpush2.msra.mxu0 %v834
    %1397 = vmatprep.subr.mxu0 %v827
    %1398 = vmatpush2.msra.mxu0 %v826
    %1399 = vmatprep.subr.mxu0 %v819
    %1400 = vmatpush2.msra.mxu0 %v818
    %1401 = vmatprep.subr.mxu0 %v715
    %1402 = vmatpush2.msra.mxu0 %v714
    %1403 = vmatprep.subr.mxu0 %v707
    %1404 = vmatpush2.msra.mxu0 %v706
    %1405 = vmatprep.subr.mxu0 %v699
    %1406 = vmatpush2.msra.mxu0 %v698
    %1407 = vmatprep.subr.mxu0 %v691
    %1408 = vmatpush2.msra.mxu0 %v690
    %1409 = vmatprep.mubr.f32.mxu0 %v976
    %1410 = vmatmul.mubr.f32.gmra.mxu0 %v846
    %v1411 = vpop.f32.mrf.mxu0
    %v1412 = vadd.f32 %v897, %v1411
    %v1413 = vpop.f32.mrf.mxu0
    %v1414 = vadd.f32 %v897, %v1413
    %1415 = vmatprep.mubr.f32.mxu0 %v979
    %1416 = vmatmul.mubr.f32.gmra.mxu0 %v848
    %v1417 = vpop.f32.mrf.mxu0
    %v1418 = vadd.f32 %v902, %v1417
    %v1419 = vpop.f32.mrf.mxu0
    %v1420 = vadd.f32 %v902, %v1419
    %1421 = vmatprep.mubr.f32.mxu0 %v982
    %1422 = vmatmul.mubr.f32.gmra.mxu0 %v850
    %v1423 = vpop.f32.mrf.mxu0
    %v1424 = vadd.f32 %v907, %v1423
    %v1425 = vpop.f32.mrf.mxu0
    %v1426 = vadd.f32 %v907, %v1425
    %1427 = vmatprep.mubr.f32.mxu0 %v985
    %1428 = vmatmul.mubr.f32.gmra.mxu0 %v852
    %v1429 = vpop.f32.mrf.mxu0
    %v1430 = vadd.f32 %v912, %v1429
    %v1431 = vpop.f32.mrf.mxu0
    %v1432 = vadd.f32 %v912, %v1431
    %1433 = vmatprep.mubr.f32.mxu0 %v988
    %1434 = vmatmul.mubr.f32.gmra.mxu0 %v854
    %v1435 = vpop.f32.mrf.mxu0
    %v1436 = vadd.f32 %v917, %v1435
    %v1437 = vpop.f32.mrf.mxu0
    %v1438 = vadd.f32 %v917, %v1437
    %1439 = vmatprep.mubr.f32.mxu0 %v991
    %1440 = vmatmul.mubr.f32.gmra.mxu0 %v856
    %v1441 = vpop.f32.mrf.mxu0
    %v1442 = vadd.f32 %v922, %v1441
    %v1443 = vpop.f32.mrf.mxu0
    %v1444 = vadd.f32 %v922, %v1443
    %1445 = vmatprep.mubr.f32.mxu0 %v994
    %1446 = vmatmul.mubr.f32.gmra.mxu0 %v858
    %v1447 = vpop.f32.mrf.mxu0
    %v1448 = vadd.f32 %v927, %v1447
    %v1449 = vpop.f32.mrf.mxu0
    %v1450 = vadd.f32 %v927, %v1449
    %1451 = vmatprep.mubr.f32.mxu0 %v997
    %1452 = vmatmul.mubr.f32.gmra.mxu0 %v860
    %v1453 = vpop.f32.mrf.mxu0
    %v1454 = vadd.f32 %v932, %v1453
    %v1455 = vpop.f32.mrf.mxu0
    %v1456 = vadd.f32 %v932, %v1455
    %1457 = vmatprep.mubr.f32.mxu0 %v1000
    %1458 = vmatmul.mubr.f32.gmra.mxu0 %v862
    %v1459 = vpop.f32.mrf.mxu0
    %v1460 = vadd.f32 %v937, %v1459
    %v1461 = vpop.f32.mrf.mxu0
    %v1462 = vadd.f32 %v937, %v1461
    %1463 = vmatprep.mubr.f32.mxu0 %v1003
    %1464 = vmatmul.mubr.f32.gmra.mxu0 %v864
    %v1465 = vpop.f32.mrf.mxu0
    %v1466 = vadd.f32 %v942, %v1465
    %v1467 = vpop.f32.mrf.mxu0
    %v1468 = vadd.f32 %v942, %v1467
    %1469 = vmatprep.mubr.f32.mxu0 %v1006
    %1470 = vmatmul.mubr.f32.gmra.mxu0 %v866
    %v1471 = vpop.f32.mrf.mxu0
    %v1472 = vadd.f32 %v947, %v1471
    %v1473 = vpop.f32.mrf.mxu0
    %v1474 = vadd.f32 %v947, %v1473
    %1475 = vmatprep.mubr.f32.mxu0 %v1009
    %1476 = vmatmul.mubr.f32.gmra.mxu0 %v868
    %v1477 = vpop.f32.mrf.mxu0
    %v1478 = vadd.f32 %v952, %v1477
    %v1479 = vpop.f32.mrf.mxu0
    %v1480 = vadd.f32 %v952, %v1479
    %1481 = vmatprep.mubr.f32.mxu0 %v1012
    %1482 = vmatmul.mubr.f32.gmra.mxu0 %v870
    %v1483 = vpop.f32.mrf.mxu0
    %v1484 = vadd.f32 %v957, %v1483
    %v1485 = vpop.f32.mrf.mxu0
    %v1486 = vadd.f32 %v957, %v1485
    %1487 = vmatprep.mubr.f32.mxu0 %v1015
    %1488 = vmatmul.mubr.f32.gmra.mxu0 %v872
    %v1489 = vpop.f32.mrf.mxu0
    %v1490 = vadd.f32 %v962, %v1489
    %v1491 = vpop.f32.mrf.mxu0
    %v1492 = vadd.f32 %v962, %v1491
    %1493 = vmatprep.mubr.f32.mxu0 %v1018
    %1494 = vmatmul.mubr.f32.gmra.mxu0 %v874
    %v1495 = vpop.f32.mrf.mxu0
    %v1496 = vadd.f32 %v967, %v1495
    %v1497 = vpop.f32.mrf.mxu0
    %v1498 = vadd.f32 %v967, %v1497
    %1499 = vmatprep.mubr.f32.mxu0 %v1021
    %1500 = vmatmul.mubr.f32.gmra.mxu0 %v876
    %v1501 = vpop.f32.mrf.mxu0
    %v1502 = vadd.f32 %v972, %v1501
    %v1503 = vpop.f32.mrf.mxu0
    %v1504 = vadd.f32 %v972, %v1503
    %1505 = vdwg.mxu0
    %1506 = vmatprep.subr.mxu0 %v677
    %1507 = vmatpush1.msra.mxu0 %v676
    %1508 = vmatprep.subr.mxu0 %v669
    %1509 = vmatpush1.msra.mxu0 %v668
    %1510 = vmatprep.subr.mxu0 %v661
    %1511 = vmatpush1.msra.mxu0 %v660
    %1512 = vmatprep.subr.mxu0 %v653
    %1513 = vmatpush1.msra.mxu0 %v652
    %1514 = vmatprep.subr.mxu0 %v637
    %1515 = vmatpush1.msra.mxu0 %v636
    %1516 = vmatprep.subr.mxu0 %v629
    %1517 = vmatpush1.msra.mxu0 %v628
    %1518 = vmatprep.subr.mxu0 %v621
    %1519 = vmatpush1.msra.mxu0 %v620
    %1520 = vmatprep.subr.mxu0 %v613
    %1521 = vmatpush1.msra.mxu0 %v612
    %1522 = vmatprep.subr.mxu0 %v597
    %1523 = vmatpush1.msra.mxu0 %v596
    %1524 = vmatprep.subr.mxu0 %v589
    %1525 = vmatpush1.msra.mxu0 %v588
    %1526 = vmatprep.subr.mxu0 %v581
    %1527 = vmatpush1.msra.mxu0 %v580
    %1528 = vmatprep.subr.mxu0 %v573
    %1529 = vmatpush1.msra.mxu0 %v572
    %1530 = vmatprep.subr.mxu0 %v64
    %1531 = vmatpush1.msra.mxu0 %v63
    %1532 = vmatprep.subr.mxu0 %v56
    %1533 = vmatpush1.msra.mxu0 %v55
    %1534 = vmatprep.subr.mxu0 %v48
    %1535 = vmatpush1.msra.mxu0 %v47
    %1536 = vmatprep.subr.mxu0 %v40
    %1537 = vmatpush1.msra.mxu0 %v39
    %1538 = vmatprep.subr.mxu0 0.0
    %1539 = vmatpush2.msra.mxu0 0.0
    %1540 = vmatprep.subr.mxu0 0.0
    %1541 = vmatpush2.msra.mxu0 0.0
    %1542 = vmatprep.subr.mxu0 0.0
    %1543 = vmatpush2.msra.mxu0 0.0
    %1544 = vmatprep.subr.mxu0 0.0
    %1545 = vmatpush2.msra.mxu0 0.0
    %1546 = vmatprep.subr.mxu0 0.0
    %1547 = vmatpush2.msra.mxu0 0.0
    %1548 = vmatprep.subr.mxu0 0.0
    %1549 = vmatpush2.msra.mxu0 0.0
    %1550 = vmatprep.subr.mxu0 0.0
    %1551 = vmatpush2.msra.mxu0 0.0
    %1552 = vmatprep.subr.mxu0 0.0
    %1553 = vmatpush2.msra.mxu0 0.0
    %1554 = vmatprep.subr.mxu0 %v845
    %1555 = vmatpush2.msra.mxu0 %v844
    %1556 = vmatprep.subr.mxu0 %v837
    %1557 = vmatpush2.msra.mxu0 %v836
    %1558 = vmatprep.subr.mxu0 %v829
    %1559 = vmatpush2.msra.mxu0 %v828
    %1560 = vmatprep.subr.mxu0 %v821
    %1561 = vmatpush2.msra.mxu0 %v820
    %1562 = vmatprep.subr.mxu0 %v717
    %1563 = vmatpush2.msra.mxu0 %v716
    %1564 = vmatprep.subr.mxu0 %v709
    %1565 = vmatpush2.msra.mxu0 %v708
    %1566 = vmatprep.subr.mxu0 %v701
    %1567 = vmatpush2.msra.mxu0 %v700
    %1568 = vmatprep.subr.mxu0 %v693
    %1569 = vmatpush2.msra.mxu0 %v692
    %1570 = vmatprep.mubr.f32.mxu0 %v976
    %1571 = vmatmul.mubr.f32.gmra.mxu0 %v846
    %v1572 = vpop.f32.mrf.mxu0
    %v1573 = vadd.f32 %v897, %v1572
    %v1574 = vpop.f32.mrf.mxu0
    %v1575 = vadd.f32 %v897, %v1574
    %1576 = vmatprep.mubr.f32.mxu0 %v979
    %1577 = vmatmul.mubr.f32.gmra.mxu0 %v848
    %v1578 = vpop.f32.mrf.mxu0
    %v1579 = vadd.f32 %v902, %v1578
    %v1580 = vpop.f32.mrf.mxu0
    %v1581 = vadd.f32 %v902, %v1580
    %1582 = vmatprep.mubr.f32.mxu0 %v982
    %1583 = vmatmul.mubr.f32.gmra.mxu0 %v850
    %v1584 = vpop.f32.mrf.mxu0
    %v1585 = vadd.f32 %v907, %v1584
    %v1586 = vpop.f32.mrf.mxu0
    %v1587 = vadd.f32 %v907, %v1586
    %1588 = vmatprep.mubr.f32.mxu0 %v985
    %1589 = vmatmul.mubr.f32.gmra.mxu0 %v852
    %v1590 = vpop.f32.mrf.mxu0
    %v1591 = vadd.f32 %v912, %v1590
    %v1592 = vpop.f32.mrf.mxu0
    %v1593 = vadd.f32 %v912, %v1592
    %1594 = vmatprep.mubr.f32.mxu0 %v988
    %1595 = vmatmul.mubr.f32.gmra.mxu0 %v854
    %v1596 = vpop.f32.mrf.mxu0
    %v1597 = vadd.f32 %v917, %v1596
    %v1598 = vpop.f32.mrf.mxu0
    %v1599 = vadd.f32 %v917, %v1598
    %1600 = vmatprep.mubr.f32.mxu0 %v991
    %1601 = vmatmul.mubr.f32.gmra.mxu0 %v856
    %v1602 = vpop.f32.mrf.mxu0
    %v1603 = vadd.f32 %v922, %v1602
    %v1604 = vpop.f32.mrf.mxu0
    %v1605 = vadd.f32 %v922, %v1604
    %1606 = vmatprep.mubr.f32.mxu0 %v994
    %1607 = vmatmul.mubr.f32.gmra.mxu0 %v858
    %v1608 = vpop.f32.mrf.mxu0
    %v1609 = vadd.f32 %v927, %v1608
    %v1610 = vpop.f32.mrf.mxu0
    %v1611 = vadd.f32 %v927, %v1610
    %1612 = vmatprep.mubr.f32.mxu0 %v997
    %1613 = vmatmul.mubr.f32.gmra.mxu0 %v860
    %v1614 = vpop.f32.mrf.mxu0
    %v1615 = vadd.f32 %v932, %v1614
    %v1616 = vpop.f32.mrf.mxu0
    %v1617 = vadd.f32 %v932, %v1616
    %1618 = vmatprep.mubr.f32.mxu0 %v1000
    %1619 = vmatmul.mubr.f32.gmra.mxu0 %v862
    %v1620 = vpop.f32.mrf.mxu0
    %v1621 = vadd.f32 %v937, %v1620
    %v1622 = vpop.f32.mrf.mxu0
    %v1623 = vadd.f32 %v937, %v1622
    %1624 = vmatprep.mubr.f32.mxu0 %v1003
    %1625 = vmatmul.mubr.f32.gmra.mxu0 %v864
    %v1626 = vpop.f32.mrf.mxu0
    %v1627 = vadd.f32 %v942, %v1626
    %v1628 = vpop.f32.mrf.mxu0
    %v1629 = vadd.f32 %v942, %v1628
    %1630 = vmatprep.mubr.f32.mxu0 %v1006
    %1631 = vmatmul.mubr.f32.gmra.mxu0 %v866
    %v1632 = vpop.f32.mrf.mxu0
    %v1633 = vadd.f32 %v947, %v1632
    %v1634 = vpop.f32.mrf.mxu0
    %v1635 = vadd.f32 %v947, %v1634
    %1636 = vmatprep.mubr.f32.mxu0 %v1009
    %1637 = vmatmul.mubr.f32.gmra.mxu0 %v868
    %v1638 = vpop.f32.mrf.mxu0
    %v1639 = vadd.f32 %v952, %v1638
    %v1640 = vpop.f32.mrf.mxu0
    %v1641 = vadd.f32 %v952, %v1640
    %1642 = vmatprep.mubr.f32.mxu0 %v1012
    %1643 = vmatmul.mubr.f32.gmra.mxu0 %v870
    %v1644 = vpop.f32.mrf.mxu0
    %v1645 = vadd.f32 %v957, %v1644
    %v1646 = vpop.f32.mrf.mxu0
    %v1647 = vadd.f32 %v957, %v1646
    %1648 = vmatprep.mubr.f32.mxu0 %v1015
    %1649 = vmatmul.mubr.f32.gmra.mxu0 %v872
    %v1650 = vpop.f32.mrf.mxu0
    %v1651 = vadd.f32 %v962, %v1650
    %v1652 = vpop.f32.mrf.mxu0
    %v1653 = vadd.f32 %v962, %v1652
    %1654 = vmatprep.mubr.f32.mxu0 %v1018
    %1655 = vmatmul.mubr.f32.gmra.mxu0 %v874
    %v1656 = vpop.f32.mrf.mxu0
    %v1657 = vadd.f32 %v967, %v1656
    %v1658 = vpop.f32.mrf.mxu0
    %v1659 = vadd.f32 %v967, %v1658
    %1660 = vmatprep.mubr.f32.mxu0 %v1021
    %1661 = vmatmul.mubr.f32.gmra.mxu0 %v876
    %v1662 = vpop.f32.mrf.mxu0
    %v1663 = vadd.f32 %v972, %v1662
    %v1664 = vpop.f32.mrf.mxu0
    %v1665 = vadd.f32 %v972, %v1664
    %1666 = vdwg.mxu0
    %v1667 = vmax.f32 %v1090, 0.0
    %v1668 = vmax.f32 %v1092, 0.0
    %v1669 = vmax.f32 %v1251, 0.0
    %v1670 = vmax.f32 %v1253, 0.0
    %v1671 = vmax.f32 %v1412, 0.0
    %v1672 = vmax.f32 %v1414, 0.0
    %v1673 = vmax.f32 %v1573, 0.0
    %v1674 = vmax.f32 %v1575, 0.0
    %v1675 = vmax.f32 %v1096, 0.0
    %v1676 = vmax.f32 %v1098, 0.0
    %v1677 = vmax.f32 %v1257, 0.0
    %v1678 = vmax.f32 %v1259, 0.0
    %v1679 = vmax.f32 %v1418, 0.0
    %v1680 = vmax.f32 %v1420, 0.0
    %v1681 = vmax.f32 %v1579, 0.0
    %v1682 = vmax.f32 %v1581, 0.0
    %v1683 = vmax.f32 %v1102, 0.0
    %v1684 = vmax.f32 %v1104, 0.0
    %v1685 = vmax.f32 %v1263, 0.0
    %v1686 = vmax.f32 %v1265, 0.0
    %v1687 = vmax.f32 %v1424, 0.0
    %v1688 = vmax.f32 %v1426, 0.0
    %v1689 = vmax.f32 %v1585, 0.0
    %v1690 = vmax.f32 %v1587, 0.0
    %v1691 = vmax.f32 %v1108, 0.0
    %v1692 = vmax.f32 %v1110, 0.0
    %v1693 = vmax.f32 %v1269, 0.0
    %v1694 = vmax.f32 %v1271, 0.0
    %v1695 = vmax.f32 %v1430, 0.0
    %v1696 = vmax.f32 %v1432, 0.0
    %v1697 = vmax.f32 %v1591, 0.0
    %v1698 = vmax.f32 %v1593, 0.0
    %v1699 = vmax.f32 %v1114, 0.0
    %v1700 = vmax.f32 %v1116, 0.0
    %v1701 = vmax.f32 %v1275, 0.0
    %v1702 = vmax.f32 %v1277, 0.0
    %v1703 = vmax.f32 %v1436, 0.0
    %v1704 = vmax.f32 %v1438, 0.0
    %v1705 = vmax.f32 %v1597, 0.0
    %v1706 = vmax.f32 %v1599, 0.0
    %v1707 = vmax.f32 %v1120, 0.0
    %v1708 = vmax.f32 %v1122, 0.0
    %v1709 = vmax.f32 %v1281, 0.0
    %v1710 = vmax.f32 %v1283, 0.0
    %v1711 = vmax.f32 %v1442, 0.0
    %v1712 = vmax.f32 %v1444, 0.0
    %v1713 = vmax.f32 %v1603, 0.0
    %v1714 = vmax.f32 %v1605, 0.0
    %v1715 = vmax.f32 %v1126, 0.0
    %v1716 = vmax.f32 %v1128, 0.0
    %v1717 = vmax.f32 %v1287, 0.0
    %v1718 = vmax.f32 %v1289, 0.0
    %v1719 = vmax.f32 %v1448, 0.0
    %v1720 = vmax.f32 %v1450, 0.0
    %v1721 = vmax.f32 %v1609, 0.0
    %v1722 = vmax.f32 %v1611, 0.0
    %v1723 = vmax.f32 %v1132, 0.0
    %v1724 = vmax.f32 %v1134, 0.0
    %v1725 = vmax.f32 %v1293, 0.0
    %v1726 = vmax.f32 %v1295, 0.0
    %v1727 = vmax.f32 %v1454, 0.0
    %v1728 = vmax.f32 %v1456, 0.0
    %v1729 = vmax.f32 %v1615, 0.0
    %v1730 = vmax.f32 %v1617, 0.0
    %v1731 = vld [vmem:[%s7] sm:$0xff]
    %v1732 = vld [vmem:[%s7 + $0x8] sm:$0xff]
    %v1733 = vld [vmem:[%s7 + $0x10] sm:$0xff]
    %v1734 = vld [vmem:[%s7 + $0x18] sm:$0xff]
    %v1735 = vld [vmem:[%s7 + $0x20] sm:$0xff]
    %v1736 = vld [vmem:[%s7 + $0x28] sm:$0xff]
    %v1737 = vld [vmem:[%s7 + $0x30] sm:$0xff]
    %v1738 = vld [vmem:[%s7 + $0x38] sm:$0xff]
    %v1739 = vld [vmem:[%s7 + $0x40] sm:$0xff]
    %v1740 = vld [vmem:[%s7 + $0x48] sm:$0xff]
    %v1741 = vld [vmem:[%s7 + $0x50] sm:$0xff]
    %v1742 = vld [vmem:[%s7 + $0x58] sm:$0xff]
    %v1743 = vld [vmem:[%s7 + $0x60] sm:$0xff]
    %v1744 = vld [vmem:[%s7 + $0x68] sm:$0xff]
    %v1745 = vld [vmem:[%s7 + $0x70] sm:$0xff]
    %v1746 = vld [vmem:[%s7 + $0x78] sm:$0xff]
    %v1747 = vld [vmem:[%s7 + $0x80] sm:$0xff]
    %v1748 = vld [vmem:[%s7 + $0x88] sm:$0xff]
    %v1749 = vld [vmem:[%s7 + $0x90] sm:$0xff]
    %v1750 = vld [vmem:[%s7 + $0x98] sm:$0xff]
    %v1751 = vld [vmem:[%s7 + $0xa0] sm:$0xff]
    %v1752 = vld [vmem:[%s7 + $0xa8] sm:$0xff]
    %v1753 = vld [vmem:[%s7 + $0xb0] sm:$0xff]
    %v1754 = vld [vmem:[%s7 + $0xb8] sm:$0xff]
    %v1755 = vld [vmem:[%s7 + $0xc0] sm:$0xff]
    %v1756 = vld [vmem:[%s7 + $0xc8] sm:$0xff]
    %v1757 = vld [vmem:[%s7 + $0xd0] sm:$0xff]
    %v1758 = vld [vmem:[%s7 + $0xd8] sm:$0xff]
    %v1759 = vld [vmem:[%s7 + $0xe0] sm:$0xff]
    %v1760 = vld [vmem:[%s7 + $0xe8] sm:$0xff]
    %v1761 = vld [vmem:[%s7 + $0xf0] sm:$0xff]
    %v1762 = vld [vmem:[%s7 + $0xf8] sm:$0xff]
    %v1763 = vld [vmem:[%s7 + $0x100] sm:$0xff]
    %v1764 = vld [vmem:[%s7 + $0x108] sm:$0xff]
    %v1765 = vld [vmem:[%s7 + $0x110] sm:$0xff]
    %v1766 = vld [vmem:[%s7 + $0x118] sm:$0xff]
    %v1767 = vld [vmem:[%s7 + $0x120] sm:$0xff]
    %v1768 = vld [vmem:[%s7 + $0x128] sm:$0xff]
    %v1769 = vld [vmem:[%s7 + $0x130] sm:$0xff]
    %v1770 = vld [vmem:[%s7 + $0x138] sm:$0xff]
    %v1771 = vld [vmem:[%s7 + $0x140] sm:$0xff]
    %v1772 = vld [vmem:[%s7 + $0x148] sm:$0xff]
    %v1773 = vld [vmem:[%s7 + $0x150] sm:$0xff]
    %v1774 = vld [vmem:[%s7 + $0x158] sm:$0xff]
    %v1775 = vld [vmem:[%s7 + $0x160] sm:$0xff]
    %v1776 = vld [vmem:[%s7 + $0x168] sm:$0xff]
    %v1777 = vld [vmem:[%s7 + $0x170] sm:$0xff]
    %v1778 = vld [vmem:[%s7 + $0x178] sm:$0xff]
    %v1779 = vld [vmem:[%s7 + $0x180] sm:$0xff]
    %v1780 = vld [vmem:[%s7 + $0x188] sm:$0xff]
    %v1781 = vld [vmem:[%s7 + $0x190] sm:$0xff]
    %v1782 = vld [vmem:[%s7 + $0x198] sm:$0xff]
    %v1783 = vld [vmem:[%s7 + $0x1a0] sm:$0xff]
    %v1784 = vld [vmem:[%s7 + $0x1a8] sm:$0xff]
    %v1785 = vld [vmem:[%s7 + $0x1b0] sm:$0xff]
    %v1786 = vld [vmem:[%s7 + $0x1b8] sm:$0xff]
    %v1787 = vld [vmem:[%s7 + $0x1c0] sm:$0xff]
    %v1788 = vld [vmem:[%s7 + $0x1c8] sm:$0xff]
    %v1789 = vld [vmem:[%s7 + $0x1d0] sm:$0xff]
    %v1790 = vld [vmem:[%s7 + $0x1d8] sm:$0xff]
    %v1791 = vld [vmem:[%s7 + $0x1e0] sm:$0xff]
    %v1792 = vld [vmem:[%s7 + $0x1e8] sm:$0xff]
    %v1793 = vld [vmem:[%s7 + $0x1f0] sm:$0xff]
    %v1794 = vld [vmem:[%s7 + $0x1f8] sm:$0xff]
    %v1795 = vld [vmem:[%s7 + $0x200] sm:$0xff]
    %v1796 = vld [vmem:[%s7 + $0x208] sm:$0xff]
    %v1797 = vld [vmem:[%s7 + $0x210] sm:$0xff]
    %v1798 = vld [vmem:[%s7 + $0x218] sm:$0xff]
    %v1799 = vld [vmem:[%s7 + $0x220] sm:$0xff]
    %v1800 = vld [vmem:[%s7 + $0x228] sm:$0xff]
    %v1801 = vld [vmem:[%s7 + $0x230] sm:$0xff]
    %v1802 = vld [vmem:[%s7 + $0x238] sm:$0xff]
    %v1803 = vld [vmem:[%s7 + $0x240] sm:$0xff]
    %v1804 = vld [vmem:[%s7 + $0x248] sm:$0xff]
    %v1805 = vld [vmem:[%s7 + $0x250] sm:$0xff]
    %v1806 = vld [vmem:[%s7 + $0x258] sm:$0xff]
    %v1807 = vld [vmem:[%s7 + $0x260] sm:$0xff]
    %v1808 = vld [vmem:[%s7 + $0x268] sm:$0xff]
    %v1809 = vld [vmem:[%s7 + $0x270] sm:$0xff]
    %v1810 = vld [vmem:[%s7 + $0x278] sm:$0xff]
    %v1811 = vld [vmem:[%s7 + $0x280] sm:$0xff]
    %v1812 = vld [vmem:[%s7 + $0x288] sm:$0xff]
    %v1813 = vld [vmem:[%s7 + $0x290] sm:$0xff]
    %v1814 = vld [vmem:[%s7 + $0x298] sm:$0xff]
    %v1815 = vld [vmem:[%s7 + $0x2a0] sm:$0xff]
    %v1816 = vld [vmem:[%s7 + $0x2a8] sm:$0xff]
    %v1817 = vld [vmem:[%s7 + $0x2b0] sm:$0xff]
    %v1818 = vld [vmem:[%s7 + $0x2b8] sm:$0xff]
    %v1819 = vld [vmem:[%s7 + $0x2c0] sm:$0xff]
    %v1820 = vld [vmem:[%s7 + $0x2c8] sm:$0xff]
    %v1821 = vld [vmem:[%s7 + $0x2d0] sm:$0xff]
    %v1822 = vld [vmem:[%s7 + $0x2d8] sm:$0xff]
    %v1823 = vld [vmem:[%s7 + $0x2e0] sm:$0xff]
    %v1824 = vld [vmem:[%s7 + $0x2e8] sm:$0xff]
    %v1825 = vld [vmem:[%s7 + $0x2f0] sm:$0xff]
    %v1826 = vld [vmem:[%s7 + $0x2f8] sm:$0xff]
    %v1827 = vld [vmem:[%s7 + $0x300] sm:$0xff]
    %v1828 = vld [vmem:[%s7 + $0x308] sm:$0xff]
    %v1829 = vld [vmem:[%s7 + $0x310] sm:$0xff]
    %v1830 = vld [vmem:[%s7 + $0x318] sm:$0xff]
    %v1831 = vld [vmem:[%s7 + $0x320] sm:$0xff]
    %v1832 = vld [vmem:[%s7 + $0x328] sm:$0xff]
    %v1833 = vld [vmem:[%s7 + $0x330] sm:$0xff]
    %v1834 = vld [vmem:[%s7 + $0x338] sm:$0xff]
    %v1835 = vld [vmem:[%s7 + $0x340] sm:$0xff]
    %v1836 = vld [vmem:[%s7 + $0x348] sm:$0xff]
    %v1837 = vld [vmem:[%s7 + $0x350] sm:$0xff]
    %v1838 = vld [vmem:[%s7 + $0x358] sm:$0xff]
    %v1839 = vld [vmem:[%s7 + $0x360] sm:$0xff]
    %v1840 = vld [vmem:[%s7 + $0x368] sm:$0xff]
    %v1841 = vld [vmem:[%s7 + $0x370] sm:$0xff]
    %v1842 = vld [vmem:[%s7 + $0x378] sm:$0xff]
    %v1843 = vld [vmem:[%s7 + $0x380] sm:$0xff]
    %v1844 = vld [vmem:[%s7 + $0x388] sm:$0xff]
    %v1845 = vld [vmem:[%s7 + $0x390] sm:$0xff]
    %v1846 = vld [vmem:[%s7 + $0x398] sm:$0xff]
    %v1847 = vld [vmem:[%s7 + $0x3a0] sm:$0xff]
    %v1848 = vld [vmem:[%s7 + $0x3a8] sm:$0xff]
    %v1849 = vld [vmem:[%s7 + $0x3b0] sm:$0xff]
    %v1850 = vld [vmem:[%s7 + $0x3b8] sm:$0xff]
    %v1851 = vld [vmem:[%s7 + $0x3c0] sm:$0xff]
    %v1852 = vld [vmem:[%s7 + $0x3c8] sm:$0xff]
    %v1853 = vld [vmem:[%s7 + $0x3d0] sm:$0xff]
    %v1854 = vld [vmem:[%s7 + $0x3d8] sm:$0xff]
    %v1855 = vld [vmem:[%s7 + $0x3e0] sm:$0xff]
    %v1856 = vld [vmem:[%s7 + $0x3e8] sm:$0xff]
    %v1857 = vld [vmem:[%s7 + $0x3f0] sm:$0xff]
    %v1858 = vld [vmem:[%s7 + $0x3f8] sm:$0xff]
    %1859 = vmatprep.subr.mxu0 0.0
    %1860 = vmatpush1.msra.mxu0 %v1746
    %1861 = vmatprep.subr.mxu0 0.0
    %1862 = vmatpush1.msra.mxu0 %v1745
    %1863 = vmatprep.subr.mxu0 0.0
    %1864 = vmatpush1.msra.mxu0 %v1744
    %1865 = vmatprep.subr.mxu0 0.0
    %1866 = vmatpush1.msra.mxu0 %v1743
    %1867 = vmatprep.subr.mxu0 0.0
    %1868 = vmatpush1.msra.mxu0 %v1742
    %1869 = vmatprep.subr.mxu0 0.0
    %1870 = vmatpush1.msra.mxu0 %v1741
    %1871 = vmatprep.subr.mxu0 0.0
    %1872 = vmatpush1.msra.mxu0 %v1740
    %1873 = vmatprep.subr.mxu0 0.0
    %1874 = vmatpush1.msra.mxu0 %v1739
    %1875 = vmatprep.subr.mxu0 0.0
    %1876 = vmatpush1.msra.mxu0 %v1738
    %1877 = vmatprep.subr.mxu0 0.0
    %1878 = vmatpush1.msra.mxu0 %v1737
    %1879 = vmatprep.subr.mxu0 0.0
    %1880 = vmatpush1.msra.mxu0 %v1736
    %1881 = vmatprep.subr.mxu0 0.0
    %1882 = vmatpush1.msra.mxu0 %v1735
    %1883 = vmatprep.subr.mxu0 0.0
    %1884 = vmatpush1.msra.mxu0 %v1734
    %1885 = vmatprep.subr.mxu0 0.0
    %1886 = vmatpush1.msra.mxu0 %v1733
    %1887 = vmatprep.subr.mxu0 0.0
    %1888 = vmatpush1.msra.mxu0 %v1732
    %1889 = vmatprep.subr.mxu0 0.0
    %1890 = vmatpush1.msra.mxu0 %v1731
    %1891 = vmatprep.subr.mxu0 0.0
    %1892 = vmatpush2.msra.mxu0 %v1762
    %1893 = vmatprep.subr.mxu0 0.0
    %1894 = vmatpush2.msra.mxu0 %v1761
    %1895 = vmatprep.subr.mxu0 0.0
    %1896 = vmatpush2.msra.mxu0 %v1760
    %1897 = vmatprep.subr.mxu0 0.0
    %1898 = vmatpush2.msra.mxu0 %v1759
    %1899 = vmatprep.subr.mxu0 0.0
    %1900 = vmatpush2.msra.mxu0 %v1758
    %1901 = vmatprep.subr.mxu0 0.0
    %1902 = vmatpush2.msra.mxu0 %v1757
    %1903 = vmatprep.subr.mxu0 0.0
    %1904 = vmatpush2.msra.mxu0 %v1756
    %1905 = vmatprep.subr.mxu0 0.0
    %1906 = vmatpush2.msra.mxu0 %v1755
    %1907 = vmatprep.subr.mxu0 0.0
    %1908 = vmatpush2.msra.mxu0 %v1754
    %1909 = vmatprep.subr.mxu0 0.0
    %1910 = vmatpush2.msra.mxu0 %v1753
    %1911 = vmatprep.subr.mxu0 0.0
    %1912 = vmatpush2.msra.mxu0 %v1752
    %1913 = vmatprep.subr.mxu0 0.0
    %1914 = vmatpush2.msra.mxu0 %v1751
    %1915 = vmatprep.subr.mxu0 0.0
    %1916 = vmatpush2.msra.mxu0 %v1750
    %1917 = vmatprep.subr.mxu0 0.0
    %1918 = vmatpush2.msra.mxu0 %v1749
    %1919 = vmatprep.subr.mxu0 0.0
    %1920 = vmatpush2.msra.mxu0 %v1748
    %1921 = vmatprep.subr.mxu0 0.0
    %1922 = vmatpush2.msra.mxu0 %v1747
    %1923 = vmatprep.mubr.f32.mxu0 %v1668
    %1924 = vmatmul.mubr.f32.gmra.mxu0 %v1667
    %v1925 = vpop.f32.mrf.mxu0
    %v1926 = vadd.f32 0.0, %v1925
    %v1927 = vpop.f32.mrf.mxu0
    %1928 = vmatprep.mubr.f32.mxu0 %v1676
    %1929 = vmatmul.mubr.f32.gmra.mxu0 %v1675
    %v1930 = vpop.f32.mrf.mxu0
    %v1931 = vadd.f32 0.0, %v1930
    %v1932 = vpop.f32.mrf.mxu0
    %1933 = vmatprep.mubr.f32.mxu0 %v1684
    %1934 = vmatmul.mubr.f32.gmra.mxu0 %v1683
    %v1935 = vpop.f32.mrf.mxu0
    %v1936 = vadd.f32 0.0, %v1935
    %v1937 = vpop.f32.mrf.mxu0
    %1938 = vmatprep.mubr.f32.mxu0 %v1692
    %1939 = vmatmul.mubr.f32.gmra.mxu0 %v1691
    %v1940 = vpop.f32.mrf.mxu0
    %v1941 = vadd.f32 0.0, %v1940
    %v1942 = vpop.f32.mrf.mxu0
    %1943 = vmatprep.mubr.f32.mxu0 %v1700
    %1944 = vmatmul.mubr.f32.gmra.mxu0 %v1699
    %v1945 = vpop.f32.mrf.mxu0
    %v1946 = vadd.f32 0.0, %v1945
    %v1947 = vpop.f32.mrf.mxu0
    %1948 = vmatprep.mubr.f32.mxu0 %v1708
    %1949 = vmatmul.mubr.f32.gmra.mxu0 %v1707
    %v1950 = vpop.f32.mrf.mxu0
    %v1951 = vadd.f32 0.0, %v1950
    %v1952 = vpop.f32.mrf.mxu0
    %1953 = vmatprep.mubr.f32.mxu0 %v1716
    %1954 = vmatmul.mubr.f32.gmra.mxu0 %v1715
    %v1955 = vpop.f32.mrf.mxu0
    %v1956 = vadd.f32 0.0, %v1955
    %v1957 = vpop.f32.mrf.mxu0
    %1958 = vmatprep.mubr.f32.mxu0 %v1724
    %1959 = vmatmul.mubr.f32.gmra.mxu0 %v1723
    %v1960 = vpop.f32.mrf.mxu0
    %v1961 = vadd.f32 0.0, %v1960
    %v1962 = vpop.f32.mrf.mxu0
    %1963 = vdwg.mxu0
    %1964 = vmatprep.subr.mxu0 0.0
    %1965 = vmatpush1.msra.mxu0 %v1778
    %1966 = vmatprep.subr.mxu0 0.0
    %1967 = vmatpush1.msra.mxu0 %v1777
    %1968 = vmatprep.subr.mxu0 0.0
    %1969 = vmatpush1.msra.mxu0 %v1776
    %1970 = vmatprep.subr.mxu0 0.0
    %1971 = vmatpush1.msra.mxu0 %v1775
    %1972 = vmatprep.subr.mxu0 0.0
    %1973 = vmatpush1.msra.mxu0 %v1774
    %1974 = vmatprep.subr.mxu0 0.0
    %1975 = vmatpush1.msra.mxu0 %v1773
    %1976 = vmatprep.subr.mxu0 0.0
    %1977 = vmatpush1.msra.mxu0 %v1772
    %1978 = vmatprep.subr.mxu0 0.0
    %1979 = vmatpush1.msra.mxu0 %v1771
    %1980 = vmatprep.subr.mxu0 0.0
    %1981 = vmatpush1.msra.mxu0 %v1770
    %1982 = vmatprep.subr.mxu0 0.0
    %1983 = vmatpush1.msra.mxu0 %v1769
    %1984 = vmatprep.subr.mxu0 0.0
    %1985 = vmatpush1.msra.mxu0 %v1768
    %1986 = vmatprep.subr.mxu0 0.0
    %1987 = vmatpush1.msra.mxu0 %v1767
    %1988 = vmatprep.subr.mxu0 0.0
    %1989 = vmatpush1.msra.mxu0 %v1766
    %1990 = vmatprep.subr.mxu0 0.0
    %1991 = vmatpush1.msra.mxu0 %v1765
    %1992 = vmatprep.subr.mxu0 0.0
    %1993 = vmatpush1.msra.mxu0 %v1764
    %1994 = vmatprep.subr.mxu0 0.0
    %1995 = vmatpush1.msra.mxu0 %v1763
    %1996 = vmatprep.subr.mxu0 0.0
    %1997 = vmatpush2.msra.mxu0 %v1794
    %1998 = vmatprep.subr.mxu0 0.0
    %1999 = vmatpush2.msra.mxu0 %v1793
    %2000 = vmatprep.subr.mxu0 0.0
    %2001 = vmatpush2.msra.mxu0 %v1792
    %2002 = vmatprep.subr.mxu0 0.0
    %2003 = vmatpush2.msra.mxu0 %v1791
    %2004 = vmatprep.subr.mxu0 0.0
    %2005 = vmatpush2.msra.mxu0 %v1790
    %2006 = vmatprep.subr.mxu0 0.0
    %2007 = vmatpush2.msra.mxu0 %v1789
    %2008 = vmatprep.subr.mxu0 0.0
    %2009 = vmatpush2.msra.mxu0 %v1788
    %2010 = vmatprep.subr.mxu0 0.0
    %2011 = vmatpush2.msra.mxu0 %v1787
    %2012 = vmatprep.subr.mxu0 0.0
    %2013 = vmatpush2.msra.mxu0 %v1786
    %2014 = vmatprep.subr.mxu0 0.0
    %2015 = vmatpush2.msra.mxu0 %v1785
    %2016 = vmatprep.subr.mxu0 0.0
    %2017 = vmatpush2.msra.mxu0 %v1784
    %2018 = vmatprep.subr.mxu0 0.0
    %2019 = vmatpush2.msra.mxu0 %v1783
    %2020 = vmatprep.subr.mxu0 0.0
    %2021 = vmatpush2.msra.mxu0 %v1782
    %2022 = vmatprep.subr.mxu0 0.0
    %2023 = vmatpush2.msra.mxu0 %v1781
    %2024 = vmatprep.subr.mxu0 0.0
    %2025 = vmatpush2.msra.mxu0 %v1780
    %2026 = vmatprep.subr.mxu0 0.0
    %2027 = vmatpush2.msra.mxu0 %v1779
    %2028 = vmatprep.mubr.f32.mxu0 %v1670
    %2029 = vmatmul.mubr.f32.gmra.mxu0 %v1669
    %v2030 = vpop.f32.mrf.mxu0
    %v2031 = vadd.f32 %v1926, %v2030
    %v2032 = vpop.f32.mrf.mxu0
    %2033 = vmatprep.mubr.f32.mxu0 %v1678
    %2034 = vmatmul.mubr.f32.gmra.mxu0 %v1677
    %v2035 = vpop.f32.mrf.mxu0
    %v2036 = vadd.f32 %v1931, %v2035
    %v2037 = vpop.f32.mrf.mxu0
    %2038 = vmatprep.mubr.f32.mxu0 %v1686
    %2039 = vmatmul.mubr.f32.gmra.mxu0 %v1685
    %v2040 = vpop.f32.mrf.mxu0
    %v2041 = vadd.f32 %v1936, %v2040
    %v2042 = vpop.f32.mrf.mxu0
    %2043 = vmatprep.mubr.f32.mxu0 %v1694
    %2044 = vmatmul.mubr.f32.gmra.mxu0 %v1693
    %v2045 = vpop.f32.mrf.mxu0
    %v2046 = vadd.f32 %v1941, %v2045
    %v2047 = vpop.f32.mrf.mxu0
    %2048 = vmatprep.mubr.f32.mxu0 %v1702
    %2049 = vmatmul.mubr.f32.gmra.mxu0 %v1701
    %v2050 = vpop.f32.mrf.mxu0
    %v2051 = vadd.f32 %v1946, %v2050
    %v2052 = vpop.f32.mrf.mxu0
    %2053 = vmatprep.mubr.f32.mxu0 %v1710
    %2054 = vmatmul.mubr.f32.gmra.mxu0 %v1709
    %v2055 = vpop.f32.mrf.mxu0
    %v2056 = vadd.f32 %v1951, %v2055
    %v2057 = vpop.f32.mrf.mxu0
    %2058 = vmatprep.mubr.f32.mxu0 %v1718
    %2059 = vmatmul.mubr.f32.gmra.mxu0 %v1717
    %v2060 = vpop.f32.mrf.mxu0
    %v2061 = vadd.f32 %v1956, %v2060
    %v2062 = vpop.f32.mrf.mxu0
    %2063 = vmatprep.mubr.f32.mxu0 %v1726
    %2064 = vmatmul.mubr.f32.gmra.mxu0 %v1725
    %v2065 = vpop.f32.mrf.mxu0
    %v2066 = vadd.f32 %v1961, %v2065
    %v2067 = vpop.f32.mrf.mxu0
    %2068 = vdwg.mxu0
    %2069 = vmatprep.subr.mxu0 0.0
    %2070 = vmatpush1.msra.mxu0 %v1810
    %2071 = vmatprep.subr.mxu0 0.0
    %2072 = vmatpush1.msra.mxu0 %v1809
    %2073 = vmatprep.subr.mxu0 0.0
    %2074 = vmatpush1.msra.mxu0 %v1808
    %2075 = vmatprep.subr.mxu0 0.0
    %2076 = vmatpush1.msra.mxu0 %v1807
    %2077 = vmatprep.subr.mxu0 0.0
    %2078 = vmatpush1.msra.mxu0 %v1806
    %2079 = vmatprep.subr.mxu0 0.0
    %2080 = vmatpush1.msra.mxu0 %v1805
    %2081 = vmatprep.subr.mxu0 0.0
    %2082 = vmatpush1.msra.mxu0 %v1804
    %2083 = vmatprep.subr.mxu0 0.0
    %2084 = vmatpush1.msra.mxu0 %v1803
    %2085 = vmatprep.subr.mxu0 0.0
    %2086 = vmatpush1.msra.mxu0 %v1802
    %2087 = vmatprep.subr.mxu0 0.0
    %2088 = vmatpush1.msra.mxu0 %v1801
    %2089 = vmatprep.subr.mxu0 0.0
    %2090 = vmatpush1.msra.mxu0 %v1800
    %2091 = vmatprep.subr.mxu0 0.0
    %2092 = vmatpush1.msra.mxu0 %v1799
    %2093 = vmatprep.subr.mxu0 0.0
    %2094 = vmatpush1.msra.mxu0 %v1798
    %2095 = vmatprep.subr.mxu0 0.0
    %2096 = vmatpush1.msra.mxu0 %v1797
    %2097 = vmatprep.subr.mxu0 0.0
    %2098 = vmatpush1.msra.mxu0 %v1796
    %2099 = vmatprep.subr.mxu0 0.0
    %2100 = vmatpush1.msra.mxu0 %v1795
    %2101 = vmatprep.subr.mxu0 0.0
    %2102 = vmatpush2.msra.mxu0 %v1826
    %2103 = vmatprep.subr.mxu0 0.0
    %2104 = vmatpush2.msra.mxu0 %v1825
    %2105 = vmatprep.subr.mxu0 0.0
    %2106 = vmatpush2.msra.mxu0 %v1824
    %2107 = vmatprep.subr.mxu0 0.0
    %2108 = vmatpush2.msra.mxu0 %v1823
    %2109 = vmatprep.subr.mxu0 0.0
    %2110 = vmatpush2.msra.mxu0 %v1822
    %2111 = vmatprep.subr.mxu0 0.0
    %2112 = vmatpush2.msra.mxu0 %v1821
    %2113 = vmatprep.subr.mxu0 0.0
    %2114 = vmatpush2.msra.mxu0 %v1820
    %2115 = vmatprep.subr.mxu0 0.0
    %2116 = vmatpush2.msra.mxu0 %v1819
    %2117 = vmatprep.subr.mxu0 0.0
    %2118 = vmatpush2.msra.mxu0 %v1818
    %2119 = vmatprep.subr.mxu0 0.0
    %2120 = vmatpush2.msra.mxu0 %v1817
    %2121 = vmatprep.subr.mxu0 0.0
    %2122 = vmatpush2.msra.mxu0 %v1816
    %2123 = vmatprep.subr.mxu0 0.0
    %2124 = vmatpush2.msra.mxu0 %v1815
    %2125 = vmatprep.subr.mxu0 0.0
    %2126 = vmatpush2.msra.mxu0 %v1814
    %2127 = vmatprep.subr.mxu0 0.0
    %2128 = vmatpush2.msra.mxu0 %v1813
    %2129 = vmatprep.subr.mxu0 0.0
    %2130 = vmatpush2.msra.mxu0 %v1812
    %2131 = vmatprep.subr.mxu0 0.0
    %2132 = vmatpush2.msra.mxu0 %v1811
    %2133 = vmatprep.mubr.f32.mxu0 %v1672
    %2134 = vmatmul.mubr.f32.gmra.mxu0 %v1671
    %v2135 = vpop.f32.mrf.mxu0
    %v2136 = vadd.f32 %v2031, %v2135
    %v2137 = vpop.f32.mrf.mxu0
    %2138 = vmatprep.mubr.f32.mxu0 %v1680
    %2139 = vmatmul.mubr.f32.gmra.mxu0 %v1679
    %v2140 = vpop.f32.mrf.mxu0
    %v2141 = vadd.f32 %v2036, %v2140
    %v2142 = vpop.f32.mrf.mxu0
    %2143 = vmatprep.mubr.f32.mxu0 %v1688
    %2144 = vmatmul.mubr.f32.gmra.mxu0 %v1687
    %v2145 = vpop.f32.mrf.mxu0
    %v2146 = vadd.f32 %v2041, %v2145
    %v2147 = vpop.f32.mrf.mxu0
    %2148 = vmatprep.mubr.f32.mxu0 %v1696
    %2149 = vmatmul.mubr.f32.gmra.mxu0 %v1695
    %v2150 = vpop.f32.mrf.mxu0
    %v2151 = vadd.f32 %v2046, %v2150
    %v2152 = vpop.f32.mrf.mxu0
    %2153 = vmatprep.mubr.f32.mxu0 %v1704
    %2154 = vmatmul.mubr.f32.gmra.mxu0 %v1703
    %v2155 = vpop.f32.mrf.mxu0
    %v2156 = vadd.f32 %v2051, %v2155
    %v2157 = vpop.f32.mrf.mxu0
    %2158 = vmatprep.mubr.f32.mxu0 %v1712
    %2159 = vmatmul.mubr.f32.gmra.mxu0 %v1711
    %v2160 = vpop.f32.mrf.mxu0
    %v2161 = vadd.f32 %v2056, %v2160
    %v2162 = vpop.f32.mrf.mxu0
    %2163 = vmatprep.mubr.f32.mxu0 %v1720
    %2164 = vmatmul.mubr.f32.gmra.mxu0 %v1719
    %v2165 = vpop.f32.mrf.mxu0
    %v2166 = vadd.f32 %v2061, %v2165
    %v2167 = vpop.f32.mrf.mxu0
    %2168 = vmatprep.mubr.f32.mxu0 %v1728
    %2169 = vmatmul.mubr.f32.gmra.mxu0 %v1727
    %v2170 = vpop.f32.mrf.mxu0
    %v2171 = vadd.f32 %v2066, %v2170
    %v2172 = vpop.f32.mrf.mxu0
    %2173 = vdwg.mxu0
    %2174 = vmatprep.subr.mxu0 0.0
    %2175 = vmatpush1.msra.mxu0 %v1842
    %2176 = vmatprep.subr.mxu0 0.0
    %2177 = vmatpush1.msra.mxu0 %v1841
    %2178 = vmatprep.subr.mxu0 0.0
    %2179 = vmatpush1.msra.mxu0 %v1840
    %2180 = vmatprep.subr.mxu0 0.0
    %2181 = vmatpush1.msra.mxu0 %v1839
    %2182 = vmatprep.subr.mxu0 0.0
    %2183 = vmatpush1.msra.mxu0 %v1838
    %2184 = vmatprep.subr.mxu0 0.0
    %2185 = vmatpush1.msra.mxu0 %v1837
    %2186 = vmatprep.subr.mxu0 0.0
    %2187 = vmatpush1.msra.mxu0 %v1836
    %2188 = vmatprep.subr.mxu0 0.0
    %2189 = vmatpush1.msra.mxu0 %v1835
    %2190 = vmatprep.subr.mxu0 0.0
    %2191 = vmatpush1.msra.mxu0 %v1834
    %2192 = vmatprep.subr.mxu0 0.0
    %2193 = vmatpush1.msra.mxu0 %v1833
    %2194 = vmatprep.subr.mxu0 0.0
    %2195 = vmatpush1.msra.mxu0 %v1832
    %2196 = vmatprep.subr.mxu0 0.0
    %2197 = vmatpush1.msra.mxu0 %v1831
    %2198 = vmatprep.subr.mxu0 0.0
    %2199 = vmatpush1.msra.mxu0 %v1830
    %2200 = vmatprep.subr.mxu0 0.0
    %2201 = vmatpush1.msra.mxu0 %v1829
    %2202 = vmatprep.subr.mxu0 0.0
    %2203 = vmatpush1.msra.mxu0 %v1828
    %2204 = vmatprep.subr.mxu0 0.0
    %2205 = vmatpush1.msra.mxu0 %v1827
    %2206 = vmatprep.subr.mxu0 0.0
    %2207 = vmatpush2.msra.mxu0 %v1858
    %2208 = vmatprep.subr.mxu0 0.0
    %2209 = vmatpush2.msra.mxu0 %v1857
    %2210 = vmatprep.subr.mxu0 0.0
    %2211 = vmatpush2.msra.mxu0 %v1856
    %2212 = vmatprep.subr.mxu0 0.0
    %2213 = vmatpush2.msra.mxu0 %v1855
    %2214 = vmatprep.subr.mxu0 0.0
    %2215 = vmatpush2.msra.mxu0 %v1854
    %2216 = vmatprep.subr.mxu0 0.0
    %2217 = vmatpush2.msra.mxu0 %v1853
    %2218 = vmatprep.subr.mxu0 0.0
    %2219 = vmatpush2.msra.mxu0 %v1852
    %2220 = vmatprep.subr.mxu0 0.0
    %2221 = vmatpush2.msra.mxu0 %v1851
    %2222 = vmatprep.subr.mxu0 0.0
    %2223 = vmatpush2.msra.mxu0 %v1850
    %2224 = vmatprep.subr.mxu0 0.0
    %2225 = vmatpush2.msra.mxu0 %v1849
    %2226 = vmatprep.subr.mxu0 0.0
    %2227 = vmatpush2.msra.mxu0 %v1848
    %2228 = vmatprep.subr.mxu0 0.0
    %2229 = vmatpush2.msra.mxu0 %v1847
    %2230 = vmatprep.subr.mxu0 0.0
    %2231 = vmatpush2.msra.mxu0 %v1846
    %2232 = vmatprep.subr.mxu0 0.0
    %2233 = vmatpush2.msra.mxu0 %v1845
    %2234 = vmatprep.subr.mxu0 0.0
    %2235 = vmatpush2.msra.mxu0 %v1844
    %2236 = vmatprep.subr.mxu0 0.0
    %2237 = vmatpush2.msra.mxu0 %v1843
    %2238 = vmatprep.mubr.f32.mxu0 %v1674
    %2239 = vmatmul.mubr.f32.gmra.mxu0 %v1673
    %v2240 = vpop.f32.mrf.mxu0
    %v2241 = vadd.f32 %v2136, %v2240
    %v2242 = vpop.f32.mrf.mxu0
    %2243 = vmatprep.mubr.f32.mxu0 %v1682
    %2244 = vmatmul.mubr.f32.gmra.mxu0 %v1681
    %v2245 = vpop.f32.mrf.mxu0
    %v2246 = vadd.f32 %v2141, %v2245
    %v2247 = vpop.f32.mrf.mxu0
    %2248 = vmatprep.mubr.f32.mxu0 %v1690
    %2249 = vmatmul.mubr.f32.gmra.mxu0 %v1689
    %v2250 = vpop.f32.mrf.mxu0
    %v2251 = vadd.f32 %v2146, %v2250
    %v2252 = vpop.f32.mrf.mxu0
    %2253 = vmatprep.mubr.f32.mxu0 %v1698
    %2254 = vmatmul.mubr.f32.gmra.mxu0 %v1697
    %v2255 = vpop.f32.mrf.mxu0
    %v2256 = vadd.f32 %v2151, %v2255
    %v2257 = vpop.f32.mrf.mxu0
    %2258 = vmatprep.mubr.f32.mxu0 %v1706
    %2259 = vmatmul.mubr.f32.gmra.mxu0 %v1705
    %v2260 = vpop.f32.mrf.mxu0
    %v2261 = vadd.f32 %v2156, %v2260
    %v2262 = vpop.f32.mrf.mxu0
    %2263 = vmatprep.mubr.f32.mxu0 %v1714
    %2264 = vmatmul.mubr.f32.gmra.mxu0 %v1713
    %v2265 = vpop.f32.mrf.mxu0
    %v2266 = vadd.f32 %v2161, %v2265
    %v2267 = vpop.f32.mrf.mxu0
    %2268 = vmatprep.mubr.f32.mxu0 %v1722
    %2269 = vmatmul.mubr.f32.gmra.mxu0 %v1721
    %v2270 = vpop.f32.mrf.mxu0
    %v2271 = vadd.f32 %v2166, %v2270
    %v2272 = vpop.f32.mrf.mxu0
    %2273 = vmatprep.mubr.f32.mxu0 %v1730
    %2274 = vmatmul.mubr.f32.gmra.mxu0 %v1729
    %v2275 = vpop.f32.mrf.mxu0
    %v2276 = vadd.f32 %v2171, %v2275
    %v2277 = vpop.f32.mrf.mxu0
    %2278 = vdwg.mxu0
    %v2279 = vld [vmem:[%s3] sm:$0xf]
    %v2280 = vld [vmem:[%s4] sm:$0xf]
    %2282 = vset.pattern.permute.xlu0 0
    %2283 = vperm.xlu0 %2282, %v2280
    %v2284 = vpop.permute.xlu0 %2283
    %v2287 = vsel %vm974, %v2279, 0
    %2289 = vmatprep.subr.mxu0 0.0
    %2290 = vmatpush1.msra.mxu0 0.0
    %2291 = vmatprep.subr.mxu0 0.0
    %2292 = vmatpush1.msra.mxu0 0.0
    %2293 = vmatprep.subr.mxu0 0.0
    %2294 = vmatpush1.msra.mxu0 0.0
    %2295 = vmatprep.subr.mxu0 0.0
    %2296 = vmatpush1.msra.mxu0 0.0
    %2297 = vmatprep.subr.mxu0 0.0
    %2298 = vmatpush1.msra.mxu0 0.0
    %2299 = vmatprep.subr.mxu0 0.0
    %2300 = vmatpush1.msra.mxu0 0.0
    %2301 = vmatprep.subr.mxu0 0.0
    %2302 = vmatpush1.msra.mxu0 0.0
    %2303 = vmatprep.subr.mxu0 0.0
    %2304 = vmatpush1.msra.mxu0 0.0
    %2305 = vmatprep.subr.mxu0 0.0
    %2306 = vmatpush1.msra.mxu0 %v2276
    %2307 = vmatprep.subr.mxu0 0.0
    %2308 = vmatpush1.msra.mxu0 %v2271
    %2309 = vmatprep.subr.mxu0 0.0
    %2310 = vmatpush1.msra.mxu0 %v2266
    %2311 = vmatprep.subr.mxu0 0.0
    %2312 = vmatpush1.msra.mxu0 %v2261
    %2313 = vmatprep.subr.mxu0 0.0
    %2314 = vmatpush1.msra.mxu0 %v2256
    %2315 = vmatprep.subr.mxu0 0.0
    %2316 = vmatpush1.msra.mxu0 %v2251
    %2317 = vmatprep.subr.mxu0 0.0
    %2318 = vmatpush1.msra.mxu0 %v2246
    %2319 = vmatprep.subr.mxu0 0.0
    %2320 = vmatpush1.msra.mxu0 %v2241
    %2321 = vmatprep.subr.mxu0 0.0
    %2322 = vmatpush2.msra.mxu0 0.0
    %2323 = vmatprep.subr.mxu0 0.0
    %2324 = vmatpush2.msra.mxu0 0.0
    %2325 = vmatprep.subr.mxu0 0.0
    %2326 = vmatpush2.msra.mxu0 0.0
    %2327 = vmatprep.subr.mxu0 0.0
    %2328 = vmatpush2.msra.mxu0 0.0
    %2329 = vmatprep.subr.mxu0 0.0
    %2330 = vmatpush2.msra.mxu0 0.0
    %2331 = vmatprep.subr.mxu0 0.0
    %2332 = vmatpush2.msra.mxu0 0.0
    %2333 = vmatprep.subr.mxu0 0.0
    %2334 = vmatpush2.msra.mxu0 0.0
    %2335 = vmatprep.subr.mxu0 0.0
    %2336 = vmatpush2.msra.mxu0 0.0
    %2337 = vmatprep.subr.mxu0 0.0
    %2338 = vmatpush2.msra.mxu0 0.0
    %2339 = vmatprep.subr.mxu0 0.0
    %2340 = vmatpush2.msra.mxu0 0.0
    %2341 = vmatprep.subr.mxu0 0.0
    %2342 = vmatpush2.msra.mxu0 0.0
    %2343 = vmatprep.subr.mxu0 0.0
    %2344 = vmatpush2.msra.mxu0 0.0
    %2345 = vmatprep.subr.mxu0 0.0
    %2346 = vmatpush2.msra.mxu0 0.0
    %2347 = vmatprep.subr.mxu0 0.0
    %2348 = vmatpush2.msra.mxu0 0.0
    %2349 = vmatprep.subr.mxu0 0.0
    %2350 = vmatpush2.msra.mxu0 0.0
    %2351 = vmatprep.subr.mxu0 0.0
    %2352 = vmatpush2.msra.mxu0 0.0
    %2353 = vmatprep.mubr.f32.mxu0 0.0
    %2354 = vmatmul.mubr.f32.gmra.mxu0 %v2287
    %v2355 = vpop.f32.mrf.mxu0
    %v2356 = vadd.f32 %v2284, %v2355
    %v2357 = vpop.f32.mrf.mxu0
    %2358 = vdwg.mxu0
    %v2359 = vmax.f32 %v2356, 0.0
    %v2360 = vld [vmem:[%s5] sm:$0xff]
    %v2361 = vld [vmem:[%s5 + $0x8] sm:$0xff]
    %v2362 = vld [vmem:[%s5 + $0x10] sm:$0xff]
    %v2363 = vld [vmem:[%s5 + $0x18] sm:$0xff]
    %v2364 = vld [vmem:[%s5 + $0x20] sm:$0xff]
    %v2365 = vld [vmem:[%s5 + $0x28] sm:$0xff]
    %v2366 = vld [vmem:[%s5 + $0x30] sm:$0xff]
    %v2367 = vld [vmem:[%s5 + $0x38] sm:$0xff]
    %v2368 = vld [vmem:[%s6] sm:$0xff]
    %v2369 = vld [vmem:[%s6 + $0x8] sm:$0xff]
    %v2370 = vld [vmem:[%s6 + $0x10] sm:$0xff]
    %v2371 = vld [vmem:[%s6 + $0x18] sm:$0xff]
    %v2372 = vld [vmem:[%s6 + $0x20] sm:$0xff]
    %v2373 = vld [vmem:[%s6 + $0x28] sm:$0xff]
    %v2374 = vld [vmem:[%s6 + $0x30] sm:$0xff]
    %v2375 = vld [vmem:[%s6 + $0x38] sm:$0xff]
    %2377 = vset.pattern.permute.xlu0 0
    %2378 = vperm.xlu0 %2377, %v2368
    %v2379 = vpop.permute.xlu0 %2378
    %2382 = vset.pattern.permute.xlu0 0
    %2383 = vperm.xlu0 %2382, %v2369
    %v2384 = vpop.permute.xlu0 %2383
    %2387 = vset.pattern.permute.xlu0 0
    %2388 = vperm.xlu0 %2387, %v2370
    %v2389 = vpop.permute.xlu0 %2388
    %2392 = vset.pattern.permute.xlu0 0
    %2393 = vperm.xlu0 %2392, %v2371
    %v2394 = vpop.permute.xlu0 %2393
    %2397 = vset.pattern.permute.xlu0 0
    %2398 = vperm.xlu0 %2397, %v2372
    %v2399 = vpop.permute.xlu0 %2398
    %2402 = vset.pattern.permute.xlu0 0
    %2403 = vperm.xlu0 %2402, %v2373
    %v2404 = vpop.permute.xlu0 %2403
    %2407 = vset.pattern.permute.xlu0 0
    %2408 = vperm.xlu0 %2407, %v2374
    %v2409 = vpop.permute.xlu0 %2408
    %2412 = vset.pattern.permute.xlu0 0
    %2413 = vperm.xlu0 %2412, %v2375
    %v2414 = vpop.permute.xlu0 %2413
    %vm2416 = vcmask 31744
    %v2418 = vsel %vm2416, %v2360, 0
    %v2421 = vsel %vm2416, %v2361, 0
    %v2424 = vsel %vm2416, %v2362, 0
    %v2427 = vsel %vm2416, %v2363, 0
    %v2430 = vsel %vm2416, %v2364, 0
    %v2433 = vsel %vm2416, %v2365, 0
    %v2436 = vsel %vm2416, %v2366, 0
    %v2439 = vsel %vm2416, %v2367, 0
    %vm2441 = vcmask 1043456
    %v2443 = vsel %vm2441, %v2359, 0
    %2445 = vmatprep.subr.mxu0 0.0
    %2446 = vmatpush1.msra.mxu0 0.0
    %2447 = vmatprep.subr.mxu0 0.0
    %2448 = vmatpush1.msra.mxu0 0.0
    %2449 = vmatprep.subr.mxu0 0.0
    %2450 = vmatpush1.msra.mxu0 0.0
    %2451 = vmatprep.subr.mxu0 0.0
    %2452 = vmatpush1.msra.mxu0 0.0
    %2453 = vmatprep.subr.mxu0 0.0
    %2454 = vmatpush1.msra.mxu0 0.0
    %2455 = vmatprep.subr.mxu0 0.0
    %2456 = vmatpush1.msra.mxu0 0.0
    %2457 = vmatprep.subr.mxu0 0.0
    %2458 = vmatpush1.msra.mxu0 0.0
    %2459 = vmatprep.subr.mxu0 0.0
    %2460 = vmatpush1.msra.mxu0 0.0
    %2461 = vmatprep.subr.mxu0 0.0
    %2462 = vmatpush1.msra.mxu0 0.0
    %2463 = vmatprep.subr.mxu0 0.0
    %2464 = vmatpush1.msra.mxu0 0.0
    %2465 = vmatprep.subr.mxu0 0.0
    %2466 = vmatpush1.msra.mxu0 0.0
    %2467 = vmatprep.subr.mxu0 0.0
    %2468 = vmatpush1.msra.mxu0 0.0
    %2469 = vmatprep.subr.mxu0 0.0
    %2470 = vmatpush1.msra.mxu0 0.0
    %2471 = vmatprep.subr.mxu0 0.0
    %2472 = vmatpush1.msra.mxu0 0.0
    %2473 = vmatprep.subr.mxu0 0.0
    %2474 = vmatpush1.msra.mxu0 0.0
    %2475 = vmatprep.subr.mxu0 0.0
    %2476 = vmatpush1.msra.mxu0 %v2443
    %2477 = vmatprep.subr.mxu0 0.0
    %2478 = vmatpush2.msra.mxu0 0.0
    %2479 = vmatprep.subr.mxu0 0.0
    %2480 = vmatpush2.msra.mxu0 0.0
    %2481 = vmatprep.subr.mxu0 0.0
    %2482 = vmatpush2.msra.mxu0 0.0
    %2483 = vmatprep.subr.mxu0 0.0
    %2484 = vmatpush2.msra.mxu0 0.0
    %2485 = vmatprep.subr.mxu0 0.0
    %2486 = vmatpush2.msra.mxu0 0.0
    %2487 = vmatprep.subr.mxu0 0.0
    %2488 = vmatpush2.msra.mxu0 0.0
    %2489 = vmatprep.subr.mxu0 0.0
    %2490 = vmatpush2.msra.mxu0 0.0
    %2491 = vmatprep.subr.mxu0 0.0
    %2492 = vmatpush2.msra.mxu0 0.0
    %2493 = vmatprep.subr.mxu0 0.0
    %2494 = vmatpush2.msra.mxu0 0.0
    %2495 = vmatprep.subr.mxu0 0.0
    %2496 = vmatpush2.msra.mxu0 0.0
    %2497 = vmatprep.subr.mxu0 0.0
    %2498 = vmatpush2.msra.mxu0 0.0
    %2499 = vmatprep.subr.mxu0 0.0
    %2500 = vmatpush2.msra.mxu0 0.0
    %2501 = vmatprep.subr.mxu0 0.0
    %2502 = vmatpush2.msra.mxu0 0.0
    %2503 = vmatprep.subr.mxu0 0.0
    %2504 = vmatpush2.msra.mxu0 0.0
    %2505 = vmatprep.subr.mxu0 0.0
    %2506 = vmatpush2.msra.mxu0 0.0
    %2507 = vmatprep.subr.mxu0 0.0
    %2508 = vmatpush2.msra.mxu0 0.0
    %2509 = vmatprep.mubr.f32.mxu0 0.0
    %2510 = vmatmul.mubr.f32.gmra.mxu0 %v2418
    %v2511 = vpop.f32.mrf.mxu0
    %v2512 = vadd.f32 %v2379, %v2511
    %v2513 = vpop.f32.mrf.mxu0
    %2514 = vmatprep.mubr.f32.mxu0 0.0
    %2515 = vmatmul.mubr.f32.gmra.mxu0 %v2421
    %v2516 = vpop.f32.mrf.mxu0
    %v2517 = vadd.f32 %v2384, %v2516
    %v2518 = vpop.f32.mrf.mxu0
    %2519 = vmatprep.mubr.f32.mxu0 0.0
    %2520 = vmatmul.mubr.f32.gmra.mxu0 %v2424
    %v2521 = vpop.f32.mrf.mxu0
    %v2522 = vadd.f32 %v2389, %v2521
    %v2523 = vpop.f32.mrf.mxu0
    %2524 = vmatprep.mubr.f32.mxu0 0.0
    %2525 = vmatmul.mubr.f32.gmra.mxu0 %v2427
    %v2526 = vpop.f32.mrf.mxu0
    %v2527 = vadd.f32 %v2394, %v2526
    %v2528 = vpop.f32.mrf.mxu0
    %2529 = vmatprep.mubr.f32.mxu0 0.0
    %2530 = vmatmul.mubr.f32.gmra.mxu0 %v2430
    %v2531 = vpop.f32.mrf.mxu0
    %v2532 = vadd.f32 %v2399, %v2531
    %v2533 = vpop.f32.mrf.mxu0
    %2534 = vmatprep.mubr.f32.mxu0 0.0
    %2535 = vmatmul.mubr.f32.gmra.mxu0 %v2433
    %v2536 = vpop.f32.mrf.mxu0
    %v2537 = vadd.f32 %v2404, %v2536
    %v2538 = vpop.f32.mrf.mxu0
    %2539 = vmatprep.mubr.f32.mxu0 0.0
    %2540 = vmatmul.mubr.f32.gmra.mxu0 %v2436
    %v2541 = vpop.f32.mrf.mxu0
    %v2542 = vadd.f32 %v2409, %v2541
    %v2543 = vpop.f32.mrf.mxu0
    %2544 = vmatprep.mubr.f32.mxu0 0.0
    %2545 = vmatmul.mubr.f32.gmra.mxu0 %v2439
    %v2546 = vpop.f32.mrf.mxu0
    %v2547 = vadd.f32 %v2414, %v2546
    %v2548 = vpop.f32.mrf.mxu0
    %2549 = vdwg.mxu0
    %v2550 = vxor.u32 %v2512, 2147483648
    %v2551 = vxor.u32 %v2517, 2147483648
    %v2552 = vxor.u32 %v2522, 2147483648
    %v2553 = vxor.u32 %v2527, 2147483648
    %v2554 = vxor.u32 %v2532, 2147483648
    %v2555 = vxor.u32 %v2537, 2147483648
    %v2556 = vxor.u32 %v2542, 2147483648
    %v2557 = vxor.u32 %v2547, 2147483648
    %v2558 = vmul.f32 %v2550, 1.442695
    %v2559 = vpow.pop %v2558
    %v2560 = vmul.f32 %v2551, 1.442695
    %v2561 = vpow.pop %v2560
    %v2562 = vmul.f32 %v2552, 1.442695
    %v2563 = vpow.pop %v2562
    %v2564 = vmul.f32 %v2553, 1.442695
    %v2565 = vpow.pop %v2564
    %v2566 = vmul.f32 %v2554, 1.442695
    %v2567 = vpow.pop %v2566
    %v2568 = vmul.f32 %v2555, 1.442695
    %v2569 = vpow.pop %v2568
    %v2570 = vmul.f32 %v2556, 1.442695
    %v2571 = vpow.pop %v2570
    %v2572 = vmul.f32 %v2557, 1.442695
    %v2573 = vpow.pop %v2572
    %v2574 = vadd.f32 %v2559, 1.0
    %v2575 = vadd.f32 %v2561, 1.0
    %v2576 = vadd.f32 %v2563, 1.0
    %v2577 = vadd.f32 %v2565, 1.0
    %v2578 = vadd.f32 %v2567, 1.0
    %v2579 = vadd.f32 %v2569, 1.0
    %v2580 = vadd.f32 %v2571, 1.0
    %v2581 = vadd.f32 %v2573, 1.0
    %v2582 = vrcp.pop %v2574
    %v2583 = vmul.f32 1.0, %v2582
    %v2584 = vrcp.pop %v2575
    %v2585 = vmul.f32 1.0, %v2584
    %v2586 = vrcp.pop %v2576
    %v2587 = vmul.f32 1.0, %v2586
    %v2588 = vrcp.pop %v2577
    %v2589 = vmul.f32 1.0, %v2588
    %v2590 = vrcp.pop %v2578
    %v2591 = vmul.f32 1.0, %v2590
    %v2592 = vrcp.pop %v2579
    %v2593 = vmul.f32 1.0, %v2592
    %v2594 = vrcp.pop %v2580
    %v2595 = vmul.f32 1.0, %v2594
    %v2596 = vrcp.pop %v2581
    %v2597 = vmul.f32 1.0, %v2596
    %v2598 = vld [vmem:[%s8] sm:$0xff]
    %v2599 = vld [vmem:[%s8 + $0x8] sm:$0xff]
    %v2600 = vld [vmem:[%s8 + $0x10] sm:$0xff]
    %v2601 = vld [vmem:[%s8 + $0x18] sm:$0xff]
    %v2602 = vld [vmem:[%s8 + $0x20] sm:$0xff]
    %v2603 = vld [vmem:[%s8 + $0x28] sm:$0xff]
    %v2604 = vld [vmem:[%s8 + $0x30] sm:$0xff]
    %v2605 = vld [vmem:[%s8 + $0x38] sm:$0xff]
    %vm2606 = vcmask 64512
    %v2608 = vsel %vm2606, %v2583, 0
    %v2611 = vsel %vm2606, %v2585, 0
    %v2614 = vsel %vm2606, %v2587, 0
    %v2617 = vsel %vm2606, %v2589, 0
    %v2620 = vsel %vm2606, %v2591, 0
    %v2623 = vsel %vm2606, %v2593, 0
    %v2626 = vsel %vm2606, %v2595, 0
    %v2629 = vsel %vm2606, %v2597, 0
    %2631 = vmatprep.subr.mxu0 0.0
    %2632 = vmatpush1.msra.mxu0 0.0
    %2633 = vmatprep.subr.mxu0 0.0
    %2634 = vmatpush1.msra.mxu0 0.0
    %2635 = vmatprep.subr.mxu0 0.0
    %2636 = vmatpush1.msra.mxu0 0.0
    %2637 = vmatprep.subr.mxu0 0.0
    %2638 = vmatpush1.msra.mxu0 0.0
    %2639 = vmatprep.subr.mxu0 0.0
    %2640 = vmatpush1.msra.mxu0 0.0
    %2641 = vmatprep.subr.mxu0 0.0
    %2642 = vmatpush1.msra.mxu0 0.0
    %2643 = vmatprep.subr.mxu0 0.0
    %2644 = vmatpush1.msra.mxu0 0.0
    %2645 = vmatprep.subr.mxu0 0.0
    %2646 = vmatpush1.msra.mxu0 0.0
    %2647 = vmatprep.subr.mxu0 0.0
    %2648 = vmatpush1.msra.mxu0 0.0
    %2649 = vmatprep.subr.mxu0 0.0
    %2650 = vmatpush1.msra.mxu0 0.0
    %2651 = vmatprep.subr.mxu0 0.0
    %2652 = vmatpush1.msra.mxu0 0.0
    %2653 = vmatprep.subr.mxu0 0.0
    %2654 = vmatpush1.msra.mxu0 0.0
    %2655 = vmatprep.subr.mxu0 0.0
    %2656 = vmatpush1.msra.mxu0 0.0
    %2657 = vmatprep.subr.mxu0 0.0
    %2658 = vmatpush1.msra.mxu0 0.0
    %2659 = vmatprep.subr.mxu0 0.0
    %2660 = vmatpush1.msra.mxu0 0.0
    %2661 = vmatprep.subr.mxu0 %v2599
    %2662 = vmatpush1.msra.mxu0 %v2598
    %2663 = vmatprep.subr.mxu0 0.0
    %2664 = vmatpush2.msra.mxu0 0.0
    %2665 = vmatprep.subr.mxu0 0.0
    %2666 = vmatpush2.msra.mxu0 0.0
    %2667 = vmatprep.subr.mxu0 0.0
    %2668 = vmatpush2.msra.mxu0 0.0
    %2669 = vmatprep.subr.mxu0 0.0
    %2670 = vmatpush2.msra.mxu0 0.0
    %2671 = vmatprep.subr.mxu0 0.0
    %2672 = vmatpush2.msra.mxu0 0.0
    %2673 = vmatprep.subr.mxu0 0.0
    %2674 = vmatpush2.msra.mxu0 0.0
    %2675 = vmatprep.subr.mxu0 0.0
    %2676 = vmatpush2.msra.mxu0 0.0
    %2677 = vmatprep.subr.mxu0 0.0
    %2678 = vmatpush2.msra.mxu0 0.0
    %2679 = vmatprep.subr.mxu0 0.0
    %2680 = vmatpush2.msra.mxu0 0.0
    %2681 = vmatprep.subr.mxu0 0.0
    %2682 = vmatpush2.msra.mxu0 0.0
    %2683 = vmatprep.subr.mxu0 0.0
    %2684 = vmatpush2.msra.mxu0 0.0
    %2685 = vmatprep.subr.mxu0 0.0
    %2686 = vmatpush2.msra.mxu0 0.0
    %2687 = vmatprep.subr.mxu0 0.0
    %2688 = vmatpush2.msra.mxu0 0.0
    %2689 = vmatprep.subr.mxu0 0.0
    %2690 = vmatpush2.msra.mxu0 0.0
    %2691 = vmatprep.subr.mxu0 0.0
    %2692 = vmatpush2.msra.mxu0 0.0
    %2693 = vmatprep.subr.mxu0 0.0
    %2694 = vmatpush2.msra.mxu0 0.0
    %2695 = vmatprep.mubr.f32.mxu0 0.0
    %2696 = vmatmul.mubr.f32.gmra.mxu0 %v2608
    %v2697 = vpop.f32.mrf.mxu0
    %v2698 = vadd.f32 0.0, %v2697
    %v2699 = vpop.f32.mrf.mxu0
    %v2700 = vadd.f32 0.0, %v2699
    %2701 = vmatprep.mubr.f32.mxu0 0.0
    %2702 = vmatmul.mubr.f32.gmra.mxu0 %v2611
    %v2703 = vpop.f32.mrf.mxu0
    %v2704 = vadd.f32 0.0, %v2703
    %v2705 = vpop.f32.mrf.mxu0
    %v2706 = vadd.f32 0.0, %v2705
    %2707 = vmatprep.mubr.f32.mxu0 0.0
    %2708 = vmatmul.mubr.f32.gmra.mxu0 %v2614
    %v2709 = vpop.f32.mrf.mxu0
    %v2710 = vadd.f32 0.0, %v2709
    %v2711 = vpop.f32.mrf.mxu0
    %v2712 = vadd.f32 0.0, %v2711
    %2713 = vmatprep.mubr.f32.mxu0 0.0
    %2714 = vmatmul.mubr.f32.gmra.mxu0 %v2617
    %v2715 = vpop.f32.mrf.mxu0
    %v2716 = vadd.f32 0.0, %v2715
    %v2717 = vpop.f32.mrf.mxu0
    %v2718 = vadd.f32 0.0, %v2717
    %2719 = vmatprep.mubr.f32.mxu0 0.0
    %2720 = vmatmul.mubr.f32.gmra.mxu0 %v2620
    %v2721 = vpop.f32.mrf.mxu0
    %v2722 = vadd.f32 0.0, %v2721
    %v2723 = vpop.f32.mrf.mxu0
    %v2724 = vadd.f32 0.0, %v2723
    %2725 = vmatprep.mubr.f32.mxu0 0.0
    %2726 = vmatmul.mubr.f32.gmra.mxu0 %v2623
    %v2727 = vpop.f32.mrf.mxu0
    %v2728 = vadd.f32 0.0, %v2727
    %v2729 = vpop.f32.mrf.mxu0
    %v2730 = vadd.f32 0.0, %v2729
    %2731 = vmatprep.mubr.f32.mxu0 0.0
    %2732 = vmatmul.mubr.f32.gmra.mxu0 %v2626
    %v2733 = vpop.f32.mrf.mxu0
    %v2734 = vadd.f32 0.0, %v2733
    %v2735 = vpop.f32.mrf.mxu0
    %v2736 = vadd.f32 0.0, %v2735
    %2737 = vmatprep.mubr.f32.mxu0 0.0
    %2738 = vmatmul.mubr.f32.gmra.mxu0 %v2629
    %v2739 = vpop.f32.mrf.mxu0
    %v2740 = vadd.f32 0.0, %v2739
    %v2741 = vpop.f32.mrf.mxu0
    %v2742 = vadd.f32 0.0, %v2741
    %2743 = vdwg.mxu0
    %2744 = vmatprep.subr.mxu0 0.0
    %2745 = vmatpush1.msra.mxu0 0.0
    %2746 = vmatprep.subr.mxu0 0.0
    %2747 = vmatpush1.msra.mxu0 0.0
    %2748 = vmatprep.subr.mxu0 0.0
    %2749 = vmatpush1.msra.mxu0 0.0
    %2750 = vmatprep.subr.mxu0 0.0
    %2751 = vmatpush1.msra.mxu0 0.0
    %2752 = vmatprep.subr.mxu0 0.0
    %2753 = vmatpush1.msra.mxu0 0.0
    %2754 = vmatprep.subr.mxu0 0.0
    %2755 = vmatpush1.msra.mxu0 0.0
    %2756 = vmatprep.subr.mxu0 0.0
    %2757 = vmatpush1.msra.mxu0 0.0
    %2758 = vmatprep.subr.mxu0 0.0
    %2759 = vmatpush1.msra.mxu0 0.0
    %2760 = vmatprep.subr.mxu0 0.0
    %2761 = vmatpush1.msra.mxu0 0.0
    %2762 = vmatprep.subr.mxu0 0.0
    %2763 = vmatpush1.msra.mxu0 0.0
    %2764 = vmatprep.subr.mxu0 0.0
    %2765 = vmatpush1.msra.mxu0 0.0
    %2766 = vmatprep.subr.mxu0 0.0
    %2767 = vmatpush1.msra.mxu0 0.0
    %2768 = vmatprep.subr.mxu0 0.0
    %2769 = vmatpush1.msra.mxu0 0.0
    %2770 = vmatprep.subr.mxu0 0.0
    %2771 = vmatpush1.msra.mxu0 0.0
    %2772 = vmatprep.subr.mxu0 0.0
    %2773 = vmatpush1.msra.mxu0 0.0
    %2774 = vmatprep.subr.mxu0 %v2601
    %2775 = vmatpush1.msra.mxu0 %v2600
    %2776 = vmatprep.subr.mxu0 0.0
    %2777 = vmatpush2.msra.mxu0 0.0
    %2778 = vmatprep.subr.mxu0 0.0
    %2779 = vmatpush2.msra.mxu0 0.0
    %2780 = vmatprep.subr.mxu0 0.0
    %2781 = vmatpush2.msra.mxu0 0.0
    %2782 = vmatprep.subr.mxu0 0.0
    %2783 = vmatpush2.msra.mxu0 0.0
    %2784 = vmatprep.subr.mxu0 0.0
    %2785 = vmatpush2.msra.mxu0 0.0
    %2786 = vmatprep.subr.mxu0 0.0
    %2787 = vmatpush2.msra.mxu0 0.0
    %2788 = vmatprep.subr.mxu0 0.0
    %2789 = vmatpush2.msra.mxu0 0.0
    %2790 = vmatprep.subr.mxu0 0.0
    %2791 = vmatpush2.msra.mxu0 0.0
    %2792 = vmatprep.subr.mxu0 0.0
    %2793 = vmatpush2.msra.mxu0 0.0
    %2794 = vmatprep.subr.mxu0 0.0
    %2795 = vmatpush2.msra.mxu0 0.0
    %2796 = vmatprep.subr.mxu0 0.0
    %2797 = vmatpush2.msra.mxu0 0.0
    %2798 = vmatprep.subr.mxu0 0.0
    %2799 = vmatpush2.msra.mxu0 0.0
    %2800 = vmatprep.subr.mxu0 0.0
    %2801 = vmatpush2.msra.mxu0 0.0
    %2802 = vmatprep.subr.mxu0 0.0
    %2803 = vmatpush2.msra.mxu0 0.0
    %2804 = vmatprep.subr.mxu0 0.0
    %2805 = vmatpush2.msra.mxu0 0.0
    %2806 = vmatprep.subr.mxu0 0.0
    %2807 = vmatpush2.msra.mxu0 0.0
    %2808 = vmatprep.mubr.f32.mxu0 0.0
    %2809 = vmatmul.mubr.f32.gmra.mxu0 %v2608
    %v2810 = vpop.f32.mrf.mxu0
    %v2811 = vadd.f32 0.0, %v2810
    %v2812 = vpop.f32.mrf.mxu0
    %v2813 = vadd.f32 0.0, %v2812
    %2814 = vmatprep.mubr.f32.mxu0 0.0
    %2815 = vmatmul.mubr.f32.gmra.mxu0 %v2611
    %v2816 = vpop.f32.mrf.mxu0
    %v2817 = vadd.f32 0.0, %v2816
    %v2818 = vpop.f32.mrf.mxu0
    %v2819 = vadd.f32 0.0, %v2818
    %2820 = vmatprep.mubr.f32.mxu0 0.0
    %2821 = vmatmul.mubr.f32.gmra.mxu0 %v2614
    %v2822 = vpop.f32.mrf.mxu0
    %v2823 = vadd.f32 0.0, %v2822
    %v2824 = vpop.f32.mrf.mxu0
    %v2825 = vadd.f32 0.0, %v2824
    %2826 = vmatprep.mubr.f32.mxu0 0.0
    %2827 = vmatmul.mubr.f32.gmra.mxu0 %v2617
    %v2828 = vpop.f32.mrf.mxu0
    %v2829 = vadd.f32 0.0, %v2828
    %v2830 = vpop.f32.mrf.mxu0
    %v2831 = vadd.f32 0.0, %v2830
    %2832 = vmatprep.mubr.f32.mxu0 0.0
    %2833 = vmatmul.mubr.f32.gmra.mxu0 %v2620
    %v2834 = vpop.f32.mrf.mxu0
    %v2835 = vadd.f32 0.0, %v2834
    %v2836 = vpop.f32.mrf.mxu0
    %v2837 = vadd.f32 0.0, %v2836
    %2838 = vmatprep.mubr.f32.mxu0 0.0
    %2839 = vmatmul.mubr.f32.gmra.mxu0 %v2623
    %v2840 = vpop.f32.mrf.mxu0
    %v2841 = vadd.f32 0.0, %v2840
    %v2842 = vpop.f32.mrf.mxu0
    %v2843 = vadd.f32 0.0, %v2842
    %2844 = vmatprep.mubr.f32.mxu0 0.0
    %2845 = vmatmul.mubr.f32.gmra.mxu0 %v2626
    %v2846 = vpop.f32.mrf.mxu0
    %v2847 = vadd.f32 0.0, %v2846
    %v2848 = vpop.f32.mrf.mxu0
    %v2849 = vadd.f32 0.0, %v2848
    %2850 = vmatprep.mubr.f32.mxu0 0.0
    %2851 = vmatmul.mubr.f32.gmra.mxu0 %v2629
    %v2852 = vpop.f32.mrf.mxu0
    %v2853 = vadd.f32 0.0, %v2852
    %v2854 = vpop.f32.mrf.mxu0
    %v2855 = vadd.f32 0.0, %v2854
    %2856 = vdwg.mxu0
    %2857 = vmatprep.subr.mxu0 0.0
    %2858 = vmatpush1.msra.mxu0 0.0
    %2859 = vmatprep.subr.mxu0 0.0
    %2860 = vmatpush1.msra.mxu0 0.0
    %2861 = vmatprep.subr.mxu0 0.0
    %2862 = vmatpush1.msra.mxu0 0.0
    %2863 = vmatprep.subr.mxu0 0.0
    %2864 = vmatpush1.msra.mxu0 0.0
    %2865 = vmatprep.subr.mxu0 0.0
    %2866 = vmatpush1.msra.mxu0 0.0
    %2867 = vmatprep.subr.mxu0 0.0
    %2868 = vmatpush1.msra.mxu0 0.0
    %2869 = vmatprep.subr.mxu0 0.0
    %2870 = vmatpush1.msra.mxu0 0.0
    %2871 = vmatprep.subr.mxu0 0.0
    %2872 = vmatpush1.msra.mxu0 0.0
    %2873 = vmatprep.subr.mxu0 0.0
    %2874 = vmatpush1.msra.mxu0 0.0
    %2875 = vmatprep.subr.mxu0 0.0
    %2876 = vmatpush1.msra.mxu0 0.0
    %2877 = vmatprep.subr.mxu0 0.0
    %2878 = vmatpush1.msra.mxu0 0.0
    %2879 = vmatprep.subr.mxu0 0.0
    %2880 = vmatpush1.msra.mxu0 0.0
    %2881 = vmatprep.subr.mxu0 0.0
    %2882 = vmatpush1.msra.mxu0 0.0
    %2883 = vmatprep.subr.mxu0 0.0
    %2884 = vmatpush1.msra.mxu0 0.0
    %2885 = vmatprep.subr.mxu0 0.0
    %2886 = vmatpush1.msra.mxu0 0.0
    %2887 = vmatprep.subr.mxu0 %v2603
    %2888 = vmatpush1.msra.mxu0 %v2602
    %2889 = vmatprep.subr.mxu0 0.0
    %2890 = vmatpush2.msra.mxu0 0.0
    %2891 = vmatprep.subr.mxu0 0.0
    %2892 = vmatpush2.msra.mxu0 0.0
    %2893 = vmatprep.subr.mxu0 0.0
    %2894 = vmatpush2.msra.mxu0 0.0
    %2895 = vmatprep.subr.mxu0 0.0
    %2896 = vmatpush2.msra.mxu0 0.0
    %2897 = vmatprep.subr.mxu0 0.0
    %2898 = vmatpush2.msra.mxu0 0.0
    %2899 = vmatprep.subr.mxu0 0.0
    %2900 = vmatpush2.msra.mxu0 0.0
    %2901 = vmatprep.subr.mxu0 0.0
    %2902 = vmatpush2.msra.mxu0 0.0
    %2903 = vmatprep.subr.mxu0 0.0
    %2904 = vmatpush2.msra.mxu0 0.0
    %2905 = vmatprep.subr.mxu0 0.0
    %2906 = vmatpush2.msra.mxu0 0.0
    %2907 = vmatprep.subr.mxu0 0.0
    %2908 = vmatpush2.msra.mxu0 0.0
    %2909 = vmatprep.subr.mxu0 0.0
    %2910 = vmatpush2.msra.mxu0 0.0
    %2911 = vmatprep.subr.mxu0 0.0
    %2912 = vmatpush2.msra.mxu0 0.0
    %2913 = vmatprep.subr.mxu0 0.0
    %2914 = vmatpush2.msra.mxu0 0.0
    %2915 = vmatprep.subr.mxu0 0.0
    %2916 = vmatpush2.msra.mxu0 0.0
    %2917 = vmatprep.subr.mxu0 0.0
    %2918 = vmatpush2.msra.mxu0 0.0
    %2919 = vmatprep.subr.mxu0 0.0
    %2920 = vmatpush2.msra.mxu0 0.0
    %2921 = vmatprep.mubr.f32.mxu0 0.0
    %2922 = vmatmul.mubr.f32.gmra.mxu0 %v2608
    %v2923 = vpop.f32.mrf.mxu0
    %v2924 = vadd.f32 0.0, %v2923
    %v2925 = vpop.f32.mrf.mxu0
    %v2926 = vadd.f32 0.0, %v2925
    %2927 = vmatprep.mubr.f32.mxu0 0.0
    %2928 = vmatmul.mubr.f32.gmra.mxu0 %v2611
    %v2929 = vpop.f32.mrf.mxu0
    %v2930 = vadd.f32 0.0, %v2929
    %v2931 = vpop.f32.mrf.mxu0
    %v2932 = vadd.f32 0.0, %v2931
    %2933 = vmatprep.mubr.f32.mxu0 0.0
    %2934 = vmatmul.mubr.f32.gmra.mxu0 %v2614
    %v2935 = vpop.f32.mrf.mxu0
    %v2936 = vadd.f32 0.0, %v2935
    %v2937 = vpop.f32.mrf.mxu0
    %v2938 = vadd.f32 0.0, %v2937
    %2939 = vmatprep.mubr.f32.mxu0 0.0
    %2940 = vmatmul.mubr.f32.gmra.mxu0 %v2617
    %v2941 = vpop.f32.mrf.mxu0
    %v2942 = vadd.f32 0.0, %v2941
    %v2943 = vpop.f32.mrf.mxu0
    %v2944 = vadd.f32 0.0, %v2943
    %2945 = vmatprep.mubr.f32.mxu0 0.0
    %2946 = vmatmul.mubr.f32.gmra.mxu0 %v2620
    %v2947 = vpop.f32.mrf.mxu0
    %v2948 = vadd.f32 0.0, %v2947
    %v2949 = vpop.f32.mrf.mxu0
    %v2950 = vadd.f32 0.0, %v2949
    %2951 = vmatprep.mubr.f32.mxu0 0.0
    %2952 = vmatmul.mubr.f32.gmra.mxu0 %v2623
    %v2953 = vpop.f32.mrf.mxu0
    %v2954 = vadd.f32 0.0, %v2953
    %v2955 = vpop.f32.mrf.mxu0
    %v2956 = vadd.f32 0.0, %v2955
    %2957 = vmatprep.mubr.f32.mxu0 0.0
    %2958 = vmatmul.mubr.f32.gmra.mxu0 %v2626
    %v2959 = vpop.f32.mrf.mxu0
    %v2960 = vadd.f32 0.0, %v2959
    %v2961 = vpop.f32.mrf.mxu0
    %v2962 = vadd.f32 0.0, %v2961
    %2963 = vmatprep.mubr.f32.mxu0 0.0
    %2964 = vmatmul.mubr.f32.gmra.mxu0 %v2629
    %v2965 = vpop.f32.mrf.mxu0
    %v2966 = vadd.f32 0.0, %v2965
    %v2967 = vpop.f32.mrf.mxu0
    %v2968 = vadd.f32 0.0, %v2967
    %2969 = vdwg.mxu0
    %2970 = vmatprep.subr.mxu0 0.0
    %2971 = vmatpush1.msra.mxu0 0.0
    %2972 = vmatprep.subr.mxu0 0.0
    %2973 = vmatpush1.msra.mxu0 0.0
    %2974 = vmatprep.subr.mxu0 0.0
    %2975 = vmatpush1.msra.mxu0 0.0
    %2976 = vmatprep.subr.mxu0 0.0
    %2977 = vmatpush1.msra.mxu0 0.0
    %2978 = vmatprep.subr.mxu0 0.0
    %2979 = vmatpush1.msra.mxu0 0.0
    %2980 = vmatprep.subr.mxu0 0.0
    %2981 = vmatpush1.msra.mxu0 0.0
    %2982 = vmatprep.subr.mxu0 0.0
    %2983 = vmatpush1.msra.mxu0 0.0
    %2984 = vmatprep.subr.mxu0 0.0
    %2985 = vmatpush1.msra.mxu0 0.0
    %2986 = vmatprep.subr.mxu0 0.0
    %2987 = vmatpush1.msra.mxu0 0.0
    %2988 = vmatprep.subr.mxu0 0.0
    %2989 = vmatpush1.msra.mxu0 0.0
    %2990 = vmatprep.subr.mxu0 0.0
    %2991 = vmatpush1.msra.mxu0 0.0
    %2992 = vmatprep.subr.mxu0 0.0
    %2993 = vmatpush1.msra.mxu0 0.0
    %2994 = vmatprep.subr.mxu0 0.0
    %2995 = vmatpush1.msra.mxu0 0.0
    %2996 = vmatprep.subr.mxu0 0.0
    %2997 = vmatpush1.msra.mxu0 0.0
    %2998 = vmatprep.subr.mxu0 0.0
    %2999 = vmatpush1.msra.mxu0 0.0
    %3000 = vmatprep.subr.mxu0 %v2605
    %3001 = vmatpush1.msra.mxu0 %v2604
    %3002 = vmatprep.subr.mxu0 0.0
    %3003 = vmatpush2.msra.mxu0 0.0
    %3004 = vmatprep.subr.mxu0 0.0
    %3005 = vmatpush2.msra.mxu0 0.0
    %3006 = vmatprep.subr.mxu0 0.0
    %3007 = vmatpush2.msra.mxu0 0.0
    %3008 = vmatprep.subr.mxu0 0.0
    %3009 = vmatpush2.msra.mxu0 0.0
    %3010 = vmatprep.subr.mxu0 0.0
    %3011 = vmatpush2.msra.mxu0 0.0
    %3012 = vmatprep.subr.mxu0 0.0
    %3013 = vmatpush2.msra.mxu0 0.0
    %3014 = vmatprep.subr.mxu0 0.0
    %3015 = vmatpush2.msra.mxu0 0.0
    %3016 = vmatprep.subr.mxu0 0.0
    %3017 = vmatpush2.msra.mxu0 0.0
    %3018 = vmatprep.subr.mxu0 0.0
    %3019 = vmatpush2.msra.mxu0 0.0
    %3020 = vmatprep.subr.mxu0 0.0
    %3021 = vmatpush2.msra.mxu0 0.0
    %3022 = vmatprep.subr.mxu0 0.0
    %3023 = vmatpush2.msra.mxu0 0.0
    %3024 = vmatprep.subr.mxu0 0.0
    %3025 = vmatpush2.msra.mxu0 0.0
    %3026 = vmatprep.subr.mxu0 0.0
    %3027 = vmatpush2.msra.mxu0 0.0
    %3028 = vmatprep.subr.mxu0 0.0
    %3029 = vmatpush2.msra.mxu0 0.0
    %3030 = vmatprep.subr.mxu0 0.0
    %3031 = vmatpush2.msra.mxu0 0.0
    %3032 = vmatprep.subr.mxu0 0.0
    %3033 = vmatpush2.msra.mxu0 0.0
    %3034 = vmatprep.mubr.f32.mxu0 0.0
    %3035 = vmatmul.mubr.f32.gmra.mxu0 %v2608
    %v3036 = vpop.f32.mrf.mxu0
    %v3037 = vadd.f32 0.0, %v3036
    %v3038 = vpop.f32.mrf.mxu0
    %v3039 = vadd.f32 0.0, %v3038
    %3040 = vmatprep.mubr.f32.mxu0 0.0
    %3041 = vmatmul.mubr.f32.gmra.mxu0 %v2611
    %v3042 = vpop.f32.mrf.mxu0
    %v3043 = vadd.f32 0.0, %v3042
    %v3044 = vpop.f32.mrf.mxu0
    %v3045 = vadd.f32 0.0, %v3044
    %3046 = vmatprep.mubr.f32.mxu0 0.0
    %3047 = vmatmul.mubr.f32.gmra.mxu0 %v2614
    %v3048 = vpop.f32.mrf.mxu0
    %v3049 = vadd.f32 0.0, %v3048
    %v3050 = vpop.f32.mrf.mxu0
    %v3051 = vadd.f32 0.0, %v3050
    %3052 = vmatprep.mubr.f32.mxu0 0.0
    %3053 = vmatmul.mubr.f32.gmra.mxu0 %v2617
    %v3054 = vpop.f32.mrf.mxu0
    %v3055 = vadd.f32 0.0, %v3054
    %v3056 = vpop.f32.mrf.mxu0
    %v3057 = vadd.f32 0.0, %v3056
    %3058 = vmatprep.mubr.f32.mxu0 0.0
    %3059 = vmatmul.mubr.f32.gmra.mxu0 %v2620
    %v3060 = vpop.f32.mrf.mxu0
    %v3061 = vadd.f32 0.0, %v3060
    %v3062 = vpop.f32.mrf.mxu0
    %v3063 = vadd.f32 0.0, %v3062
    %3064 = vmatprep.mubr.f32.mxu0 0.0
    %3065 = vmatmul.mubr.f32.gmra.mxu0 %v2623
    %v3066 = vpop.f32.mrf.mxu0
    %v3067 = vadd.f32 0.0, %v3066
    %v3068 = vpop.f32.mrf.mxu0
    %v3069 = vadd.f32 0.0, %v3068
    %3070 = vmatprep.mubr.f32.mxu0 0.0
    %3071 = vmatmul.mubr.f32.gmra.mxu0 %v2626
    %v3072 = vpop.f32.mrf.mxu0
    %v3073 = vadd.f32 0.0, %v3072
    %v3074 = vpop.f32.mrf.mxu0
    %v3075 = vadd.f32 0.0, %v3074
    %3076 = vmatprep.mubr.f32.mxu0 0.0
    %3077 = vmatmul.mubr.f32.gmra.mxu0 %v2629
    %v3078 = vpop.f32.mrf.mxu0
    %v3079 = vadd.f32 0.0, %v3078
    %v3080 = vpop.f32.mrf.mxu0
    %v3081 = vadd.f32 0.0, %v3080
    %3082 = vdwg.mxu0
    %v3083 = vmul.f32 %v1667, %v2698
    %v3084 = vmul.f32 %v1668, %v2700
    %v3085 = vmul.f32 %v1669, %v2811
    %v3086 = vmul.f32 %v1670, %v2813
    %v3087 = vmul.f32 %v1671, %v2924
    %v3088 = vmul.f32 %v1672, %v2926
    %v3089 = vmul.f32 %v1673, %v3037
    %v3090 = vmul.f32 %v1674, %v3039
    %v3091 = vmul.f32 %v1675, %v2704
    %v3092 = vmul.f32 %v1676, %v2706
    %v3093 = vmul.f32 %v1677, %v2817
    %v3094 = vmul.f32 %v1678, %v2819
    %v3095 = vmul.f32 %v1679, %v2930
    %v3096 = vmul.f32 %v1680, %v2932
    %v3097 = vmul.f32 %v1681, %v3043
    %v3098 = vmul.f32 %v1682, %v3045
    %v3099 = vmul.f32 %v1683, %v2710
    %v3100 = vmul.f32 %v1684, %v2712
    %v3101 = vmul.f32 %v1685, %v2823
    %v3102 = vmul.f32 %v1686, %v2825
    %v3103 = vmul.f32 %v1687, %v2936
    %v3104 = vmul.f32 %v1688, %v2938
    %v3105 = vmul.f32 %v1689, %v3049
    %v3106 = vmul.f32 %v1690, %v3051
    %v3107 = vmul.f32 %v1691, %v2716
    %v3108 = vmul.f32 %v1692, %v2718
    %v3109 = vmul.f32 %v1693, %v2829
    %v3110 = vmul.f32 %v1694, %v2831
    %v3111 = vmul.f32 %v1695, %v2942
    %v3112 = vmul.f32 %v1696, %v2944
    %v3113 = vmul.f32 %v1697, %v3055
    %v3114 = vmul.f32 %v1698, %v3057
    %v3115 = vmul.f32 %v1699, %v2722
    %v3116 = vmul.f32 %v1700, %v2724
    %v3117 = vmul.f32 %v1701, %v2835
    %v3118 = vmul.f32 %v1702, %v2837
    %v3119 = vmul.f32 %v1703, %v2948
    %v3120 = vmul.f32 %v1704, %v2950
    %v3121 = vmul.f32 %v1705, %v3061
    %v3122 = vmul.f32 %v1706, %v3063
    %v3123 = vmul.f32 %v1707, %v2728
    %v3124 = vmul.f32 %v1708, %v2730
    %v3125 = vmul.f32 %v1709, %v2841
    %v3126 = vmul.f32 %v1710, %v2843
    %v3127 = vmul.f32 %v1711, %v2954
    %v3128 = vmul.f32 %v1712, %v2956
    %v3129 = vmul.f32 %v1713, %v3067
    %v3130 = vmul.f32 %v1714, %v3069
    %v3131 = vmul.f32 %v1715, %v2734
    %v3132 = vmul.f32 %v1716, %v2736
    %v3133 = vmul.f32 %v1717, %v2847
    %v3134 = vmul.f32 %v1718, %v2849
    %v3135 = vmul.f32 %v1719, %v2960
    %v3136 = vmul.f32 %v1720, %v2962
    %v3137 = vmul.f32 %v1721, %v3073
    %v3138 = vmul.f32 %v1722, %v3075
    %v3139 = vmul.f32 %v1723, %v2740
    %v3140 = vmul.f32 %v1724, %v2742
    %v3141 = vmul.f32 %v1725, %v2853
    %v3142 = vmul.f32 %v1726, %v2855
    %v3143 = vmul.f32 %v1727, %v2966
    %v3144 = vmul.f32 %v1728, %v2968
    %v3145 = vmul.f32 %v1729, %v3079
    %v3146 = vmul.f32 %v1730, %v3081
    %v3147 = vadd.f32 %v3083, %v1138
    %v3148 = vadd.f32 %v3084, %v1140
    %v3149 = vadd.f32 %v3085, %v1299
    %v3150 = vadd.f32 %v3086, %v1301
    %v3151 = vadd.f32 %v3087, %v1460
    %v3152 = vadd.f32 %v3088, %v1462
    %v3153 = vadd.f32 %v3089, %v1621
    %v3154 = vadd.f32 %v3090, %v1623
    %v3155 = vadd.f32 %v3091, %v1144
    %v3156 = vadd.f32 %v3092, %v1146
    %v3157 = vadd.f32 %v3093, %v1305
    %v3158 = vadd.f32 %v3094, %v1307
    %v3159 = vadd.f32 %v3095, %v1466
    %v3160 = vadd.f32 %v3096, %v1468
    %v3161 = vadd.f32 %v3097, %v1627
    %v3162 = vadd.f32 %v3098, %v1629
    %v3163 = vadd.f32 %v3099, %v1150
    %v3164 = vadd.f32 %v3100, %v1152
    %v3165 = vadd.f32 %v3101, %v1311
    %v3166 = vadd.f32 %v3102, %v1313
    %v3167 = vadd.f32 %v3103, %v1472
    %v3168 = vadd.f32 %v3104, %v1474
    %v3169 = vadd.f32 %v3105, %v1633
    %v3170 = vadd.f32 %v3106, %v1635
    %v3171 = vadd.f32 %v3107, %v1156
    %v3172 = vadd.f32 %v3108, %v1158
    %v3173 = vadd.f32 %v3109, %v1317
    %v3174 = vadd.f32 %v3110, %v1319
    %v3175 = vadd.f32 %v3111, %v1478
    %v3176 = vadd.f32 %v3112, %v1480
    %v3177 = vadd.f32 %v3113, %v1639
    %v3178 = vadd.f32 %v3114, %v1641
    %v3179 = vadd.f32 %v3115, %v1162
    %v3180 = vadd.f32 %v3116, %v1164
    %v3181 = vadd.f32 %v3117, %v1323
    %v3182 = vadd.f32 %v3118, %v1325
    %v3183 = vadd.f32 %v3119, %v1484
    %v3184 = vadd.f32 %v3120, %v1486
    %v3185 = vadd.f32 %v3121, %v1645
    %v3186 = vadd.f32 %v3122, %v1647
    %v3187 = vadd.f32 %v3123, %v1168
    %v3188 = vadd.f32 %v3124, %v1170
    %v3189 = vadd.f32 %v3125, %v1329
    %v3190 = vadd.f32 %v3126, %v1331
    %v3191 = vadd.f32 %v3127, %v1490
    %v3192 = vadd.f32 %v3128, %v1492
    %v3193 = vadd.f32 %v3129, %v1651
    %v3194 = vadd.f32 %v3130, %v1653
    %v3195 = vadd.f32 %v3131, %v1174
    %v3196 = vadd.f32 %v3132, %v1176
    %v3197 = vadd.f32 %v3133, %v1335
    %v3198 = vadd.f32 %v3134, %v1337
    %v3199 = vadd.f32 %v3135, %v1496
    %v3200 = vadd.f32 %v3136, %v1498
    %v3201 = vadd.f32 %v3137, %v1657
    %v3202 = vadd.f32 %v3138, %v1659
    %v3203 = vadd.f32 %v3139, %v1180
    %v3204 = vadd.f32 %v3140, %v1182
    %v3205 = vadd.f32 %v3141, %v1341
    %v3206 = vadd.f32 %v3142, %v1343
    %v3207 = vadd.f32 %v3143, %v1502
    %v3208 = vadd.f32 %v3144, %v1504
    %v3209 = vadd.f32 %v3145, %v1663
    %v3210 = vadd.f32 %v3146, %v1665
    %3211 = vst [vmem:[#allocation2] sm:$0xff] %v3147
    %3212 = vst [vmem:[#allocation2 + $0x8] sm:$0xff] %v3148
    %3213 = vst [vmem:[#allocation2 + $0x10] sm:$0xff] %v3149
    %3214 = vst [vmem:[#allocation2 + $0x18] sm:$0xff] %v3150
    %3215 = vst [vmem:[#allocation2 + $0x20] sm:$0xff] %v3151
    %3216 = vst [vmem:[#allocation2 + $0x28] sm:$0xff] %v3152
    %3217 = vst [vmem:[#allocation2 + $0x30] sm:$0xff] %v3153
    %3218 = vst [vmem:[#allocation2 + $0x38] sm:$0xff] %v3154
    %3219 = vst [vmem:[#allocation2 + $0x40] sm:$0xff] %v3155
    %3220 = vst [vmem:[#allocation2 + $0x48] sm:$0xff] %v3156
    %3221 = vst [vmem:[#allocation2 + $0x50] sm:$0xff] %v3157
    %3222 = vst [vmem:[#allocation2 + $0x58] sm:$0xff] %v3158
    %3223 = vst [vmem:[#allocation2 + $0x60] sm:$0xff] %v3159
    %3224 = vst [vmem:[#allocation2 + $0x68] sm:$0xff] %v3160
    %3225 = vst [vmem:[#allocation2 + $0x70] sm:$0xff] %v3161
    %3226 = vst [vmem:[#allocation2 + $0x78] sm:$0xff] %v3162
    %3227 = vst [vmem:[#allocation2 + $0x80] sm:$0xff] %v3163
    %3228 = vst [vmem:[#allocation2 + $0x88] sm:$0xff] %v3164
    %3229 = vst [vmem:[#allocation2 + $0x90] sm:$0xff] %v3165
    %3230 = vst [vmem:[#allocation2 + $0x98] sm:$0xff] %v3166
    %3231 = vst [vmem:[#allocation2 + $0xa0] sm:$0xff] %v3167
    %3232 = vst [vmem:[#allocation2 + $0xa8] sm:$0xff] %v3168
    %3233 = vst [vmem:[#allocation2 + $0xb0] sm:$0xff] %v3169
    %3234 = vst [vmem:[#allocation2 + $0xb8] sm:$0xff] %v3170
    %3235 = vst [vmem:[#allocation2 + $0xc0] sm:$0xff] %v3171
    %3236 = vst [vmem:[#allocation2 + $0xc8] sm:$0xff] %v3172
    %3237 = vst [vmem:[#allocation2 + $0xd0] sm:$0xff] %v3173
    %3238 = vst [vmem:[#allocation2 + $0xd8] sm:$0xff] %v3174
    %3239 = vst [vmem:[#allocation2 + $0xe0] sm:$0xff] %v3175
    %3240 = vst [vmem:[#allocation2 + $0xe8] sm:$0xff] %v3176
    %3241 = vst [vmem:[#allocation2 + $0xf0] sm:$0xff] %v3177
    %3242 = vst [vmem:[#allocation2 + $0xf8] sm:$0xff] %v3178
    %3243 = vst [vmem:[#allocation2 + $0x100] sm:$0xff] %v3179
    %3244 = vst [vmem:[#allocation2 + $0x108] sm:$0xff] %v3180
    %3245 = vst [vmem:[#allocation2 + $0x110] sm:$0xff] %v3181
    %3246 = vst [vmem:[#allocation2 + $0x118] sm:$0xff] %v3182
    %3247 = vst [vmem:[#allocation2 + $0x120] sm:$0xff] %v3183
    %3248 = vst [vmem:[#allocation2 + $0x128] sm:$0xff] %v3184
    %3249 = vst [vmem:[#allocation2 + $0x130] sm:$0xff] %v3185
    %3250 = vst [vmem:[#allocation2 + $0x138] sm:$0xff] %v3186
    %3251 = vst [vmem:[#allocation2 + $0x140] sm:$0xff] %v3187
    %3252 = vst [vmem:[#allocation2 + $0x148] sm:$0xff] %v3188
    %3253 = vst [vmem:[#allocation2 + $0x150] sm:$0xff] %v3189
    %3254 = vst [vmem:[#allocation2 + $0x158] sm:$0xff] %v3190
    %3255 = vst [vmem:[#allocation2 + $0x160] sm:$0xff] %v3191
    %3256 = vst [vmem:[#allocation2 + $0x168] sm:$0xff] %v3192
    %3257 = vst [vmem:[#allocation2 + $0x170] sm:$0xff] %v3193
    %3258 = vst [vmem:[#allocation2 + $0x178] sm:$0xff] %v3194
    %3259 = vst [vmem:[#allocation2 + $0x180] sm:$0xff] %v3195
    %3260 = vst [vmem:[#allocation2 + $0x188] sm:$0xff] %v3196
    %3261 = vst [vmem:[#allocation2 + $0x190] sm:$0xff] %v3197
    %3262 = vst [vmem:[#allocation2 + $0x198] sm:$0xff] %v3198
    %3263 = vst [vmem:[#allocation2 + $0x1a0] sm:$0xff] %v3199
    %3264 = vst [vmem:[#allocation2 + $0x1a8] sm:$0xff] %v3200
    %3265 = vst [vmem:[#allocation2 + $0x1b0] sm:$0xff] %v3201
    %3266 = vst [vmem:[#allocation2 + $0x1b8] sm:$0xff] %v3202
    %3267 = vst [vmem:[#allocation2 + $0x1c0] sm:$0xff] %v3203
    %3268 = vst [vmem:[#allocation2 + $0x1c8] sm:$0xff] %v3204
    %3269 = vst [vmem:[#allocation2 + $0x1d0] sm:$0xff] %v3205
    %3270 = vst [vmem:[#allocation2 + $0x1d8] sm:$0xff] %v3206
    %3271 = vst [vmem:[#allocation2 + $0x1e0] sm:$0xff] %v3207
    %3272 = vst [vmem:[#allocation2 + $0x1e8] sm:$0xff] %v3208
    %3273 = vst [vmem:[#allocation2 + $0x1f0] sm:$0xff] %v3209
    %3274 = vst [vmem:[#allocation2 + $0x1f8] sm:$0xff] %v3210
    // Predicated region
    $region38: #{tpu_custom_call.1} parent=1 // pred_check
      _
    $region39: #{tpu_custom_call.1} parent=1 // pred_check_branch
      %3276 = sbr.rel (0) target = $region41
    $region40: #{tpu_custom_call.1} parent=1 // pred_region
      %s3278 = ssub.s32 8192, 8192
      %3279 = vsyncadd [#allocation3], %s3278
      %s3280 = sshll.u32 [#allocation2], 4
      %s3281 = int_to_ptr.vmem [resolvable:$true] %s3280
      %3286 = dma.vmem_to_hbm [thread:$0]  %s3281, 8192, %s9, [#allocation3], 1024, 1024, 64
    $region41: #{tpu_custom_call.1} parent=1 // pred_fallthru
      _
    // Predicated region
    $region42: #{tpu_custom_call.1} parent=1 // pred_check
      _
    $region43: #{tpu_custom_call.1} parent=1 // pred_check_branch
      %3288 = sbr.rel (0) target = $region45
    $region44: #{tpu_custom_call.1} parent=1 // pred_region
      %3289 = dma.done [#allocation3], 8192
    $region45: #{tpu_custom_call.1} parent=1 // pred_fallthru
      _
    %3290 = vsyncpa [#allocation3], 1

</llo_original>
